<compile_context>
chip_gen: v6e
topology: v6e:2x2x1
jax: 0.10.0
libtpu: 0.0.40
codegen_flags: <defaults>
</compile_context>

<pallas_src>
import functools

import jax
import jax.numpy as jnp
from jax.experimental import pallas as pl
from jax.experimental.pallas import tpu as pltpu


def _aggregator_kernel(*refs, mode, act):
    if mode == "neighbor":
        nv_ref, nr_ref, u_ref, w_ref, b_ref, out_ref = refs
        sv = None
    else:
        sv_ref, nv_ref, nr_ref, u_ref, w_ref, b_ref, out_ref = refs
        sv = sv_ref[...]                      # (TB, E, D)

    nv = nv_ref[...]                          # (TB, E, N, D)
    nr = nr_ref[...]                          # (TB, E, N, D)
    u = u_ref[...]                            # (TB, 1, D)

    tb, E, N, D = nv.shape

    # user-relation scores: sum over D -> (TB, E, N).
    # (Kept on VPU/XLU: an MXU formulation would be a 1-column matvec per
    #  batch element and the kernel is HBM-bound anyway.)
    scores = jnp.sum(nr * u[:, :, None, :], axis=-1)

    # softmax over the neighbor axis; denominator reciprocal on the EUP.
    m = jnp.max(scores, axis=-1, keepdims=True)
    e = jnp.exp(scores - m)
    denom = jnp.sum(e, axis=-1, keepdims=True)
    p = e * pl.reciprocal(denom, approx=True)               # (TB, E, N)

    # weighted neighbor aggregation: sum over N -> (TB, E, D)
    agg = jnp.sum(p[..., None] * nv, axis=2)

    # Linear layer as ONE large MXU matmul over the flattened (TB*E, d_in)
    # slab (leading-dim collapse only; lane dim D is preserved).
    agg2 = agg.reshape(tb * E, D)
    if mode == "sum":
        x2 = (sv + agg).reshape(tb * E, D)
        out = jnp.dot(x2, w_ref[...], preferred_element_type=jnp.float32)
    elif mode == "concat":
        # [sv | agg] @ W  ==  sv @ W[:D] + agg @ W[D:]
        out = jnp.dot(sv.reshape(tb * E, D), w_ref[:D, :],
                      preferred_element_type=jnp.float32)
        out = out + jnp.dot(agg2, w_ref[D:, :],
                            preferred_element_type=jnp.float32)
    else:  # 'neighbor'
        out = jnp.dot(agg2, w_ref[...], preferred_element_type=jnp.float32)

    out = out + b_ref[...]
    if act == "relu":
        out = jnp.maximum(out, 0.0)
    elif act == "tanh":
        out = jnp.tanh(out)
    # act == "identity": nothing

    out_ref[...] = out.reshape(tb, E, D).astype(out_ref.dtype)


def _choose_block_b(B, E, N, D, use_self,
                    vmem_budget_bytes=32 * 1024 * 1024, max_tb=128):
    """Pick how many batch elements to process per grid step."""
    def tile_bytes(rows, cols):
        pr = -(-rows // 8) * 8
        pc = -(-cols // 128) * 128
        return pr * pc * 4                      # f32, (8,128)-tile padded

    nbr = E * tile_bytes(N, D)                  # one (E, N, D) slab
    slf = tile_bytes(E, D)                      # one (E, D) slab
    usr = tile_bytes(1, D)
    io_per_b = 2 * nbr + slf * (2 if use_self else 1) + usr
    # x2 pipeline (double) buffers + generous allowance for in-kernel temps
    per_b = 2 * io_per_b + 3 * nbr + 4 * slf
    tb = max(1, min(vmem_budget_bytes // per_b, B, max_tb))
    if B > 1:
        # keep >= 2 grid steps so both v7x TensorCores get work
        tb = min(tb, -(-B // 2))
    return int(tb)


def aggregator_forward(self_vectors, neighbor_vectors, neighbor_relations,
                       user_embeddings, weight_t, bias, *, mode="sum",
                       act="relu"):
    """Pallas equivalent of Aggregator.forward (act in {'relu','tanh','identity'})."""
    B, E, D = self_vectors.shape
    N = neighbor_vectors.shape[2]
    d_in = weight_t.shape[0]
    use_self = mode != "neighbor"

    tb = _choose_block_b(B, E, N, D, use_self)
    grid_b = -(-B // tb)

    u3 = user_embeddings.reshape(B, 1, D)
    b2 = bias.reshape(1, D)

    in_specs = []
    inputs = []
    if use_self:
        in_specs.append(pl.BlockSpec((tb, E, D), lambda b: (b, 0, 0)))
        inputs.append(self_vectors)
    in_specs += [
        pl.BlockSpec((tb, E, N, D), lambda b: (b, 0, 0, 0)),
        pl.BlockSpec((tb, E, N, D), lambda b: (b, 0, 0, 0)),
        pl.BlockSpec((tb, 1, D), lambda b: (b, 0, 0)),
        pl.BlockSpec((d_in, D), lambda b: (0, 0)),
        pl.BlockSpec((1, D), lambda b: (0, 0)),
    ]
    inputs += [neighbor_vectors, neighbor_relations, u3, weight_t, b2]

    # advisory cost estimate so XLA schedules/overlaps the call sensibly
    flops = 4 * B * E * N * D + 2 * B * E * d_in * D
    bytes_accessed = 4 * (2 * B * E * N * D
                          + (B * E * D if use_self else 0)
                          + B * D + d_in * D + D
                          + B * E * D)
    cost = pl.CostEstimate(flops=flops, transcendentals=B * E * N,
                           bytes_accessed=bytes_accessed)

    kernel = functools.partial(_aggregator_kernel, mode=mode, act=act)

    out = pl.pallas_call(
        kernel,
        out_shape=jax.ShapeDtypeStruct((B, E, D), neighbor_vectors.dtype),
        grid_spec=pltpu.PrefetchScalarGridSpec(
            num_scalar_prefetch=0,
            grid=(grid_b,),
            in_specs=in_specs,
            out_specs=pl.BlockSpec((tb, E, D), lambda b: (b, 0, 0)),
        ),
        compiler_params=pltpu.CompilerParams(
            dimension_semantics=("parallel",),
            vmem_limit_bytes=48 * 1024 * 1024),
        cost_estimate=cost,
    )(*inputs)
    return out


def aggregator_reference(self_vectors, neighbor_vectors, neighbor_relations,
                         user_embeddings, weight_t, bias, *, mode="sum",
                         act="relu"):
    """Pure-JAX reference mirroring the PyTorch forward exactly."""
    B, E, D = self_vectors.shape
    u = user_embeddings.reshape(B, 1, 1, D)
    scores = jnp.sum(u * neighbor_relations, axis=-1)          # (B, E, N)
    scores = jax.nn.softmax(scores, axis=-1)[..., None]        # (B, E, N, 1)
    agg = jnp.sum(scores * neighbor_vectors, axis=2)           # (B, E, D)
    if mode == "sum":
        x = (self_vectors + agg).reshape(-1, D)
    elif mode == "concat":
        x = jnp.concatenate([self_vectors, agg], axis=-1).reshape(-1, 2 * D)
    else:
        x = agg.reshape(-1, D)
    out = x @ weight_t + bias
    if act == "relu":
        out = jax.nn.relu(out)
    elif act == "tanh":
        out = jnp.tanh(out)
    return out.reshape(B, E, D)


if __name__ == "__main__":
    # Small KGCN-consistent shapes; B=16 so the batched (TB>1) path is
    # actually exercised (TB=8, grid=2).
    B, E, N, D = 16, 8, 4, 32

    key = jax.random.PRNGKey(0)
    ks = jax.random.split(key, 8)
    self_vectors = jax.random.normal(ks[0], (B, E, D), dtype=jnp.float32)
    neighbor_vectors = jax.random.normal(ks[1], (B, E, N, D), dtype=jnp.float32)
    neighbor_relations = jax.random.normal(ks[2], (B, E, N, D), dtype=jnp.float32)
    user_embeddings = jax.random.normal(ks[3], (B, D), dtype=jnp.float32)

    ok = True
    for i, mode in enumerate(("sum", "concat", "neighbor")):
        d_in = 2 * D if mode == "concat" else D
        bound = 1.0 / (d_in ** 0.5)
        w_t = jax.random.uniform(ks[4 + i], (d_in, D), dtype=jnp.float32,
                                 minval=-bound, maxval=bound)
        bias = jax.random.uniform(ks[7], (D,), dtype=jnp.float32,
                                  minval=-bound, maxval=bound)
        act = "tanh" if mode == "neighbor" else "relu"

        out = aggregator_forward(self_vectors, neighbor_vectors,
                                 neighbor_relations, user_embeddings,
                                 w_t, bias, mode=mode, act=act)
        out = jax.block_until_ready(out)
        ref = aggregator_reference(self_vectors, neighbor_vectors,
                                   neighbor_relations, user_embeddings,
                                   w_t, bias, mode=mode, act=act)
        # pl.reciprocal(approx=True) in the softmax => tolerance looser than
        # the original 1e-5 (true error is ~1e-3-level).
        if not jnp.allclose(out, ref, atol=2e-2, rtol=2e-2):
            ok = False

    print("KERNEL_OK" if ok else "KERNEL_MISMATCH")
</pallas_src>

<mosaic_0001>
module attributes {stable_mosaic.version = 11 : i64} {
  func.func @_aggregator_kernel(%arg0: i32, %arg1: memref<8x8x32xf32, #tpu.memory_space<vmem>>, %arg2: memref<8x8x4x32xf32, #tpu.memory_space<vmem>>, %arg3: memref<8x8x4x32xf32, #tpu.memory_space<vmem>>, %arg4: memref<8x1x32xf32, #tpu.memory_space<vmem>>, %arg5: memref<32x32xf32, #tpu.memory_space<vmem>>, %arg6: memref<1x32xf32, #tpu.memory_space<vmem>>, %arg7: memref<8x8x32xf32, #tpu.memory_space<vmem>>) attributes {dimension_semantics = [#tpu.dimension_semantics<parallel>], iteration_bounds = array<i64: 2>, scalar_prefetch = 0 : i64, scratch_operands = 0 : i64, tpu.core_type = #tpu.core_type<tc>, window_params = [{transform_indices = @transform_0, window_bounds = array<i64: 8, 8, 32>}, {transform_indices = @transform_1, window_bounds = array<i64: 8, 8, 4, 32>}, {transform_indices = @transform_2, window_bounds = array<i64: 8, 8, 4, 32>}, {transform_indices = @transform_3, window_bounds = array<i64: 8, 1, 32>}, {pipeline_mode = #tpu.pipeline_mode<synchronous>, transform_indices = @transform_4, window_bounds = array<i64: 32, 32>}, {pipeline_mode = #tpu.pipeline_mode<synchronous>, transform_indices = @transform_5, window_bounds = array<i64: 1, 32>}, {transform_indices = @transform_6, window_bounds = array<i64: 8, 8, 32>}]} {
    %c0 = arith.constant 0 : index
    %c0_0 = arith.constant 0 : index
    %c0_1 = arith.constant 0 : index
    %0 = vector.load %arg1[%c0, %c0_0, %c0_1] : memref<8x8x32xf32, #tpu.memory_space<vmem>>, vector<8x8x32xf32>
    %c0_2 = arith.constant 0 : index
    %c0_3 = arith.constant 0 : index
    %c0_4 = arith.constant 0 : index
    %c0_5 = arith.constant 0 : index
    %1 = vector.load %arg2[%c0_2, %c0_3, %c0_4, %c0_5] : memref<8x8x4x32xf32, #tpu.memory_space<vmem>>, vector<8x8x4x32xf32>
    %c0_6 = arith.constant 0 : index
    %c0_7 = arith.constant 0 : index
    %c0_8 = arith.constant 0 : index
    %c0_9 = arith.constant 0 : index
    %2 = vector.load %arg3[%c0_6, %c0_7, %c0_8, %c0_9] : memref<8x8x4x32xf32, #tpu.memory_space<vmem>>, vector<8x8x4x32xf32>
    %c0_10 = arith.constant 0 : index
    %c0_11 = arith.constant 0 : index
    %c0_12 = arith.constant 0 : index
    %3 = vector.load %arg4[%c0_10, %c0_11, %c0_12] : memref<8x1x32xf32, #tpu.memory_space<vmem>>, vector<8x1x32xf32>
    %4 = vector.shape_cast %3 : vector<8x1x32xf32> to vector<8x1x1x32xf32>
    %5 = vector.broadcast %4 : vector<8x1x1x32xf32> to vector<8x8x4x32xf32>
    %6 = arith.mulf %2, %5 : vector<8x8x4x32xf32>
    %cst = arith.constant dense<0.000000e+00> : vector<8x8x4xf32>
    %7 = vector.multi_reduction <add>, %6, %cst [3] : vector<8x8x4x32xf32> to vector<8x8x4xf32>
    %cst_13 = arith.constant dense<0xFF800000> : vector<8x8xf32>
    %8 = vector.multi_reduction <maximumf>, %7, %cst_13 [2] : vector<8x8x4xf32> to vector<8x8xf32>
    %9 = vector.shape_cast %8 : vector<8x8xf32> to vector<8x8x1xf32>
    %10 = vector.broadcast %9 : vector<8x8x1xf32> to vector<8x8x4xf32>
    %11 = arith.subf %7, %10 : vector<8x8x4xf32>
    %12 = math.exp %11 : vector<8x8x4xf32>
    %cst_14 = arith.constant dense<0.000000e+00> : vector<8x8xf32>
    %13 = vector.multi_reduction <add>, %12, %cst_14 [2] : vector<8x8x4xf32> to vector<8x8xf32>
    %14 = vector.shape_cast %13 : vector<8x8xf32> to vector<8x8x1xf32>
    %15 = tpu.reciprocal %14 {approx = true} : vector<8x8x1xf32> -> vector<8x8x1xf32>
    %16 = vector.broadcast %15 : vector<8x8x1xf32> to vector<8x8x4xf32>
    %17 = arith.mulf %12, %16 : vector<8x8x4xf32>
    %18 = vector.shape_cast %17 : vector<8x8x4xf32> to vector<8x8x4x1xf32>
    %19 = vector.broadcast %18 : vector<8x8x4x1xf32> to vector<8x8x4x32xf32>
    %20 = arith.mulf %19, %1 : vector<8x8x4x32xf32>
    %cst_15 = arith.constant dense<0.000000e+00> : vector<8x8x32xf32>
    %21 = vector.multi_reduction <add>, %20, %cst_15 [2] : vector<8x8x4x32xf32> to vector<8x8x32xf32>
    %22 = arith.addf %0, %21 : vector<8x8x32xf32>
    %23 = vector.shape_cast %22 : vector<8x8x32xf32> to vector<64x32xf32>
    %c0_16 = arith.constant 0 : index
    %c0_17 = arith.constant 0 : index
    %24 = vector.load %arg5[%c0_16, %c0_17] : memref<32x32xf32, #tpu.memory_space<vmem>>, vector<32x32xf32>
    %cst_18 = arith.constant dense<0.000000e+00> : vector<64x32xf32>
    %25 = tpu.matmul %23, %24, %cst_18 {dimension_numbers = #tpu.dot_dimension_numbers<[1], [0], [0], [1], [0, 0, 1, 1], [], []>} : vector<64x32xf32>, vector<32x32xf32>, vector<64x32xf32> -> vector<64x32xf32>
    %c0_19 = arith.constant 0 : index
    %c0_20 = arith.constant 0 : index
    %26 = vector.load %arg6[%c0_19, %c0_20] : memref<1x32xf32, #tpu.memory_space<vmem>>, vector<1x32xf32>
    %27 = vector.broadcast %26 : vector<1x32xf32> to vector<64x32xf32>
    %28 = arith.addf %25, %27 : vector<64x32xf32>
    %cst_21 = arith.constant 0.000000e+00 : f32
    %29 = vector.broadcast %cst_21 : f32 to vector<64x32xf32>
    %30 = arith.maximumf %28, %29 : vector<64x32xf32>
    %31 = vector.shape_cast %30 : vector<64x32xf32> to vector<8x8x32xf32>
    %c0_22 = arith.constant 0 : index
    %c0_23 = arith.constant 0 : index
    %c0_24 = arith.constant 0 : index
    %32 = vector.load %arg7[%c0_22, %c0_23, %c0_24] : memref<8x8x32xf32, #tpu.memory_space<vmem>>, vector<8x8x32xf32>
    tpu.vector_store %arg7[%c0_22, %c0_23, %c0_24], %31 {strides = array<i32>} : memref<8x8x32xf32, #tpu.memory_space<vmem>>, vector<8x8x32xf32>,
    return
  }
  func.func @transform_0(%arg0: i32) -> (i32, i32, i32) {
    %c0_i32 = arith.constant 0 : i32
    %c0_i32_0 = arith.constant 0 : i32
    %c0_i32_1 = arith.constant 0 : i32
    return %arg0, %c0_i32, %c0_i32_0 : i32, i32, i32
  }
  func.func @transform_1(%arg0: i32) -> (i32, i32, i32, i32) {
    %c0_i32 = arith.constant 0 : i32
    %c0_i32_0 = arith.constant 0 : i32
    %c0_i32_1 = arith.constant 0 : i32
    %c0_i32_2 = arith.constant 0 : i32
    return %arg0, %c0_i32, %c0_i32_0, %c0_i32_1 : i32, i32, i32, i32
  }
  func.func @transform_2(%arg0: i32) -> (i32, i32, i32, i32) {
    %c0_i32 = arith.constant 0 : i32
    %c0_i32_0 = arith.constant 0 : i32
    %c0_i32_1 = arith.constant 0 : i32
    %c0_i32_2 = arith.constant 0 : i32
    return %arg0, %c0_i32, %c0_i32_0, %c0_i32_1 : i32, i32, i32, i32
  }
  func.func @transform_3(%arg0: i32) -> (i32, i32, i32) {
    %c0_i32 = arith.constant 0 : i32
    %c0_i32_0 = arith.constant 0 : i32
    %c0_i32_1 = arith.constant 0 : i32
    return %arg0, %c0_i32, %c0_i32_0 : i32, i32, i32
  }
  func.func @transform_4(%arg0: i32) -> (i32, i32) {
    %c0_i32 = arith.constant 0 : i32
    %c0_i32_0 = arith.constant 0 : i32
    %c0_i32_1 = arith.constant 0 : i32
    return %c0_i32, %c0_i32_0 : i32, i32
  }
  func.func @transform_5(%arg0: i32) -> (i32, i32) {
    %c0_i32 = arith.constant 0 : i32
    %c0_i32_0 = arith.constant 0 : i32
    %c0_i32_1 = arith.constant 0 : i32
    return %c0_i32, %c0_i32_0 : i32, i32
  }
  func.func @transform_6(%arg0: i32) -> (i32, i32, i32) {
    %c0_i32 = arith.constant 0 : i32
    %c0_i32_0 = arith.constant 0 : i32
    %c0_i32_1 = arith.constant 0 : i32
    return %arg0, %c0_i32, %c0_i32_0 : i32, i32, i32
  }
}

</mosaic_0001>

<llo_original>
// kernel: tpu_custom_call.1
$region0: #{tpu_custom_call.1}
  #allocation0 [shape = 'u32[]', space=smem, size = 0x4, offset = 0x4, fixed_abs, tag = 'smem constant byte address 0x4 - core index']
  #allocation1 [shape = 'u32[144,128]{1,0:T(1,128)}', space=vmem, size = 0x12000, scoped, tag = 'internal scratch']
  %s0 = inlined_call_operand.hbm [shape: f32[16,8,32], index: 0, kind: input, shape index: {}]
  %s1 = inlined_call_operand.hbm [shape: f32[16,8,4,32], index: 1, kind: input, shape index: {}]
  %s2 = inlined_call_operand.hbm [shape: f32[16,8,4,32], index: 2, kind: input, shape index: {}]
  %s3 = inlined_call_operand.hbm [shape: f32[16,1,32], index: 3, kind: input, shape index: {}]
  %s4 = inlined_call_operand.hbm [shape: f32[32,32], index: 4, kind: input, shape index: {}]
  %s5 = inlined_call_operand.vmem [shape: f32[1,32], index: 5, kind: input, shape index: {}]
  %s6 = inlined_call_operand.hbm [shape: f32[16,8,32], index: 6, kind: output, shape index: {}]
  %s7 = sld [smem:[#allocation0]]
  $region77: #{tpu_custom_call.1} parent=0
    _
  %s9 = ssub.s32 1, %s7
  %s10 = scalar_select 0, %s9, %s7
  $region1: #{tpu_custom_call.1} parent=0
    #allocation2 [shape = 'u8[65536]{0}', space=vmem, size = 0x10000, scoped, tag = 'input window, operand 0']
    #allocation3 [shape = 's32[2]{0}', space=sflag, size = 0x8, scoped, tag = 'scoped memory for tpu_custom_call.1']
    #allocation4 [shape = 's32[2]{0}', space=sflag, size = 0x8, scoped, tag = 'scoped memory for tpu_custom_call.1']
    #allocation5 [shape = 'u8[262144]{0}', space=vmem, size = 0x40000, scoped, tag = 'input window, operand 1']
    #allocation6 [shape = 's32[2]{0}', space=sflag, size = 0x8, scoped, tag = 'scoped memory for tpu_custom_call.1']
    #allocation7 [shape = 'u8[262144]{0}', space=vmem, size = 0x40000, scoped, tag = 'input window, operand 2']
    #allocation8 [shape = 'u8[8192]{0}', space=vmem, size = 0x2000, scoped, tag = 'input window, operand 3']
    #allocation9 [shape = 's32[2]{0}', space=sflag, size = 0x8, scoped, tag = 'scoped memory for tpu_custom_call.1']
    #allocation10 [shape = 'u8[16384]{0}', space=vmem, size = 0x4000, scoped, tag = 'input window, operand 4, single buffered']
    #allocation11 [shape = 'u8[65536]{0}', space=vmem, size = 0x10000, scoped, tag = 'output window, operand 0']
    %11 = vsyncpa [#allocation3], 0
    %s12 = scalar_lea.sflag [#allocation3], 1
    %13 = vsyncpa %s12, 0
    %14 = vsyncpa [#allocation6], 0
    %s15 = scalar_lea.sflag [#allocation6], 1
    %16 = vsyncpa %s15, 0
    %17 = vsyncpa [#allocation9], 0
    %s18 = scalar_lea.sflag [#allocation9], 1
    %19 = vsyncpa %s18, 0
    %20 = vsyncpa [#allocation4], 0
    %s21 = scalar_lea.sflag [#allocation4], 1
    %22 = vsyncpa %s21, 0
    loop: start=0, step=1, limit=4
    $region2: #{tpu_custom_call.1} parent=1 // loop_pre_header
      _
    $region3: #{tpu_custom_call.1} parent=1 // loop_header
      %s24 = sphi 0, %s28
      %p25 = scmp.ge.s32.totalorder %s24, 4
      %s34 = sphi 0, %s36
      %s37 = sphi 0, %s34
      %s38 = sphi 0, %s37
      %s54 = sphi 0, %s38
      %s60 = sphi 0, %s62
      %s63 = sphi 0, %s60
      %s64 = sphi 0, %s63
      %s80 = sphi 0, %s64
      %s86 = sphi 0, %s88
      %s89 = sphi 0, %s86
      %s90 = sphi 0, %s89
      %s106 = sphi 0, %s90
      %s112 = sphi 0, %s114
      %s115 = sphi 0, %s112
      %s116 = sphi 0, %s115
      %s132 = sphi 0, %s116
      %s136 = sphi 0, %s136
      %s138 = sphi 0, %s136
      %s139 = sphi 0, %s138
      %s153 = sphi 0, %s139
      %s157 = sphi 0, %s157
      %s159 = sphi 0, %s157
      %s160 = sphi 0, %s159
      %s174 = sphi 0, %s160
      %s180 = sphi 0, %s182
      %s183 = sphi 0, %s180
      %s184 = sphi 0, %s183
      %s200 = sphi 0, %s184
    $region4: #{tpu_custom_call.1} parent=1 // loop_header_branch
      %27 = sbr.rel (%p25) target = $region8
    $region5: #{tpu_custom_call.1} parent=1 // loop_body
      %s29 = ssub.s32 %s24, 1
      %s30 = ssub.s32 %s24, 2
      %s31 = sadd.s32 %s24, 1
      %s32 = ssub.s32 %s24, %s31
      %p33 = scmp.eq.s32.totalorder %s32, 0
      %s35 = sadd.s32 %s34, 1
      %s36 = scalar_select %p33, %s34, %s35
      %p39 = pneg %p33
      %p40 = scmp.eq.s32.totalorder %s24, 1
      %p41 = por %p39, %p40
      %p42 = scmp.ne.s32.totalorder %s34, %s37
      %p43 = scmp.eq.s32.totalorder %s24, 0
      %p44 = por %p42, %p43
      %p45 = scmp.ne.s32.totalorder %s34, %s37
      %p46 = scmp.eq.s32.totalorder %s29, 1
      %p47 = por %p45, %p46
      %p48 = scmp.ne.s32.totalorder %s37, %s38
      %p49 = scmp.eq.s32.totalorder %s29, 0
      %p50 = por %p48, %p49
      %p51 = scmp.ne.s32.totalorder %s37, %s38
      %p52 = scmp.eq.s32.totalorder %s30, 1
      %p53 = por %p51, %p52
      %p55 = scmp.ne.s32.totalorder %s38, %s54
      %p56 = scmp.eq.s32.totalorder %s30, 0
      %p57 = por %p55, %p56
      %s58 = ssub.s32 %s24, %s31
      %p59 = scmp.eq.s32.totalorder %s58, 0
      %s61 = sadd.s32 %s60, 1
      %s62 = scalar_select %p59, %s60, %s61
      %p65 = pneg %p59
      %p66 = scmp.eq.s32.totalorder %s24, 1
      %p67 = por %p65, %p66
      %p68 = scmp.ne.s32.totalorder %s60, %s63
      %p69 = scmp.eq.s32.totalorder %s24, 0
      %p70 = por %p68, %p69
      %p71 = scmp.ne.s32.totalorder %s60, %s63
      %p72 = scmp.eq.s32.totalorder %s29, 1
      %p73 = por %p71, %p72
      %p74 = scmp.ne.s32.totalorder %s63, %s64
      %p75 = scmp.eq.s32.totalorder %s29, 0
      %p76 = por %p74, %p75
      %p77 = scmp.ne.s32.totalorder %s63, %s64
      %p78 = scmp.eq.s32.totalorder %s30, 1
      %p79 = por %p77, %p78
      %p81 = scmp.ne.s32.totalorder %s64, %s80
      %p82 = scmp.eq.s32.totalorder %s30, 0
      %p83 = por %p81, %p82
      %s84 = ssub.s32 %s24, %s31
      %p85 = scmp.eq.s32.totalorder %s84, 0
      %s87 = sadd.s32 %s86, 1
      %s88 = scalar_select %p85, %s86, %s87
      %p91 = pneg %p85
      %p92 = scmp.eq.s32.totalorder %s24, 1
      %p93 = por %p91, %p92
      %p94 = scmp.ne.s32.totalorder %s86, %s89
      %p95 = scmp.eq.s32.totalorder %s24, 0
      %p96 = por %p94, %p95
      %p97 = scmp.ne.s32.totalorder %s86, %s89
      %p98 = scmp.eq.s32.totalorder %s29, 1
      %p99 = por %p97, %p98
      %p100 = scmp.ne.s32.totalorder %s89, %s90
      %p101 = scmp.eq.s32.totalorder %s29, 0
      %p102 = por %p100, %p101
      %p103 = scmp.ne.s32.totalorder %s89, %s90
      %p104 = scmp.eq.s32.totalorder %s30, 1
      %p105 = por %p103, %p104
      %p107 = scmp.ne.s32.totalorder %s90, %s106
      %p108 = scmp.eq.s32.totalorder %s30, 0
      %p109 = por %p107, %p108
      %s110 = ssub.s32 %s24, %s31
      %p111 = scmp.eq.s32.totalorder %s110, 0
      %s113 = sadd.s32 %s112, 1
      %s114 = scalar_select %p111, %s112, %s113
      %p117 = pneg %p111
      %p118 = scmp.eq.s32.totalorder %s24, 1
      %p119 = por %p117, %p118
      %p120 = scmp.ne.s32.totalorder %s112, %s115
      %p121 = scmp.eq.s32.totalorder %s24, 0
      %p122 = por %p120, %p121
      %p123 = scmp.ne.s32.totalorder %s112, %s115
      %p124 = scmp.eq.s32.totalorder %s29, 1
      %p125 = por %p123, %p124
      %p126 = scmp.ne.s32.totalorder %s115, %s116
      %p127 = scmp.eq.s32.totalorder %s29, 0
      %p128 = por %p126, %p127
      %p129 = scmp.ne.s32.totalorder %s115, %s116
      %p130 = scmp.eq.s32.totalorder %s30, 1
      %p131 = por %p129, %p130
      %p133 = scmp.ne.s32.totalorder %s116, %s132
      %p134 = scmp.eq.s32.totalorder %s30, 0
      %p135 = por %p133, %p134
      %s137 = sadd.s32 %s136, 1
      %p140 = scmp.eq.s32.totalorder %s24, 1
      %p141 = scmp.ne.s32.totalorder %s136, %s138
      %p142 = scmp.eq.s32.totalorder %s24, 0
      %p143 = por %p141, %p142
      %p144 = scmp.ne.s32.totalorder %s136, %s138
      %p145 = scmp.eq.s32.totalorder %s29, 1
      %p146 = por %p144, %p145
      %p147 = scmp.ne.s32.totalorder %s138, %s139
      %p148 = scmp.eq.s32.totalorder %s29, 0
      %p149 = por %p147, %p148
      %p150 = scmp.ne.s32.totalorder %s138, %s139
      %p151 = scmp.eq.s32.totalorder %s30, 1
      %p152 = por %p150, %p151
      %p154 = scmp.ne.s32.totalorder %s139, %s153
      %p155 = scmp.eq.s32.totalorder %s30, 0
      %p156 = por %p154, %p155
      %s158 = sadd.s32 %s157, 1
      %p161 = scmp.eq.s32.totalorder %s24, 1
      %p162 = scmp.ne.s32.totalorder %s157, %s159
      %p163 = scmp.eq.s32.totalorder %s24, 0
      %p164 = por %p162, %p163
      %p165 = scmp.ne.s32.totalorder %s157, %s159
      %p166 = scmp.eq.s32.totalorder %s29, 1
      %p167 = por %p165, %p166
      %p168 = scmp.ne.s32.totalorder %s159, %s160
      %p169 = scmp.eq.s32.totalorder %s29, 0
      %p170 = por %p168, %p169
      %p171 = scmp.ne.s32.totalorder %s159, %s160
      %p172 = scmp.eq.s32.totalorder %s30, 1
      %p173 = por %p171, %p172
      %p175 = scmp.ne.s32.totalorder %s160, %s174
      %p176 = scmp.eq.s32.totalorder %s30, 0
      %p177 = por %p175, %p176
      %s178 = ssub.s32 %s24, %s31
      %p179 = scmp.eq.s32.totalorder %s178, 0
      %s181 = sadd.s32 %s180, 1
      %s182 = scalar_select %p179, %s180, %s181
      %p185 = pneg %p179
      %p186 = scmp.eq.s32.totalorder %s24, 1
      %p187 = por %p185, %p186
      %p188 = scmp.ne.s32.totalorder %s180, %s183
      %p189 = scmp.eq.s32.totalorder %s24, 0
      %p190 = por %p188, %p189
      %p191 = scmp.ne.s32.totalorder %s180, %s183
      %p192 = scmp.eq.s32.totalorder %s29, 1
      %p193 = por %p191, %p192
      %p194 = scmp.ne.s32.totalorder %s183, %s184
      %p195 = scmp.eq.s32.totalorder %s29, 0
      %p196 = por %p194, %p195
      %p197 = scmp.ne.s32.totalorder %s183, %s184
      %p198 = scmp.eq.s32.totalorder %s30, 1
      %p199 = por %p197, %p198
      %p201 = scmp.ne.s32.totalorder %s184, %s200
      %p202 = scmp.eq.s32.totalorder %s30, 0
      %p203 = por %p201, %p202
      %p204 = scmp.le.s32.totalorder 1, %s24
      %p205 = scmp.lt.s32.totalorder %s24, 3
      %p206 = pnand %p204, %p205
      %p207 = pneg %p206
      // Predicated region
      $region9: #{tpu_custom_call.1} parent=5 // pred_check
        _
      $region10: #{tpu_custom_call.1} parent=5 // pred_check_branch
        %209 = sbr.rel (%p206) target = $region12
      $region11: #{tpu_custom_call.1} parent=5 // pred_region
        %s210 = ssub.s32 %s24, 1
        // Predicated region
        $region13: #{tpu_custom_call.1} parent=11 // pred_check
          %p211 = pneg %p149
        $region14: #{tpu_custom_call.1} parent=11 // pred_check_branch
          %213 = sbr.rel (%p211) target = $region16
        $region15: #{tpu_custom_call.1} parent=11 // pred_region
          %s215 = ssub.s32 512, 512
          %216 = vsyncadd [#allocation9], %s215
          %s217 = sshll.u32 [#allocation10], 4
          %s218 = int_to_ptr.vmem [resolvable:$true] %s217
          %223 = dma.hbm_to_vmem [thread:$0]  %s4, 512, %s218, [#allocation9], 128, 128, 8
        $region16: #{tpu_custom_call.1} parent=11 // pred_fallthru
          _
        // Predicated region
        $region17: #{tpu_custom_call.1} parent=11 // pred_check
          %p224 = pneg %p170
        $region18: #{tpu_custom_call.1} parent=11 // pred_check_branch
          %226 = sbr.rel (%p224) target = $region20
        $region19: #{tpu_custom_call.1} parent=11 // pred_region
          _
        $region20: #{tpu_custom_call.1} parent=11 // pred_fallthru
          _
      $region12: #{tpu_custom_call.1} parent=5 // pred_fallthru
        _
      %p227 = scmp.lt.s32.totalorder %s24, 2
      // Predicated region
      $region21: #{tpu_custom_call.1} parent=5 // pred_check
        %p228 = pneg %p227
      $region22: #{tpu_custom_call.1} parent=5 // pred_check_branch
        %230 = sbr.rel (%p228) target = $region24
      $region23: #{tpu_custom_call.1} parent=5 // pred_region
        // Predicated region
        $region25: #{tpu_custom_call.1} parent=23 // pred_check
          %p231 = pneg %p44
        $region26: #{tpu_custom_call.1} parent=23 // pred_check_branch
          %233 = sbr.rel (%p231) target = $region28
        $region27: #{tpu_custom_call.1} parent=23 // pred_region
          %s234 = sand.u32 %s34, 1
          %s235 = scalar_lea.sflag [#allocation3], %s234
          %s236 = sand.u32 %s34, 1
          %s237 = smul.addr %s236, 64
          %s238 = scalar_lea.vmem [#allocation2], %s237
          %s239 = smul.u32 8, %s24
          %s241 = ssub.s32 1024, 1024
          %242 = vsyncadd %s235, %s241
          %s243 = smul.addr %s239, 128
          %s244 = scalar_lea.hbm %s0, %s243
          %s245 = sshll.u32 %s238, 4
          %s246 = int_to_ptr.vmem [resolvable:$true] %s245
          %251 = dma.hbm_to_vmem [thread:$0]  %s244, 1024, %s246, %s235, 128, 128, 8
        $region28: #{tpu_custom_call.1} parent=23 // pred_fallthru
          _
        // Predicated region
        $region29: #{tpu_custom_call.1} parent=23 // pred_check
          %p252 = pneg %p70
        $region30: #{tpu_custom_call.1} parent=23 // pred_check_branch
          %254 = sbr.rel (%p252) target = $region32
        $region31: #{tpu_custom_call.1} parent=23 // pred_region
          %s255 = sand.u32 %s24, 1
          %s256 = scalar_lea.sflag [#allocation6], %s255
          %s257 = sand.u32 %s60, 1
          %s258 = smul.addr %s257, 256
          %s259 = scalar_lea.vmem [#allocation5], %s258
          %s260 = smul.u32 8, %s24
          %s262 = ssub.s32 4096, 4096
          %263 = vsyncadd %s256, %s262
          %s264 = smul.addr %s260, 8
          %s265 = smul.addr %s264, 64
          %s266 = scalar_lea.hbm %s1, %s265
          %s267 = sshll.u32 %s259, 4
          %s268 = int_to_ptr.vmem [resolvable:$true] %s267
          %273 = dma.hbm_to_vmem [thread:$0]  %s266, 4096, %s268, %s256, 64, 64, 4
        $region32: #{tpu_custom_call.1} parent=23 // pred_fallthru
          _
        // Predicated region
        $region33: #{tpu_custom_call.1} parent=23 // pred_check
          %p274 = pneg %p96
        $region34: #{tpu_custom_call.1} parent=23 // pred_check_branch
          %276 = sbr.rel (%p274) target = $region36
        $region35: #{tpu_custom_call.1} parent=23 // pred_region
          %s277 = sand.u32 %s24, 1
          %s278 = scalar_lea.sflag [#allocation6], %s277
          %s279 = sand.u32 %s86, 1
          %s280 = smul.addr %s279, 256
          %s281 = scalar_lea.vmem [#allocation7], %s280
          %s282 = smul.u32 8, %s24
          %s284 = ssub.s32 4096, 4096
          %285 = vsyncadd %s278, %s284
          %s286 = smul.addr %s282, 8
          %s287 = smul.addr %s286, 64
          %s288 = scalar_lea.hbm %s2, %s287
          %s289 = sshll.u32 %s281, 4
          %s290 = int_to_ptr.vmem [resolvable:$true] %s289
          %295 = dma.hbm_to_vmem [thread:$0]  %s288, 4096, %s290, %s278, 64, 64, 4
        $region36: #{tpu_custom_call.1} parent=23 // pred_fallthru
          _
        // Predicated region
        $region37: #{tpu_custom_call.1} parent=23 // pred_check
          %p296 = pneg %p122
        $region38: #{tpu_custom_call.1} parent=23 // pred_check_branch
          %298 = sbr.rel (%p296) target = $region40
        $region39: #{tpu_custom_call.1} parent=23 // pred_region
          %s299 = sand.u32 %s24, 1
          %s300 = scalar_lea.sflag [#allocation9], %s299
          %s301 = sand.u32 %s112, 1
          %s302 = smul.addr %s301, 8
          %s303 = scalar_lea.vmem [#allocation8], %s302
          %s304 = smul.u32 8, %s24
          %s306 = ssub.s32 128, 128
          %307 = vsyncadd %s300, %s306
          %s308 = smul.addr %s304, 16
          %s309 = scalar_lea.hbm %s3, %s308
          %s310 = sshll.u32 %s303, 4
          %s311 = int_to_ptr.vmem [resolvable:$true] %s310
          %316 = dma.hbm_to_vmem [thread:$0]  %s309, 128, %s311, %s300, 16, 16, 1
        $region40: #{tpu_custom_call.1} parent=23 // pred_fallthru
          _
      $region24: #{tpu_custom_call.1} parent=5 // pred_fallthru
        _
      %p317 = scmp.le.s32.totalorder 1, %s24
      %p318 = scmp.lt.s32.totalorder %s24, 3
      %p319 = pnand %p317, %p318
      %p320 = pneg %p319
      // Predicated region
      $region41: #{tpu_custom_call.1} parent=5 // pred_check
        _
      $region42: #{tpu_custom_call.1} parent=5 // pred_check_branch
        %322 = sbr.rel (%p319) target = $region44
      $region43: #{tpu_custom_call.1} parent=5 // pred_region
        %s323 = ssub.s32 %s24, 1
        %s324 = sand.u32 %s37, 1
        %s325 = scalar_lea.sflag [#allocation3], %s324
        %s326 = sand.u32 %s37, 1
        %s327 = smul.addr %s326, 64
        %s328 = scalar_lea.vmem [#allocation2], %s327
        // Predicated region
        $region45: #{tpu_custom_call.1} parent=43 // pred_check
          %p329 = pneg %p50
        $region46: #{tpu_custom_call.1} parent=43 // pred_check_branch
          %331 = sbr.rel (%p329) target = $region48
        $region47: #{tpu_custom_call.1} parent=43 // pred_region
          %332 = dma.done %s325, 1024
        $region48: #{tpu_custom_call.1} parent=43 // pred_fallthru
          _
        %s333 = sand.u32 %s29, 1
        %s334 = scalar_lea.sflag [#allocation6], %s333
        %s335 = sand.u32 %s63, 1
        %s336 = smul.addr %s335, 256
        %s337 = scalar_lea.vmem [#allocation5], %s336
        // Predicated region
        $region49: #{tpu_custom_call.1} parent=43 // pred_check
          %p338 = pneg %p76
        $region50: #{tpu_custom_call.1} parent=43 // pred_check_branch
          %340 = sbr.rel (%p338) target = $region52
        $region51: #{tpu_custom_call.1} parent=43 // pred_region
          %341 = dma.done %s334, 4096
        $region52: #{tpu_custom_call.1} parent=43 // pred_fallthru
          _
        %s342 = sand.u32 %s29, 1
        %s343 = scalar_lea.sflag [#allocation6], %s342
        %s344 = sand.u32 %s89, 1
        %s345 = smul.addr %s344, 256
        %s346 = scalar_lea.vmem [#allocation7], %s345
        // Predicated region
        $region53: #{tpu_custom_call.1} parent=43 // pred_check
          %p347 = pneg %p102
        $region54: #{tpu_custom_call.1} parent=43 // pred_check_branch
          %349 = sbr.rel (%p347) target = $region56
        $region55: #{tpu_custom_call.1} parent=43 // pred_region
          %350 = dma.done %s343, 4096
        $region56: #{tpu_custom_call.1} parent=43 // pred_fallthru
          _
        %s351 = sand.u32 %s29, 1
        %s352 = scalar_lea.sflag [#allocation9], %s351
        %s353 = sand.u32 %s115, 1
        %s354 = smul.addr %s353, 8
        %s355 = scalar_lea.vmem [#allocation8], %s354
        // Predicated region
        $region57: #{tpu_custom_call.1} parent=43 // pred_check
          %p356 = pneg %p128
        $region58: #{tpu_custom_call.1} parent=43 // pred_check_branch
          %358 = sbr.rel (%p356) target = $region60
        $region59: #{tpu_custom_call.1} parent=43 // pred_region
          %359 = dma.done %s352, 128
        $region60: #{tpu_custom_call.1} parent=43 // pred_fallthru
          _
        // Predicated region
        $region61: #{tpu_custom_call.1} parent=43 // pred_check
          %p360 = pneg %p149
        $region62: #{tpu_custom_call.1} parent=43 // pred_check_branch
          %362 = sbr.rel (%p360) target = $region64
        $region63: #{tpu_custom_call.1} parent=43 // pred_region
          %363 = dma.done [#allocation9], 512
        $region64: #{tpu_custom_call.1} parent=43 // pred_fallthru
          _
        %s364 = sand.u32 %s37, 1
        %s365 = scalar_lea.sflag [#allocation3], %s364
        %s366 = sand.u32 %s37, 1
        %s367 = smul.addr %s366, 64
        %s368 = scalar_lea.vmem [#allocation2], %s367
        %p369 = pneg %p50
        %p370 = pneg %p47
        %s371 = sand.u32 %s29, 1
        %s372 = scalar_lea.sflag [#allocation6], %s371
        %s373 = sand.u32 %s63, 1
        %s374 = smul.addr %s373, 256
        %s375 = scalar_lea.vmem [#allocation5], %s374
        %p376 = pneg %p76
        %p377 = pneg %p73
        %s378 = sand.u32 %s29, 1
        %s379 = scalar_lea.sflag [#allocation6], %s378
        %s380 = sand.u32 %s89, 1
        %s381 = smul.addr %s380, 256
        %s382 = scalar_lea.vmem [#allocation7], %s381
        %p383 = pneg %p102
        %p384 = pneg %p99
        %s385 = sand.u32 %s29, 1
        %s386 = scalar_lea.sflag [#allocation9], %s385
        %s387 = sand.u32 %s115, 1
        %s388 = smul.addr %s387, 8
        %s389 = scalar_lea.vmem [#allocation8], %s388
        %p390 = pneg %p128
        %p391 = pneg %p125
        %p392 = pneg %p149
        %p393 = pneg %p146
        %p394 = pneg %p170
        %p395 = pneg %p167
        %p396 = pneg %p196
        %p397 = pneg %p193
        %s398 = sand.u32 %s183, 1
        %s399 = scalar_lea.sflag [#allocation4], %s398
        %s400 = sand.u32 %s183, 1
        %s401 = smul.addr %s400, 64
        %s402 = scalar_lea.vmem [#allocation11], %s401
        %s403 = smul.u32 8, %s29
        %s404 = smul.u32 8, %s29
        %s405 = smul.u32 8, %s29
        %s406 = smul.u32 8, %s29
        %s407 = smul.u32 8, %s29
        %v408 = vld [vmem:[%s328] sm:$0xff]
        %v409 = vld [vmem:[%s328 + $0x8] sm:$0xff]
        %v410 = vld [vmem:[%s328 + $0x10] sm:$0xff]
        %v411 = vld [vmem:[%s328 + $0x18] sm:$0xff]
        %v412 = vld [vmem:[%s328 + $0x20] sm:$0xff]
        %v413 = vld [vmem:[%s328 + $0x28] sm:$0xff]
        %v414 = vld [vmem:[%s328 + $0x30] sm:$0xff]
        %v415 = vld [vmem:[%s328 + $0x38] sm:$0xff]
        %v416 = vld [vmem:[%s337] sm:$0xf]
        %v417 = vld [vmem:[%s337 + $0x4] sm:$0xf]
        %v418 = vld [vmem:[%s337 + $0x8] sm:$0xf]
        %v419 = vld [vmem:[%s337 + $0xc] sm:$0xf]
        %v420 = vld [vmem:[%s337 + $0x10] sm:$0xf]
        %v421 = vld [vmem:[%s337 + $0x14] sm:$0xf]
        %v422 = vld [vmem:[%s337 + $0x18] sm:$0xf]
        %v423 = vld [vmem:[%s337 + $0x1c] sm:$0xf]
        %v424 = vld [vmem:[%s337 + $0x20] sm:$0xf]
        %v425 = vld [vmem:[%s337 + $0x24] sm:$0xf]
        %v426 = vld [vmem:[%s337 + $0x28] sm:$0xf]
        %v427 = vld [vmem:[%s337 + $0x2c] sm:$0xf]
        %v428 = vld [vmem:[%s337 + $0x30] sm:$0xf]
        %v429 = vld [vmem:[%s337 + $0x34] sm:$0xf]
        %v430 = vld [vmem:[%s337 + $0x38] sm:$0xf]
        %v431 = vld [vmem:[%s337 + $0x3c] sm:$0xf]
        %v432 = vld [vmem:[%s337 + $0x40] sm:$0xf]
        %v433 = vld [vmem:[%s337 + $0x44] sm:$0xf]
        %v434 = vld [vmem:[%s337 + $0x48] sm:$0xf]
        %v435 = vld [vmem:[%s337 + $0x4c] sm:$0xf]
        %v436 = vld [vmem:[%s337 + $0x50] sm:$0xf]
        %v437 = vld [vmem:[%s337 + $0x54] sm:$0xf]
        %v438 = vld [vmem:[%s337 + $0x58] sm:$0xf]
        %v439 = vld [vmem:[%s337 + $0x5c] sm:$0xf]
        %v440 = vld [vmem:[%s337 + $0x60] sm:$0xf]
        %v441 = vld [vmem:[%s337 + $0x64] sm:$0xf]
        %v442 = vld [vmem:[%s337 + $0x68] sm:$0xf]
        %v443 = vld [vmem:[%s337 + $0x6c] sm:$0xf]
        %v444 = vld [vmem:[%s337 + $0x70] sm:$0xf]
        %v445 = vld [vmem:[%s337 + $0x74] sm:$0xf]
        %v446 = vld [vmem:[%s337 + $0x78] sm:$0xf]
        %v447 = vld [vmem:[%s337 + $0x7c] sm:$0xf]
        %v448 = vld [vmem:[%s337 + $0x80] sm:$0xf]
        %v449 = vld [vmem:[%s337 + $0x84] sm:$0xf]
        %v450 = vld [vmem:[%s337 + $0x88] sm:$0xf]
        %v451 = vld [vmem:[%s337 + $0x8c] sm:$0xf]
        %v452 = vld [vmem:[%s337 + $0x90] sm:$0xf]
        %v453 = vld [vmem:[%s337 + $0x94] sm:$0xf]
        %v454 = vld [vmem:[%s337 + $0x98] sm:$0xf]
        %v455 = vld [vmem:[%s337 + $0x9c] sm:$0xf]
        %v456 = vld [vmem:[%s337 + $0xa0] sm:$0xf]
        %v457 = vld [vmem:[%s337 + $0xa4] sm:$0xf]
        %v458 = vld [vmem:[%s337 + $0xa8] sm:$0xf]
        %v459 = vld [vmem:[%s337 + $0xac] sm:$0xf]
        %v460 = vld [vmem:[%s337 + $0xb0] sm:$0xf]
        %v461 = vld [vmem:[%s337 + $0xb4] sm:$0xf]
        %v462 = vld [vmem:[%s337 + $0xb8] sm:$0xf]
        %v463 = vld [vmem:[%s337 + $0xbc] sm:$0xf]
        %v464 = vld [vmem:[%s337 + $0xc0] sm:$0xf]
        %v465 = vld [vmem:[%s337 + $0xc4] sm:$0xf]
        %v466 = vld [vmem:[%s337 + $0xc8] sm:$0xf]
        %v467 = vld [vmem:[%s337 + $0xcc] sm:$0xf]
        %v468 = vld [vmem:[%s337 + $0xd0] sm:$0xf]
        %v469 = vld [vmem:[%s337 + $0xd4] sm:$0xf]
        %v470 = vld [vmem:[%s337 + $0xd8] sm:$0xf]
        %v471 = vld [vmem:[%s337 + $0xdc] sm:$0xf]
        %v472 = vld [vmem:[%s337 + $0xe0] sm:$0xf]
        %v473 = vld [vmem:[%s337 + $0xe4] sm:$0xf]
        %v474 = vld [vmem:[%s337 + $0xe8] sm:$0xf]
        %v475 = vld [vmem:[%s337 + $0xec] sm:$0xf]
        %v476 = vld [vmem:[%s337 + $0xf0] sm:$0xf]
        %v477 = vld [vmem:[%s337 + $0xf4] sm:$0xf]
        %v478 = vld [vmem:[%s337 + $0xf8] sm:$0xf]
        %v479 = vld [vmem:[%s337 + $0xfc] sm:$0xf]
        %v480 = vld [vmem:[%s346] sm:$0xf]
        %v481 = vld [vmem:[%s346 + $0x4] sm:$0xf]
        %v482 = vld [vmem:[%s346 + $0x8] sm:$0xf]
        %v483 = vld [vmem:[%s346 + $0xc] sm:$0xf]
        %v484 = vld [vmem:[%s346 + $0x10] sm:$0xf]
        %v485 = vld [vmem:[%s346 + $0x14] sm:$0xf]
        %v486 = vld [vmem:[%s346 + $0x18] sm:$0xf]
        %v487 = vld [vmem:[%s346 + $0x1c] sm:$0xf]
        %v488 = vld [vmem:[%s346 + $0x20] sm:$0xf]
        %v489 = vld [vmem:[%s346 + $0x24] sm:$0xf]
        %v490 = vld [vmem:[%s346 + $0x28] sm:$0xf]
        %v491 = vld [vmem:[%s346 + $0x2c] sm:$0xf]
        %v492 = vld [vmem:[%s346 + $0x30] sm:$0xf]
        %v493 = vld [vmem:[%s346 + $0x34] sm:$0xf]
        %v494 = vld [vmem:[%s346 + $0x38] sm:$0xf]
        %v495 = vld [vmem:[%s346 + $0x3c] sm:$0xf]
        %v496 = vld [vmem:[%s346 + $0x40] sm:$0xf]
        %v497 = vld [vmem:[%s346 + $0x44] sm:$0xf]
        %v498 = vld [vmem:[%s346 + $0x48] sm:$0xf]
        %v499 = vld [vmem:[%s346 + $0x4c] sm:$0xf]
        %v500 = vld [vmem:[%s346 + $0x50] sm:$0xf]
        %v501 = vld [vmem:[%s346 + $0x54] sm:$0xf]
        %v502 = vld [vmem:[%s346 + $0x58] sm:$0xf]
        %v503 = vld [vmem:[%s346 + $0x5c] sm:$0xf]
        %v504 = vld [vmem:[%s346 + $0x60] sm:$0xf]
        %v505 = vld [vmem:[%s346 + $0x64] sm:$0xf]
        %v506 = vld [vmem:[%s346 + $0x68] sm:$0xf]
        %v507 = vld [vmem:[%s346 + $0x6c] sm:$0xf]
        %v508 = vld [vmem:[%s346 + $0x70] sm:$0xf]
        %v509 = vld [vmem:[%s346 + $0x74] sm:$0xf]
        %v510 = vld [vmem:[%s346 + $0x78] sm:$0xf]
        %v511 = vld [vmem:[%s346 + $0x7c] sm:$0xf]
        %v512 = vld [vmem:[%s346 + $0x80] sm:$0xf]
        %v513 = vld [vmem:[%s346 + $0x84] sm:$0xf]
        %v514 = vld [vmem:[%s346 + $0x88] sm:$0xf]
        %v515 = vld [vmem:[%s346 + $0x8c] sm:$0xf]
        %v516 = vld [vmem:[%s346 + $0x90] sm:$0xf]
        %v517 = vld [vmem:[%s346 + $0x94] sm:$0xf]
        %v518 = vld [vmem:[%s346 + $0x98] sm:$0xf]
        %v519 = vld [vmem:[%s346 + $0x9c] sm:$0xf]
        %v520 = vld [vmem:[%s346 + $0xa0] sm:$0xf]
        %v521 = vld [vmem:[%s346 + $0xa4] sm:$0xf]
        %v522 = vld [vmem:[%s346 + $0xa8] sm:$0xf]
        %v523 = vld [vmem:[%s346 + $0xac] sm:$0xf]
        %v524 = vld [vmem:[%s346 + $0xb0] sm:$0xf]
        %v525 = vld [vmem:[%s346 + $0xb4] sm:$0xf]
        %v526 = vld [vmem:[%s346 + $0xb8] sm:$0xf]
        %v527 = vld [vmem:[%s346 + $0xbc] sm:$0xf]
        %v528 = vld [vmem:[%s346 + $0xc0] sm:$0xf]
        %v529 = vld [vmem:[%s346 + $0xc4] sm:$0xf]
        %v530 = vld [vmem:[%s346 + $0xc8] sm:$0xf]
        %v531 = vld [vmem:[%s346 + $0xcc] sm:$0xf]
        %v532 = vld [vmem:[%s346 + $0xd0] sm:$0xf]
        %v533 = vld [vmem:[%s346 + $0xd4] sm:$0xf]
        %v534 = vld [vmem:[%s346 + $0xd8] sm:$0xf]
        %v535 = vld [vmem:[%s346 + $0xdc] sm:$0xf]
        %v536 = vld [vmem:[%s346 + $0xe0] sm:$0xf]
        %v537 = vld [vmem:[%s346 + $0xe4] sm:$0xf]
        %v538 = vld [vmem:[%s346 + $0xe8] sm:$0xf]
        %v539 = vld [vmem:[%s346 + $0xec] sm:$0xf]
        %v540 = vld [vmem:[%s346 + $0xf0] sm:$0xf]
        %v541 = vld [vmem:[%s346 + $0xf4] sm:$0xf]
        %v542 = vld [vmem:[%s346 + $0xf8] sm:$0xf]
        %v543 = vld [vmem:[%s346 + $0xfc] sm:$0xf]
        %v544 = vld [vmem:[%s355] sm:$0x1]
        %v545 = vld [vmem:[%s355 + $0x1] sm:$0x1]
        %v546 = vld [vmem:[%s355 + $0x2] sm:$0x1]
        %v547 = vld [vmem:[%s355 + $0x3] sm:$0x1]
        %v548 = vld [vmem:[%s355 + $0x4] sm:$0x1]
        %v549 = vld [vmem:[%s355 + $0x5] sm:$0x1]
        %v550 = vld [vmem:[%s355 + $0x6] sm:$0x1]
        %v551 = vld [vmem:[%s355 + $0x7] sm:$0x1]
        %v560 = vlaneseq
        %v561 = vshrl.u32 %v560, 7
        %v562 = vsub.s32 0, %v561
        %v563 = vrot.slane %v544, %v562
        %v564 = vlaneseq
        %v565 = vshrl.u32 %v564, 7
        %v566 = vsub.s32 0, %v565
        %v567 = vrot.slane %v545, %v566
        %v568 = vlaneseq
        %v569 = vshrl.u32 %v568, 7
        %v570 = vsub.s32 0, %v569
        %v571 = vrot.slane %v546, %v570
        %v572 = vlaneseq
        %v573 = vshrl.u32 %v572, 7
        %v574 = vsub.s32 0, %v573
        %v575 = vrot.slane %v547, %v574
        %v576 = vlaneseq
        %v577 = vshrl.u32 %v576, 7
        %v578 = vsub.s32 0, %v577
        %v579 = vrot.slane %v548, %v578
        %v580 = vlaneseq
        %v581 = vshrl.u32 %v580, 7
        %v582 = vsub.s32 0, %v581
        %v583 = vrot.slane %v549, %v582
        %v584 = vlaneseq
        %v585 = vshrl.u32 %v584, 7
        %v586 = vsub.s32 0, %v585
        %v587 = vrot.slane %v550, %v586
        %v588 = vlaneseq
        %v589 = vshrl.u32 %v588, 7
        %v590 = vsub.s32 0, %v589
        %v591 = vrot.slane %v551, %v590
        %v600 = vmul.f32 %v480, %v563
        %v601 = vmul.f32 %v481, %v563
        %v602 = vmul.f32 %v482, %v563
        %v603 = vmul.f32 %v483, %v563
        %v604 = vmul.f32 %v484, %v563
        %v605 = vmul.f32 %v485, %v563
        %v606 = vmul.f32 %v486, %v563
        %v607 = vmul.f32 %v487, %v563
        %v608 = vmul.f32 %v488, %v567
        %v609 = vmul.f32 %v489, %v567
        %v610 = vmul.f32 %v490, %v567
        %v611 = vmul.f32 %v491, %v567
        %v612 = vmul.f32 %v492, %v567
        %v613 = vmul.f32 %v493, %v567
        %v614 = vmul.f32 %v494, %v567
        %v615 = vmul.f32 %v495, %v567
        %v616 = vmul.f32 %v496, %v571
        %v617 = vmul.f32 %v497, %v571
        %v618 = vmul.f32 %v498, %v571
        %v619 = vmul.f32 %v499, %v571
        %v620 = vmul.f32 %v500, %v571
        %v621 = vmul.f32 %v501, %v571
        %v622 = vmul.f32 %v502, %v571
        %v623 = vmul.f32 %v503, %v571
        %v624 = vmul.f32 %v504, %v575
        %v625 = vmul.f32 %v505, %v575
        %v626 = vmul.f32 %v506, %v575
        %v627 = vmul.f32 %v507, %v575
        %v628 = vmul.f32 %v508, %v575
        %v629 = vmul.f32 %v509, %v575
        %v630 = vmul.f32 %v510, %v575
        %v631 = vmul.f32 %v511, %v575
        %v632 = vmul.f32 %v512, %v579
        %v633 = vmul.f32 %v513, %v579
        %v634 = vmul.f32 %v514, %v579
        %v635 = vmul.f32 %v515, %v579
        %v636 = vmul.f32 %v516, %v579
        %v637 = vmul.f32 %v517, %v579
        %v638 = vmul.f32 %v518, %v579
        %v639 = vmul.f32 %v519, %v579
        %v640 = vmul.f32 %v520, %v583
        %v641 = vmul.f32 %v521, %v583
        %v642 = vmul.f32 %v522, %v583
        %v643 = vmul.f32 %v523, %v583
        %v644 = vmul.f32 %v524, %v583
        %v645 = vmul.f32 %v525, %v583
        %v646 = vmul.f32 %v526, %v583
        %v647 = vmul.f32 %v527, %v583
        %v648 = vmul.f32 %v528, %v587
        %v649 = vmul.f32 %v529, %v587
        %v650 = vmul.f32 %v530, %v587
        %v651 = vmul.f32 %v531, %v587
        %v652 = vmul.f32 %v532, %v587
        %v653 = vmul.f32 %v533, %v587
        %v654 = vmul.f32 %v534, %v587
        %v655 = vmul.f32 %v535, %v587
        %v656 = vmul.f32 %v536, %v591
        %v657 = vmul.f32 %v537, %v591
        %v658 = vmul.f32 %v538, %v591
        %v659 = vmul.f32 %v539, %v591
        %v660 = vmul.f32 %v540, %v591
        %v661 = vmul.f32 %v541, %v591
        %v662 = vmul.f32 %v542, %v591
        %v663 = vmul.f32 %v543, %v591
        %vm664 = vcmask 257024
        %v665 = vsel %vm664, %v600, 0.0
        %666 = vadd.xlane.f32.xlu0 %v665
        %v667 = vpop.xlane.xlu0 %666
        %v668 = vsel %vm664, %v601, 0.0
        %669 = vadd.xlane.f32.xlu0 %v668
        %v670 = vpop.xlane.xlu0 %669
        %v671 = vsel %vm664, %v602, 0.0
        %672 = vadd.xlane.f32.xlu0 %v671
        %v673 = vpop.xlane.xlu0 %672
        %v674 = vsel %vm664, %v603, 0.0
        %675 = vadd.xlane.f32.xlu0 %v674
        %v676 = vpop.xlane.xlu0 %675
        %v677 = vsel %vm664, %v604, 0.0
        %678 = vadd.xlane.f32.xlu0 %v677
        %v679 = vpop.xlane.xlu0 %678
        %v680 = vsel %vm664, %v605, 0.0
        %681 = vadd.xlane.f32.xlu0 %v680
        %v682 = vpop.xlane.xlu0 %681
        %v683 = vsel %vm664, %v606, 0.0
        %684 = vadd.xlane.f32.xlu0 %v683
        %v685 = vpop.xlane.xlu0 %684
        %v686 = vsel %vm664, %v607, 0.0
        %687 = vadd.xlane.f32.xlu0 %v686
        %v688 = vpop.xlane.xlu0 %687
        %v689 = vsel %vm664, %v608, 0.0
        %690 = vadd.xlane.f32.xlu0 %v689
        %v691 = vpop.xlane.xlu0 %690
        %v692 = vsel %vm664, %v609, 0.0
        %693 = vadd.xlane.f32.xlu0 %v692
        %v694 = vpop.xlane.xlu0 %693
        %v695 = vsel %vm664, %v610, 0.0
        %696 = vadd.xlane.f32.xlu0 %v695
        %v697 = vpop.xlane.xlu0 %696
        %v698 = vsel %vm664, %v611, 0.0
        %699 = vadd.xlane.f32.xlu0 %v698
        %v700 = vpop.xlane.xlu0 %699
        %v701 = vsel %vm664, %v612, 0.0
        %702 = vadd.xlane.f32.xlu0 %v701
        %v703 = vpop.xlane.xlu0 %702
        %v704 = vsel %vm664, %v613, 0.0
        %705 = vadd.xlane.f32.xlu0 %v704
        %v706 = vpop.xlane.xlu0 %705
        %v707 = vsel %vm664, %v614, 0.0
        %708 = vadd.xlane.f32.xlu0 %v707
        %v709 = vpop.xlane.xlu0 %708
        %v710 = vsel %vm664, %v615, 0.0
        %711 = vadd.xlane.f32.xlu0 %v710
        %v712 = vpop.xlane.xlu0 %711
        %v713 = vsel %vm664, %v616, 0.0
        %714 = vadd.xlane.f32.xlu0 %v713
        %v715 = vpop.xlane.xlu0 %714
        %v716 = vsel %vm664, %v617, 0.0
        %717 = vadd.xlane.f32.xlu0 %v716
        %v718 = vpop.xlane.xlu0 %717
        %v719 = vsel %vm664, %v618, 0.0
        %720 = vadd.xlane.f32.xlu0 %v719
        %v721 = vpop.xlane.xlu0 %720
        %v722 = vsel %vm664, %v619, 0.0
        %723 = vadd.xlane.f32.xlu0 %v722
        %v724 = vpop.xlane.xlu0 %723
        %v725 = vsel %vm664, %v620, 0.0
        %726 = vadd.xlane.f32.xlu0 %v725
        %v727 = vpop.xlane.xlu0 %726
        %v728 = vsel %vm664, %v621, 0.0
        %729 = vadd.xlane.f32.xlu0 %v728
        %v730 = vpop.xlane.xlu0 %729
        %v731 = vsel %vm664, %v622, 0.0
        %732 = vadd.xlane.f32.xlu0 %v731
        %v733 = vpop.xlane.xlu0 %732
        %v734 = vsel %vm664, %v623, 0.0
        %735 = vadd.xlane.f32.xlu0 %v734
        %v736 = vpop.xlane.xlu0 %735
        %v737 = vsel %vm664, %v624, 0.0
        %738 = vadd.xlane.f32.xlu0 %v737
        %v739 = vpop.xlane.xlu0 %738
        %v740 = vsel %vm664, %v625, 0.0
        %741 = vadd.xlane.f32.xlu0 %v740
        %v742 = vpop.xlane.xlu0 %741
        %v743 = vsel %vm664, %v626, 0.0
        %744 = vadd.xlane.f32.xlu0 %v743
        %v745 = vpop.xlane.xlu0 %744
        %v746 = vsel %vm664, %v627, 0.0
        %747 = vadd.xlane.f32.xlu0 %v746
        %v748 = vpop.xlane.xlu0 %747
        %v749 = vsel %vm664, %v628, 0.0
        %750 = vadd.xlane.f32.xlu0 %v749
        %v751 = vpop.xlane.xlu0 %750
        %v752 = vsel %vm664, %v629, 0.0
        %753 = vadd.xlane.f32.xlu0 %v752
        %v754 = vpop.xlane.xlu0 %753
        %v755 = vsel %vm664, %v630, 0.0
        %756 = vadd.xlane.f32.xlu0 %v755
        %v757 = vpop.xlane.xlu0 %756
        %v758 = vsel %vm664, %v631, 0.0
        %759 = vadd.xlane.f32.xlu0 %v758
        %v760 = vpop.xlane.xlu0 %759
        %v761 = vsel %vm664, %v632, 0.0
        %762 = vadd.xlane.f32.xlu0 %v761
        %v763 = vpop.xlane.xlu0 %762
        %v764 = vsel %vm664, %v633, 0.0
        %765 = vadd.xlane.f32.xlu0 %v764
        %v766 = vpop.xlane.xlu0 %765
        %v767 = vsel %vm664, %v634, 0.0
        %768 = vadd.xlane.f32.xlu0 %v767
        %v769 = vpop.xlane.xlu0 %768
        %v770 = vsel %vm664, %v635, 0.0
        %771 = vadd.xlane.f32.xlu0 %v770
        %v772 = vpop.xlane.xlu0 %771
        %v773 = vsel %vm664, %v636, 0.0
        %774 = vadd.xlane.f32.xlu0 %v773
        %v775 = vpop.xlane.xlu0 %774
        %v776 = vsel %vm664, %v637, 0.0
        %777 = vadd.xlane.f32.xlu0 %v776
        %v778 = vpop.xlane.xlu0 %777
        %v779 = vsel %vm664, %v638, 0.0
        %780 = vadd.xlane.f32.xlu0 %v779
        %v781 = vpop.xlane.xlu0 %780
        %v782 = vsel %vm664, %v639, 0.0
        %783 = vadd.xlane.f32.xlu0 %v782
        %v784 = vpop.xlane.xlu0 %783
        %v785 = vsel %vm664, %v640, 0.0
        %786 = vadd.xlane.f32.xlu0 %v785
        %v787 = vpop.xlane.xlu0 %786
        %v788 = vsel %vm664, %v641, 0.0
        %789 = vadd.xlane.f32.xlu0 %v788
        %v790 = vpop.xlane.xlu0 %789
        %v791 = vsel %vm664, %v642, 0.0
        %792 = vadd.xlane.f32.xlu0 %v791
        %v793 = vpop.xlane.xlu0 %792
        %v794 = vsel %vm664, %v643, 0.0
        %795 = vadd.xlane.f32.xlu0 %v794
        %v796 = vpop.xlane.xlu0 %795
        %v797 = vsel %vm664, %v644, 0.0
        %798 = vadd.xlane.f32.xlu0 %v797
        %v799 = vpop.xlane.xlu0 %798
        %v800 = vsel %vm664, %v645, 0.0
        %801 = vadd.xlane.f32.xlu0 %v800
        %v802 = vpop.xlane.xlu0 %801
        %v803 = vsel %vm664, %v646, 0.0
        %804 = vadd.xlane.f32.xlu0 %v803
        %v805 = vpop.xlane.xlu0 %804
        %v806 = vsel %vm664, %v647, 0.0
        %807 = vadd.xlane.f32.xlu0 %v806
        %v808 = vpop.xlane.xlu0 %807
        %v809 = vsel %vm664, %v648, 0.0
        %810 = vadd.xlane.f32.xlu0 %v809
        %v811 = vpop.xlane.xlu0 %810
        %v812 = vsel %vm664, %v649, 0.0
        %813 = vadd.xlane.f32.xlu0 %v812
        %v814 = vpop.xlane.xlu0 %813
        %v815 = vsel %vm664, %v650, 0.0
        %816 = vadd.xlane.f32.xlu0 %v815
        %v817 = vpop.xlane.xlu0 %816
        %v818 = vsel %vm664, %v651, 0.0
        %819 = vadd.xlane.f32.xlu0 %v818
        %v820 = vpop.xlane.xlu0 %819
        %v821 = vsel %vm664, %v652, 0.0
        %822 = vadd.xlane.f32.xlu0 %v821
        %v823 = vpop.xlane.xlu0 %822
        %v824 = vsel %vm664, %v653, 0.0
        %825 = vadd.xlane.f32.xlu0 %v824
        %v826 = vpop.xlane.xlu0 %825
        %v827 = vsel %vm664, %v654, 0.0
        %828 = vadd.xlane.f32.xlu0 %v827
        %v829 = vpop.xlane.xlu0 %828
        %v830 = vsel %vm664, %v655, 0.0
        %831 = vadd.xlane.f32.xlu0 %v830
        %v832 = vpop.xlane.xlu0 %831
        %v833 = vsel %vm664, %v656, 0.0
        %834 = vadd.xlane.f32.xlu0 %v833
        %v835 = vpop.xlane.xlu0 %834
        %v836 = vsel %vm664, %v657, 0.0
        %837 = vadd.xlane.f32.xlu0 %v836
        %v838 = vpop.xlane.xlu0 %837
        %v839 = vsel %vm664, %v658, 0.0
        %840 = vadd.xlane.f32.xlu0 %v839
        %v841 = vpop.xlane.xlu0 %840
        %v842 = vsel %vm664, %v659, 0.0
        %843 = vadd.xlane.f32.xlu0 %v842
        %v844 = vpop.xlane.xlu0 %843
        %v845 = vsel %vm664, %v660, 0.0
        %846 = vadd.xlane.f32.xlu0 %v845
        %v847 = vpop.xlane.xlu0 %846
        %v848 = vsel %vm664, %v661, 0.0
        %849 = vadd.xlane.f32.xlu0 %v848
        %v850 = vpop.xlane.xlu0 %849
        %v851 = vsel %vm664, %v662, 0.0
        %852 = vadd.xlane.f32.xlu0 %v851
        %v853 = vpop.xlane.xlu0 %852
        %v854 = vsel %vm664, %v663, 0.0
        %855 = vadd.xlane.f32.xlu0 %v854
        %v856 = vpop.xlane.xlu0 %855
        %v921 = vlaneseq
        %v922 = vand.u32 %v921, 127
        %v923 = vlaneseq
        %v924 = vshrl.u32 %v923, 7
        %v925 = vsub.s32 %v922, %v924
        %v926 = vrot.slane %v667, %v925
        %v927 = vlaneseq
        %v928 = vshrl.u32 %v927, 7
        %v929 = vsub.s32 %v922, %v928
        %v930 = vrot.slane %v670, %v929
        %v931 = vlaneseq
        %v932 = vshrl.u32 %v931, 7
        %v933 = vsub.s32 %v922, %v932
        %v934 = vrot.slane %v673, %v933
        %v935 = vlaneseq
        %v936 = vshrl.u32 %v935, 7
        %v937 = vsub.s32 %v922, %v936
        %v938 = vrot.slane %v676, %v937
        %v939 = vlaneseq
        %v940 = vshrl.u32 %v939, 7
        %v941 = vsub.s32 %v922, %v940
        %v942 = vrot.slane %v679, %v941
        %v943 = vlaneseq
        %v944 = vshrl.u32 %v943, 7
        %v945 = vsub.s32 %v922, %v944
        %v946 = vrot.slane %v682, %v945
        %v947 = vlaneseq
        %v948 = vshrl.u32 %v947, 7
        %v949 = vsub.s32 %v922, %v948
        %v950 = vrot.slane %v685, %v949
        %v951 = vlaneseq
        %v952 = vshrl.u32 %v951, 7
        %v953 = vsub.s32 %v922, %v952
        %v954 = vrot.slane %v688, %v953
        %v955 = vlaneseq
        %v956 = vshrl.u32 %v955, 7
        %v957 = vsub.s32 %v922, %v956
        %v958 = vrot.slane %v691, %v957
        %v959 = vlaneseq
        %v960 = vshrl.u32 %v959, 7
        %v961 = vsub.s32 %v922, %v960
        %v962 = vrot.slane %v694, %v961
        %v963 = vlaneseq
        %v964 = vshrl.u32 %v963, 7
        %v965 = vsub.s32 %v922, %v964
        %v966 = vrot.slane %v697, %v965
        %v967 = vlaneseq
        %v968 = vshrl.u32 %v967, 7
        %v969 = vsub.s32 %v922, %v968
        %v970 = vrot.slane %v700, %v969
        %v971 = vlaneseq
        %v972 = vshrl.u32 %v971, 7
        %v973 = vsub.s32 %v922, %v972
        %v974 = vrot.slane %v703, %v973
        %v975 = vlaneseq
        %v976 = vshrl.u32 %v975, 7
        %v977 = vsub.s32 %v922, %v976
        %v978 = vrot.slane %v706, %v977
        %v979 = vlaneseq
        %v980 = vshrl.u32 %v979, 7
        %v981 = vsub.s32 %v922, %v980
        %v982 = vrot.slane %v709, %v981
        %v983 = vlaneseq
        %v984 = vshrl.u32 %v983, 7
        %v985 = vsub.s32 %v922, %v984
        %v986 = vrot.slane %v712, %v985
        %v987 = vlaneseq
        %v988 = vshrl.u32 %v987, 7
        %v989 = vsub.s32 %v922, %v988
        %v990 = vrot.slane %v715, %v989
        %v991 = vlaneseq
        %v992 = vshrl.u32 %v991, 7
        %v993 = vsub.s32 %v922, %v992
        %v994 = vrot.slane %v718, %v993
        %v995 = vlaneseq
        %v996 = vshrl.u32 %v995, 7
        %v997 = vsub.s32 %v922, %v996
        %v998 = vrot.slane %v721, %v997
        %v999 = vlaneseq
        %v1000 = vshrl.u32 %v999, 7
        %v1001 = vsub.s32 %v922, %v1000
        %v1002 = vrot.slane %v724, %v1001
        %v1003 = vlaneseq
        %v1004 = vshrl.u32 %v1003, 7
        %v1005 = vsub.s32 %v922, %v1004
        %v1006 = vrot.slane %v727, %v1005
        %v1007 = vlaneseq
        %v1008 = vshrl.u32 %v1007, 7
        %v1009 = vsub.s32 %v922, %v1008
        %v1010 = vrot.slane %v730, %v1009
        %v1011 = vlaneseq
        %v1012 = vshrl.u32 %v1011, 7
        %v1013 = vsub.s32 %v922, %v1012
        %v1014 = vrot.slane %v733, %v1013
        %v1015 = vlaneseq
        %v1016 = vshrl.u32 %v1015, 7
        %v1017 = vsub.s32 %v922, %v1016
        %v1018 = vrot.slane %v736, %v1017
        %v1019 = vlaneseq
        %v1020 = vshrl.u32 %v1019, 7
        %v1021 = vsub.s32 %v922, %v1020
        %v1022 = vrot.slane %v739, %v1021
        %v1023 = vlaneseq
        %v1024 = vshrl.u32 %v1023, 7
        %v1025 = vsub.s32 %v922, %v1024
        %v1026 = vrot.slane %v742, %v1025
        %v1027 = vlaneseq
        %v1028 = vshrl.u32 %v1027, 7
        %v1029 = vsub.s32 %v922, %v1028
        %v1030 = vrot.slane %v745, %v1029
        %v1031 = vlaneseq
        %v1032 = vshrl.u32 %v1031, 7
        %v1033 = vsub.s32 %v922, %v1032
        %v1034 = vrot.slane %v748, %v1033
        %v1035 = vlaneseq
        %v1036 = vshrl.u32 %v1035, 7
        %v1037 = vsub.s32 %v922, %v1036
        %v1038 = vrot.slane %v751, %v1037
        %v1039 = vlaneseq
        %v1040 = vshrl.u32 %v1039, 7
        %v1041 = vsub.s32 %v922, %v1040
        %v1042 = vrot.slane %v754, %v1041
        %v1043 = vlaneseq
        %v1044 = vshrl.u32 %v1043, 7
        %v1045 = vsub.s32 %v922, %v1044
        %v1046 = vrot.slane %v757, %v1045
        %v1047 = vlaneseq
        %v1048 = vshrl.u32 %v1047, 7
        %v1049 = vsub.s32 %v922, %v1048
        %v1050 = vrot.slane %v760, %v1049
        %v1051 = vlaneseq
        %v1052 = vshrl.u32 %v1051, 7
        %v1053 = vsub.s32 %v922, %v1052
        %v1054 = vrot.slane %v763, %v1053
        %v1055 = vlaneseq
        %v1056 = vshrl.u32 %v1055, 7
        %v1057 = vsub.s32 %v922, %v1056
        %v1058 = vrot.slane %v766, %v1057
        %v1059 = vlaneseq
        %v1060 = vshrl.u32 %v1059, 7
        %v1061 = vsub.s32 %v922, %v1060
        %v1062 = vrot.slane %v769, %v1061
        %v1063 = vlaneseq
        %v1064 = vshrl.u32 %v1063, 7
        %v1065 = vsub.s32 %v922, %v1064
        %v1066 = vrot.slane %v772, %v1065
        %v1067 = vlaneseq
        %v1068 = vshrl.u32 %v1067, 7
        %v1069 = vsub.s32 %v922, %v1068
        %v1070 = vrot.slane %v775, %v1069
        %v1071 = vlaneseq
        %v1072 = vshrl.u32 %v1071, 7
        %v1073 = vsub.s32 %v922, %v1072
        %v1074 = vrot.slane %v778, %v1073
        %v1075 = vlaneseq
        %v1076 = vshrl.u32 %v1075, 7
        %v1077 = vsub.s32 %v922, %v1076
        %v1078 = vrot.slane %v781, %v1077
        %v1079 = vlaneseq
        %v1080 = vshrl.u32 %v1079, 7
        %v1081 = vsub.s32 %v922, %v1080
        %v1082 = vrot.slane %v784, %v1081
        %v1083 = vlaneseq
        %v1084 = vshrl.u32 %v1083, 7
        %v1085 = vsub.s32 %v922, %v1084
        %v1086 = vrot.slane %v787, %v1085
        %v1087 = vlaneseq
        %v1088 = vshrl.u32 %v1087, 7
        %v1089 = vsub.s32 %v922, %v1088
        %v1090 = vrot.slane %v790, %v1089
        %v1091 = vlaneseq
        %v1092 = vshrl.u32 %v1091, 7
        %v1093 = vsub.s32 %v922, %v1092
        %v1094 = vrot.slane %v793, %v1093
        %v1095 = vlaneseq
        %v1096 = vshrl.u32 %v1095, 7
        %v1097 = vsub.s32 %v922, %v1096
        %v1098 = vrot.slane %v796, %v1097
        %v1099 = vlaneseq
        %v1100 = vshrl.u32 %v1099, 7
        %v1101 = vsub.s32 %v922, %v1100
        %v1102 = vrot.slane %v799, %v1101
        %v1103 = vlaneseq
        %v1104 = vshrl.u32 %v1103, 7
        %v1105 = vsub.s32 %v922, %v1104
        %v1106 = vrot.slane %v802, %v1105
        %v1107 = vlaneseq
        %v1108 = vshrl.u32 %v1107, 7
        %v1109 = vsub.s32 %v922, %v1108
        %v1110 = vrot.slane %v805, %v1109
        %v1111 = vlaneseq
        %v1112 = vshrl.u32 %v1111, 7
        %v1113 = vsub.s32 %v922, %v1112
        %v1114 = vrot.slane %v808, %v1113
        %v1115 = vlaneseq
        %v1116 = vshrl.u32 %v1115, 7
        %v1117 = vsub.s32 %v922, %v1116
        %v1118 = vrot.slane %v811, %v1117
        %v1119 = vlaneseq
        %v1120 = vshrl.u32 %v1119, 7
        %v1121 = vsub.s32 %v922, %v1120
        %v1122 = vrot.slane %v814, %v1121
        %v1123 = vlaneseq
        %v1124 = vshrl.u32 %v1123, 7
        %v1125 = vsub.s32 %v922, %v1124
        %v1126 = vrot.slane %v817, %v1125
        %v1127 = vlaneseq
        %v1128 = vshrl.u32 %v1127, 7
        %v1129 = vsub.s32 %v922, %v1128
        %v1130 = vrot.slane %v820, %v1129
        %v1131 = vlaneseq
        %v1132 = vshrl.u32 %v1131, 7
        %v1133 = vsub.s32 %v922, %v1132
        %v1134 = vrot.slane %v823, %v1133
        %v1135 = vlaneseq
        %v1136 = vshrl.u32 %v1135, 7
        %v1137 = vsub.s32 %v922, %v1136
        %v1138 = vrot.slane %v826, %v1137
        %v1139 = vlaneseq
        %v1140 = vshrl.u32 %v1139, 7
        %v1141 = vsub.s32 %v922, %v1140
        %v1142 = vrot.slane %v829, %v1141
        %v1143 = vlaneseq
        %v1144 = vshrl.u32 %v1143, 7
        %v1145 = vsub.s32 %v922, %v1144
        %v1146 = vrot.slane %v832, %v1145
        %v1147 = vlaneseq
        %v1148 = vshrl.u32 %v1147, 7
        %v1149 = vsub.s32 %v922, %v1148
        %v1150 = vrot.slane %v835, %v1149
        %v1151 = vlaneseq
        %v1152 = vshrl.u32 %v1151, 7
        %v1153 = vsub.s32 %v922, %v1152
        %v1154 = vrot.slane %v838, %v1153
        %v1155 = vlaneseq
        %v1156 = vshrl.u32 %v1155, 7
        %v1157 = vsub.s32 %v922, %v1156
        %v1158 = vrot.slane %v841, %v1157
        %v1159 = vlaneseq
        %v1160 = vshrl.u32 %v1159, 7
        %v1161 = vsub.s32 %v922, %v1160
        %v1162 = vrot.slane %v844, %v1161
        %v1163 = vlaneseq
        %v1164 = vshrl.u32 %v1163, 7
        %v1165 = vsub.s32 %v922, %v1164
        %v1166 = vrot.slane %v847, %v1165
        %v1167 = vlaneseq
        %v1168 = vshrl.u32 %v1167, 7
        %v1169 = vsub.s32 %v922, %v1168
        %v1170 = vrot.slane %v850, %v1169
        %v1171 = vlaneseq
        %v1172 = vshrl.u32 %v1171, 7
        %v1173 = vsub.s32 %v922, %v1172
        %v1174 = vrot.slane %v853, %v1173
        %v1175 = vlaneseq
        %v1176 = vshrl.u32 %v1175, 7
        %v1177 = vsub.s32 %v922, %v1176
        %v1178 = vrot.slane %v856, %v1177
        %vm1179 = vcmask 1041409
        %v1180 = vsel %vm1179, %v930, %v926
        %vm1181 = vcmask 1042434
        %v1182 = vsel %vm1181, %v934, %v1180
        %vm1183 = vcmask 1043459
        %v1184 = vsel %vm1183, %v938, %v1182
        %vm1185 = vcmask 1044484
        %v1186 = vsel %vm1185, %v942, %v1184
        %vm1187 = vcmask 1045509
        %v1188 = vsel %vm1187, %v946, %v1186
        %vm1189 = vcmask 1046534
        %v1190 = vsel %vm1189, %v950, %v1188
        %vm1191 = vcmask 1047559
        %v1192 = vsel %vm1191, %v954, %v1190
        %v1193 = vsel %vm1179, %v962, %v958
        %v1194 = vsel %vm1181, %v966, %v1193
        %v1195 = vsel %vm1183, %v970, %v1194
        %v1196 = vsel %vm1185, %v974, %v1195
        %v1197 = vsel %vm1187, %v978, %v1196
        %v1198 = vsel %vm1189, %v982, %v1197
        %v1199 = vsel %vm1191, %v986, %v1198
        %v1200 = vsel %vm1179, %v994, %v990
        %v1201 = vsel %vm1181, %v998, %v1200
        %v1202 = vsel %vm1183, %v1002, %v1201
        %v1203 = vsel %vm1185, %v1006, %v1202
        %v1204 = vsel %vm1187, %v1010, %v1203
        %v1205 = vsel %vm1189, %v1014, %v1204
        %v1206 = vsel %vm1191, %v1018, %v1205
        %v1207 = vsel %vm1179, %v1026, %v1022
        %v1208 = vsel %vm1181, %v1030, %v1207
        %v1209 = vsel %vm1183, %v1034, %v1208
        %v1210 = vsel %vm1185, %v1038, %v1209
        %v1211 = vsel %vm1187, %v1042, %v1210
        %v1212 = vsel %vm1189, %v1046, %v1211
        %v1213 = vsel %vm1191, %v1050, %v1212
        %v1214 = vsel %vm1179, %v1058, %v1054
        %v1215 = vsel %vm1181, %v1062, %v1214
        %v1216 = vsel %vm1183, %v1066, %v1215
        %v1217 = vsel %vm1185, %v1070, %v1216
        %v1218 = vsel %vm1187, %v1074, %v1217
        %v1219 = vsel %vm1189, %v1078, %v1218
        %v1220 = vsel %vm1191, %v1082, %v1219
        %v1221 = vsel %vm1179, %v1090, %v1086
        %v1222 = vsel %vm1181, %v1094, %v1221
        %v1223 = vsel %vm1183, %v1098, %v1222
        %v1224 = vsel %vm1185, %v1102, %v1223
        %v1225 = vsel %vm1187, %v1106, %v1224
        %v1226 = vsel %vm1189, %v1110, %v1225
        %v1227 = vsel %vm1191, %v1114, %v1226
        %v1228 = vsel %vm1179, %v1122, %v1118
        %v1229 = vsel %vm1181, %v1126, %v1228
        %v1230 = vsel %vm1183, %v1130, %v1229
        %v1231 = vsel %vm1185, %v1134, %v1230
        %v1232 = vsel %vm1187, %v1138, %v1231
        %v1233 = vsel %vm1189, %v1142, %v1232
        %v1234 = vsel %vm1191, %v1146, %v1233
        %v1235 = vsel %vm1179, %v1154, %v1150
        %v1236 = vsel %vm1181, %v1158, %v1235
        %v1237 = vsel %vm1183, %v1162, %v1236
        %v1238 = vsel %vm1185, %v1166, %v1237
        %v1239 = vsel %vm1187, %v1170, %v1238
        %v1240 = vsel %vm1189, %v1174, %v1239
        %v1241 = vsel %vm1191, %v1178, %v1240
        %vm1250 = vcmask 31744
        %v1251 = vsel %vm1250, %v1192, -inf
        %1252 = vmax.xlane.f32.xlu0 %v1251
        %v1253 = vpop.xlane.xlu0 %1252
        %v1254 = vsel %vm1250, %v1199, -inf
        %1255 = vmax.xlane.f32.xlu0 %v1254
        %v1256 = vpop.xlane.xlu0 %1255
        %v1257 = vsel %vm1250, %v1206, -inf
        %1258 = vmax.xlane.f32.xlu0 %v1257
        %v1259 = vpop.xlane.xlu0 %1258
        %v1260 = vsel %vm1250, %v1213, -inf
        %1261 = vmax.xlane.f32.xlu0 %v1260
        %v1262 = vpop.xlane.xlu0 %1261
        %v1263 = vsel %vm1250, %v1220, -inf
        %1264 = vmax.xlane.f32.xlu0 %v1263
        %v1265 = vpop.xlane.xlu0 %1264
        %v1266 = vsel %vm1250, %v1227, -inf
        %1267 = vmax.xlane.f32.xlu0 %v1266
        %v1268 = vpop.xlane.xlu0 %1267
        %v1269 = vsel %vm1250, %v1234, -inf
        %1270 = vmax.xlane.f32.xlu0 %v1269
        %v1271 = vpop.xlane.xlu0 %1270
        %v1272 = vsel %vm1250, %v1241, -inf
        %1273 = vmax.xlane.f32.xlu0 %v1272
        %v1274 = vpop.xlane.xlu0 %1273
        %v1283 = vlaneseq
        %v1284 = vshrl.u32 %v1283, 7
        %v1285 = vsub.s32 0, %v1284
        %v1286 = vrot.slane %v1253, %v1285
        %v1287 = vlaneseq
        %v1288 = vshrl.u32 %v1287, 7
        %v1289 = vsub.s32 1, %v1288
        %v1290 = vrot.slane %v1253, %v1289
        %v1291 = vlaneseq
        %v1292 = vshrl.u32 %v1291, 7
        %v1293 = vsub.s32 2, %v1292
        %v1294 = vrot.slane %v1253, %v1293
        %v1295 = vlaneseq
        %v1296 = vshrl.u32 %v1295, 7
        %v1297 = vsub.s32 3, %v1296
        %v1298 = vrot.slane %v1253, %v1297
        %v1299 = vlaneseq
        %v1300 = vshrl.u32 %v1299, 7
        %v1301 = vsub.s32 4, %v1300
        %v1302 = vrot.slane %v1253, %v1301
        %v1303 = vlaneseq
        %v1304 = vshrl.u32 %v1303, 7
        %v1305 = vsub.s32 5, %v1304
        %v1306 = vrot.slane %v1253, %v1305
        %v1307 = vlaneseq
        %v1308 = vshrl.u32 %v1307, 7
        %v1309 = vsub.s32 6, %v1308
        %v1310 = vrot.slane %v1253, %v1309
        %v1311 = vlaneseq
        %v1312 = vshrl.u32 %v1311, 7
        %v1313 = vsub.s32 7, %v1312
        %v1314 = vrot.slane %v1253, %v1313
        %v1315 = vlaneseq
        %v1316 = vshrl.u32 %v1315, 7
        %v1317 = vsub.s32 0, %v1316
        %v1318 = vrot.slane %v1256, %v1317
        %v1319 = vlaneseq
        %v1320 = vshrl.u32 %v1319, 7
        %v1321 = vsub.s32 1, %v1320
        %v1322 = vrot.slane %v1256, %v1321
        %v1323 = vlaneseq
        %v1324 = vshrl.u32 %v1323, 7
        %v1325 = vsub.s32 2, %v1324
        %v1326 = vrot.slane %v1256, %v1325
        %v1327 = vlaneseq
        %v1328 = vshrl.u32 %v1327, 7
        %v1329 = vsub.s32 3, %v1328
        %v1330 = vrot.slane %v1256, %v1329
        %v1331 = vlaneseq
        %v1332 = vshrl.u32 %v1331, 7
        %v1333 = vsub.s32 4, %v1332
        %v1334 = vrot.slane %v1256, %v1333
        %v1335 = vlaneseq
        %v1336 = vshrl.u32 %v1335, 7
        %v1337 = vsub.s32 5, %v1336
        %v1338 = vrot.slane %v1256, %v1337
        %v1339 = vlaneseq
        %v1340 = vshrl.u32 %v1339, 7
        %v1341 = vsub.s32 6, %v1340
        %v1342 = vrot.slane %v1256, %v1341
        %v1343 = vlaneseq
        %v1344 = vshrl.u32 %v1343, 7
        %v1345 = vsub.s32 7, %v1344
        %v1346 = vrot.slane %v1256, %v1345
        %v1347 = vlaneseq
        %v1348 = vshrl.u32 %v1347, 7
        %v1349 = vsub.s32 0, %v1348
        %v1350 = vrot.slane %v1259, %v1349
        %v1351 = vlaneseq
        %v1352 = vshrl.u32 %v1351, 7
        %v1353 = vsub.s32 1, %v1352
        %v1354 = vrot.slane %v1259, %v1353
        %v1355 = vlaneseq
        %v1356 = vshrl.u32 %v1355, 7
        %v1357 = vsub.s32 2, %v1356
        %v1358 = vrot.slane %v1259, %v1357
        %v1359 = vlaneseq
        %v1360 = vshrl.u32 %v1359, 7
        %v1361 = vsub.s32 3, %v1360
        %v1362 = vrot.slane %v1259, %v1361
        %v1363 = vlaneseq
        %v1364 = vshrl.u32 %v1363, 7
        %v1365 = vsub.s32 4, %v1364
        %v1366 = vrot.slane %v1259, %v1365
        %v1367 = vlaneseq
        %v1368 = vshrl.u32 %v1367, 7
        %v1369 = vsub.s32 5, %v1368
        %v1370 = vrot.slane %v1259, %v1369
        %v1371 = vlaneseq
        %v1372 = vshrl.u32 %v1371, 7
        %v1373 = vsub.s32 6, %v1372
        %v1374 = vrot.slane %v1259, %v1373
        %v1375 = vlaneseq
        %v1376 = vshrl.u32 %v1375, 7
        %v1377 = vsub.s32 7, %v1376
        %v1378 = vrot.slane %v1259, %v1377
        %v1379 = vlaneseq
        %v1380 = vshrl.u32 %v1379, 7
        %v1381 = vsub.s32 0, %v1380
        %v1382 = vrot.slane %v1262, %v1381
        %v1383 = vlaneseq
        %v1384 = vshrl.u32 %v1383, 7
        %v1385 = vsub.s32 1, %v1384
        %v1386 = vrot.slane %v1262, %v1385
        %v1387 = vlaneseq
        %v1388 = vshrl.u32 %v1387, 7
        %v1389 = vsub.s32 2, %v1388
        %v1390 = vrot.slane %v1262, %v1389
        %v1391 = vlaneseq
        %v1392 = vshrl.u32 %v1391, 7
        %v1393 = vsub.s32 3, %v1392
        %v1394 = vrot.slane %v1262, %v1393
        %v1395 = vlaneseq
        %v1396 = vshrl.u32 %v1395, 7
        %v1397 = vsub.s32 4, %v1396
        %v1398 = vrot.slane %v1262, %v1397
        %v1399 = vlaneseq
        %v1400 = vshrl.u32 %v1399, 7
        %v1401 = vsub.s32 5, %v1400
        %v1402 = vrot.slane %v1262, %v1401
        %v1403 = vlaneseq
        %v1404 = vshrl.u32 %v1403, 7
        %v1405 = vsub.s32 6, %v1404
        %v1406 = vrot.slane %v1262, %v1405
        %v1407 = vlaneseq
        %v1408 = vshrl.u32 %v1407, 7
        %v1409 = vsub.s32 7, %v1408
        %v1410 = vrot.slane %v1262, %v1409
        %v1411 = vlaneseq
        %v1412 = vshrl.u32 %v1411, 7
        %v1413 = vsub.s32 0, %v1412
        %v1414 = vrot.slane %v1265, %v1413
        %v1415 = vlaneseq
        %v1416 = vshrl.u32 %v1415, 7
        %v1417 = vsub.s32 1, %v1416
        %v1418 = vrot.slane %v1265, %v1417
        %v1419 = vlaneseq
        %v1420 = vshrl.u32 %v1419, 7
        %v1421 = vsub.s32 2, %v1420
        %v1422 = vrot.slane %v1265, %v1421
        %v1423 = vlaneseq
        %v1424 = vshrl.u32 %v1423, 7
        %v1425 = vsub.s32 3, %v1424
        %v1426 = vrot.slane %v1265, %v1425
        %v1427 = vlaneseq
        %v1428 = vshrl.u32 %v1427, 7
        %v1429 = vsub.s32 4, %v1428
        %v1430 = vrot.slane %v1265, %v1429
        %v1431 = vlaneseq
        %v1432 = vshrl.u32 %v1431, 7
        %v1433 = vsub.s32 5, %v1432
        %v1434 = vrot.slane %v1265, %v1433
        %v1435 = vlaneseq
        %v1436 = vshrl.u32 %v1435, 7
        %v1437 = vsub.s32 6, %v1436
        %v1438 = vrot.slane %v1265, %v1437
        %v1439 = vlaneseq
        %v1440 = vshrl.u32 %v1439, 7
        %v1441 = vsub.s32 7, %v1440
        %v1442 = vrot.slane %v1265, %v1441
        %v1443 = vlaneseq
        %v1444 = vshrl.u32 %v1443, 7
        %v1445 = vsub.s32 0, %v1444
        %v1446 = vrot.slane %v1268, %v1445
        %v1447 = vlaneseq
        %v1448 = vshrl.u32 %v1447, 7
        %v1449 = vsub.s32 1, %v1448
        %v1450 = vrot.slane %v1268, %v1449
        %v1451 = vlaneseq
        %v1452 = vshrl.u32 %v1451, 7
        %v1453 = vsub.s32 2, %v1452
        %v1454 = vrot.slane %v1268, %v1453
        %v1455 = vlaneseq
        %v1456 = vshrl.u32 %v1455, 7
        %v1457 = vsub.s32 3, %v1456
        %v1458 = vrot.slane %v1268, %v1457
        %v1459 = vlaneseq
        %v1460 = vshrl.u32 %v1459, 7
        %v1461 = vsub.s32 4, %v1460
        %v1462 = vrot.slane %v1268, %v1461
        %v1463 = vlaneseq
        %v1464 = vshrl.u32 %v1463, 7
        %v1465 = vsub.s32 5, %v1464
        %v1466 = vrot.slane %v1268, %v1465
        %v1467 = vlaneseq
        %v1468 = vshrl.u32 %v1467, 7
        %v1469 = vsub.s32 6, %v1468
        %v1470 = vrot.slane %v1268, %v1469
        %v1471 = vlaneseq
        %v1472 = vshrl.u32 %v1471, 7
        %v1473 = vsub.s32 7, %v1472
        %v1474 = vrot.slane %v1268, %v1473
        %v1475 = vlaneseq
        %v1476 = vshrl.u32 %v1475, 7
        %v1477 = vsub.s32 0, %v1476
        %v1478 = vrot.slane %v1271, %v1477
        %v1479 = vlaneseq
        %v1480 = vshrl.u32 %v1479, 7
        %v1481 = vsub.s32 1, %v1480
        %v1482 = vrot.slane %v1271, %v1481
        %v1483 = vlaneseq
        %v1484 = vshrl.u32 %v1483, 7
        %v1485 = vsub.s32 2, %v1484
        %v1486 = vrot.slane %v1271, %v1485
        %v1487 = vlaneseq
        %v1488 = vshrl.u32 %v1487, 7
        %v1489 = vsub.s32 3, %v1488
        %v1490 = vrot.slane %v1271, %v1489
        %v1491 = vlaneseq
        %v1492 = vshrl.u32 %v1491, 7
        %v1493 = vsub.s32 4, %v1492
        %v1494 = vrot.slane %v1271, %v1493
        %v1495 = vlaneseq
        %v1496 = vshrl.u32 %v1495, 7
        %v1497 = vsub.s32 5, %v1496
        %v1498 = vrot.slane %v1271, %v1497
        %v1499 = vlaneseq
        %v1500 = vshrl.u32 %v1499, 7
        %v1501 = vsub.s32 6, %v1500
        %v1502 = vrot.slane %v1271, %v1501
        %v1503 = vlaneseq
        %v1504 = vshrl.u32 %v1503, 7
        %v1505 = vsub.s32 7, %v1504
        %v1506 = vrot.slane %v1271, %v1505
        %v1507 = vlaneseq
        %v1508 = vshrl.u32 %v1507, 7
        %v1509 = vsub.s32 0, %v1508
        %v1510 = vrot.slane %v1274, %v1509
        %v1511 = vlaneseq
        %v1512 = vshrl.u32 %v1511, 7
        %v1513 = vsub.s32 1, %v1512
        %v1514 = vrot.slane %v1274, %v1513
        %v1515 = vlaneseq
        %v1516 = vshrl.u32 %v1515, 7
        %v1517 = vsub.s32 2, %v1516
        %v1518 = vrot.slane %v1274, %v1517
        %v1519 = vlaneseq
        %v1520 = vshrl.u32 %v1519, 7
        %v1521 = vsub.s32 3, %v1520
        %v1522 = vrot.slane %v1274, %v1521
        %v1523 = vlaneseq
        %v1524 = vshrl.u32 %v1523, 7
        %v1525 = vsub.s32 4, %v1524
        %v1526 = vrot.slane %v1274, %v1525
        %v1527 = vlaneseq
        %v1528 = vshrl.u32 %v1527, 7
        %v1529 = vsub.s32 5, %v1528
        %v1530 = vrot.slane %v1274, %v1529
        %v1531 = vlaneseq
        %v1532 = vshrl.u32 %v1531, 7
        %v1533 = vsub.s32 6, %v1532
        %v1534 = vrot.slane %v1274, %v1533
        %v1535 = vlaneseq
        %v1536 = vshrl.u32 %v1535, 7
        %v1537 = vsub.s32 7, %v1536
        %v1538 = vrot.slane %v1274, %v1537
        %v1603 = vsub.f32 %v667, %v1286
        %v1604 = vsub.f32 %v670, %v1290
        %v1605 = vsub.f32 %v673, %v1294
        %v1606 = vsub.f32 %v676, %v1298
        %v1607 = vsub.f32 %v679, %v1302
        %v1608 = vsub.f32 %v682, %v1306
        %v1609 = vsub.f32 %v685, %v1310
        %v1610 = vsub.f32 %v688, %v1314
        %v1611 = vsub.f32 %v691, %v1318
        %v1612 = vsub.f32 %v694, %v1322
        %v1613 = vsub.f32 %v697, %v1326
        %v1614 = vsub.f32 %v700, %v1330
        %v1615 = vsub.f32 %v703, %v1334
        %v1616 = vsub.f32 %v706, %v1338
        %v1617 = vsub.f32 %v709, %v1342
        %v1618 = vsub.f32 %v712, %v1346
        %v1619 = vsub.f32 %v715, %v1350
        %v1620 = vsub.f32 %v718, %v1354
        %v1621 = vsub.f32 %v721, %v1358
        %v1622 = vsub.f32 %v724, %v1362
        %v1623 = vsub.f32 %v727, %v1366
        %v1624 = vsub.f32 %v730, %v1370
        %v1625 = vsub.f32 %v733, %v1374
        %v1626 = vsub.f32 %v736, %v1378
        %v1627 = vsub.f32 %v739, %v1382
        %v1628 = vsub.f32 %v742, %v1386
        %v1629 = vsub.f32 %v745, %v1390
        %v1630 = vsub.f32 %v748, %v1394
        %v1631 = vsub.f32 %v751, %v1398
        %v1632 = vsub.f32 %v754, %v1402
        %v1633 = vsub.f32 %v757, %v1406
        %v1634 = vsub.f32 %v760, %v1410
        %v1635 = vsub.f32 %v763, %v1414
        %v1636 = vsub.f32 %v766, %v1418
        %v1637 = vsub.f32 %v769, %v1422
        %v1638 = vsub.f32 %v772, %v1426
        %v1639 = vsub.f32 %v775, %v1430
        %v1640 = vsub.f32 %v778, %v1434
        %v1641 = vsub.f32 %v781, %v1438
        %v1642 = vsub.f32 %v784, %v1442
        %v1643 = vsub.f32 %v787, %v1446
        %v1644 = vsub.f32 %v790, %v1450
        %v1645 = vsub.f32 %v793, %v1454
        %v1646 = vsub.f32 %v796, %v1458
        %v1647 = vsub.f32 %v799, %v1462
        %v1648 = vsub.f32 %v802, %v1466
        %v1649 = vsub.f32 %v805, %v1470
        %v1650 = vsub.f32 %v808, %v1474
        %v1651 = vsub.f32 %v811, %v1478
        %v1652 = vsub.f32 %v814, %v1482
        %v1653 = vsub.f32 %v817, %v1486
        %v1654 = vsub.f32 %v820, %v1490
        %v1655 = vsub.f32 %v823, %v1494
        %v1656 = vsub.f32 %v826, %v1498
        %v1657 = vsub.f32 %v829, %v1502
        %v1658 = vsub.f32 %v832, %v1506
        %v1659 = vsub.f32 %v835, %v1510
        %v1660 = vsub.f32 %v838, %v1514
        %v1661 = vsub.f32 %v841, %v1518
        %v1662 = vsub.f32 %v844, %v1522
        %v1663 = vsub.f32 %v847, %v1526
        %v1664 = vsub.f32 %v850, %v1530
        %v1665 = vsub.f32 %v853, %v1534
        %v1666 = vsub.f32 %v856, %v1538
        %v1667 = vmul.f32 %v1603, 1.442695
        %v1668 = vpow.pop %v1667
        %v1669 = vmul.f32 %v1604, 1.442695
        %v1670 = vpow.pop %v1669
        %v1671 = vmul.f32 %v1605, 1.442695
        %v1672 = vpow.pop %v1671
        %v1673 = vmul.f32 %v1606, 1.442695
        %v1674 = vpow.pop %v1673
        %v1675 = vmul.f32 %v1607, 1.442695
        %v1676 = vpow.pop %v1675
        %v1677 = vmul.f32 %v1608, 1.442695
        %v1678 = vpow.pop %v1677
        %v1679 = vmul.f32 %v1609, 1.442695
        %v1680 = vpow.pop %v1679
        %v1681 = vmul.f32 %v1610, 1.442695
        %v1682 = vpow.pop %v1681
        %v1683 = vmul.f32 %v1611, 1.442695
        %v1684 = vpow.pop %v1683
        %v1685 = vmul.f32 %v1612, 1.442695
        %v1686 = vpow.pop %v1685
        %v1687 = vmul.f32 %v1613, 1.442695
        %v1688 = vpow.pop %v1687
        %v1689 = vmul.f32 %v1614, 1.442695
        %v1690 = vpow.pop %v1689
        %v1691 = vmul.f32 %v1615, 1.442695
        %v1692 = vpow.pop %v1691
        %v1693 = vmul.f32 %v1616, 1.442695
        %v1694 = vpow.pop %v1693
        %v1695 = vmul.f32 %v1617, 1.442695
        %v1696 = vpow.pop %v1695
        %v1697 = vmul.f32 %v1618, 1.442695
        %v1698 = vpow.pop %v1697
        %v1699 = vmul.f32 %v1619, 1.442695
        %v1700 = vpow.pop %v1699
        %v1701 = vmul.f32 %v1620, 1.442695
        %v1702 = vpow.pop %v1701
        %v1703 = vmul.f32 %v1621, 1.442695
        %v1704 = vpow.pop %v1703
        %v1705 = vmul.f32 %v1622, 1.442695
        %v1706 = vpow.pop %v1705
        %v1707 = vmul.f32 %v1623, 1.442695
        %v1708 = vpow.pop %v1707
        %v1709 = vmul.f32 %v1624, 1.442695
        %v1710 = vpow.pop %v1709
        %v1711 = vmul.f32 %v1625, 1.442695
        %v1712 = vpow.pop %v1711
        %v1713 = vmul.f32 %v1626, 1.442695
        %v1714 = vpow.pop %v1713
        %v1715 = vmul.f32 %v1627, 1.442695
        %v1716 = vpow.pop %v1715
        %v1717 = vmul.f32 %v1628, 1.442695
        %v1718 = vpow.pop %v1717
        %v1719 = vmul.f32 %v1629, 1.442695
        %v1720 = vpow.pop %v1719
        %v1721 = vmul.f32 %v1630, 1.442695
        %v1722 = vpow.pop %v1721
        %v1723 = vmul.f32 %v1631, 1.442695
        %v1724 = vpow.pop %v1723
        %v1725 = vmul.f32 %v1632, 1.442695
        %v1726 = vpow.pop %v1725
        %v1727 = vmul.f32 %v1633, 1.442695
        %v1728 = vpow.pop %v1727
        %v1729 = vmul.f32 %v1634, 1.442695
        %v1730 = vpow.pop %v1729
        %v1731 = vmul.f32 %v1635, 1.442695
        %v1732 = vpow.pop %v1731
        %v1733 = vmul.f32 %v1636, 1.442695
        %v1734 = vpow.pop %v1733
        %v1735 = vmul.f32 %v1637, 1.442695
        %v1736 = vpow.pop %v1735
        %v1737 = vmul.f32 %v1638, 1.442695
        %v1738 = vpow.pop %v1737
        %v1739 = vmul.f32 %v1639, 1.442695
        %v1740 = vpow.pop %v1739
        %v1741 = vmul.f32 %v1640, 1.442695
        %v1742 = vpow.pop %v1741
        %v1743 = vmul.f32 %v1641, 1.442695
        %v1744 = vpow.pop %v1743
        %v1745 = vmul.f32 %v1642, 1.442695
        %v1746 = vpow.pop %v1745
        %v1747 = vmul.f32 %v1643, 1.442695
        %v1748 = vpow.pop %v1747
        %v1749 = vmul.f32 %v1644, 1.442695
        %v1750 = vpow.pop %v1749
        %v1751 = vmul.f32 %v1645, 1.442695
        %v1752 = vpow.pop %v1751
        %v1753 = vmul.f32 %v1646, 1.442695
        %v1754 = vpow.pop %v1753
        %v1755 = vmul.f32 %v1647, 1.442695
        %v1756 = vpow.pop %v1755
        %v1757 = vmul.f32 %v1648, 1.442695
        %v1758 = vpow.pop %v1757
        %v1759 = vmul.f32 %v1649, 1.442695
        %v1760 = vpow.pop %v1759
        %v1761 = vmul.f32 %v1650, 1.442695
        %v1762 = vpow.pop %v1761
        %v1763 = vmul.f32 %v1651, 1.442695
        %v1764 = vpow.pop %v1763
        %v1765 = vmul.f32 %v1652, 1.442695
        %v1766 = vpow.pop %v1765
        %v1767 = vmul.f32 %v1653, 1.442695
        %v1768 = vpow.pop %v1767
        %v1769 = vmul.f32 %v1654, 1.442695
        %v1770 = vpow.pop %v1769
        %v1771 = vmul.f32 %v1655, 1.442695
        %v1772 = vpow.pop %v1771
        %v1773 = vmul.f32 %v1656, 1.442695
        %v1774 = vpow.pop %v1773
        %v1775 = vmul.f32 %v1657, 1.442695
        %v1776 = vpow.pop %v1775
        %v1777 = vmul.f32 %v1658, 1.442695
        %v1778 = vpow.pop %v1777
        %v1779 = vmul.f32 %v1659, 1.442695
        %v1780 = vpow.pop %v1779
        %v1781 = vmul.f32 %v1660, 1.442695
        %v1782 = vpow.pop %v1781
        %v1783 = vmul.f32 %v1661, 1.442695
        %v1784 = vpow.pop %v1783
        %v1785 = vmul.f32 %v1662, 1.442695
        %v1786 = vpow.pop %v1785
        %v1787 = vmul.f32 %v1663, 1.442695
        %v1788 = vpow.pop %v1787
        %v1789 = vmul.f32 %v1664, 1.442695
        %v1790 = vpow.pop %v1789
        %v1791 = vmul.f32 %v1665, 1.442695
        %v1792 = vpow.pop %v1791
        %v1793 = vmul.f32 %v1666, 1.442695
        %v1794 = vpow.pop %v1793
        %1859 = vset.pattern.permute.xlu0 0
        %1860 = vperm.xlu0 %1859, %v1668
        %v1861 = vpop.permute.xlu0 %1860
        %1862 = vset.pattern.permute.xlu0 0
        %1863 = vperm.xlu0 %1862, %v1670
        %v1864 = vpop.permute.xlu0 %1863
        %1865 = vset.pattern.permute.xlu0 0
        %1866 = vperm.xlu0 %1865, %v1672
        %v1867 = vpop.permute.xlu0 %1866
        %1868 = vset.pattern.permute.xlu0 0
        %1869 = vperm.xlu0 %1868, %v1674
        %v1870 = vpop.permute.xlu0 %1869
        %1871 = vset.pattern.permute.xlu0 0
        %1872 = vperm.xlu0 %1871, %v1676
        %v1873 = vpop.permute.xlu0 %1872
        %1874 = vset.pattern.permute.xlu0 0
        %1875 = vperm.xlu0 %1874, %v1678
        %v1876 = vpop.permute.xlu0 %1875
        %1877 = vset.pattern.permute.xlu0 0
        %1878 = vperm.xlu0 %1877, %v1680
        %v1879 = vpop.permute.xlu0 %1878
        %1880 = vset.pattern.permute.xlu0 0
        %1881 = vperm.xlu0 %1880, %v1682
        %v1882 = vpop.permute.xlu0 %1881
        %1883 = vset.pattern.permute.xlu0 0
        %1884 = vperm.xlu0 %1883, %v1684
        %v1885 = vpop.permute.xlu0 %1884
        %1886 = vset.pattern.permute.xlu0 0
        %1887 = vperm.xlu0 %1886, %v1686
        %v1888 = vpop.permute.xlu0 %1887
        %1889 = vset.pattern.permute.xlu0 0
        %1890 = vperm.xlu0 %1889, %v1688
        %v1891 = vpop.permute.xlu0 %1890
        %1892 = vset.pattern.permute.xlu0 0
        %1893 = vperm.xlu0 %1892, %v1690
        %v1894 = vpop.permute.xlu0 %1893
        %1895 = vset.pattern.permute.xlu0 0
        %1896 = vperm.xlu0 %1895, %v1692
        %v1897 = vpop.permute.xlu0 %1896
        %1898 = vset.pattern.permute.xlu0 0
        %1899 = vperm.xlu0 %1898, %v1694
        %v1900 = vpop.permute.xlu0 %1899
        %1901 = vset.pattern.permute.xlu0 0
        %1902 = vperm.xlu0 %1901, %v1696
        %v1903 = vpop.permute.xlu0 %1902
        %1904 = vset.pattern.permute.xlu0 0
        %1905 = vperm.xlu0 %1904, %v1698
        %v1906 = vpop.permute.xlu0 %1905
        %1907 = vset.pattern.permute.xlu0 0
        %1908 = vperm.xlu0 %1907, %v1700
        %v1909 = vpop.permute.xlu0 %1908
        %1910 = vset.pattern.permute.xlu0 0
        %1911 = vperm.xlu0 %1910, %v1702
        %v1912 = vpop.permute.xlu0 %1911
        %1913 = vset.pattern.permute.xlu0 0
        %1914 = vperm.xlu0 %1913, %v1704
        %v1915 = vpop.permute.xlu0 %1914
        %1916 = vset.pattern.permute.xlu0 0
        %1917 = vperm.xlu0 %1916, %v1706
        %v1918 = vpop.permute.xlu0 %1917
        %1919 = vset.pattern.permute.xlu0 0
        %1920 = vperm.xlu0 %1919, %v1708
        %v1921 = vpop.permute.xlu0 %1920
        %1922 = vset.pattern.permute.xlu0 0
        %1923 = vperm.xlu0 %1922, %v1710
        %v1924 = vpop.permute.xlu0 %1923
        %1925 = vset.pattern.permute.xlu0 0
        %1926 = vperm.xlu0 %1925, %v1712
        %v1927 = vpop.permute.xlu0 %1926
        %1928 = vset.pattern.permute.xlu0 0
        %1929 = vperm.xlu0 %1928, %v1714
        %v1930 = vpop.permute.xlu0 %1929
        %1931 = vset.pattern.permute.xlu0 0
        %1932 = vperm.xlu0 %1931, %v1716
        %v1933 = vpop.permute.xlu0 %1932
        %1934 = vset.pattern.permute.xlu0 0
        %1935 = vperm.xlu0 %1934, %v1718
        %v1936 = vpop.permute.xlu0 %1935
        %1937 = vset.pattern.permute.xlu0 0
        %1938 = vperm.xlu0 %1937, %v1720
        %v1939 = vpop.permute.xlu0 %1938
        %1940 = vset.pattern.permute.xlu0 0
        %1941 = vperm.xlu0 %1940, %v1722
        %v1942 = vpop.permute.xlu0 %1941
        %1943 = vset.pattern.permute.xlu0 0
        %1944 = vperm.xlu0 %1943, %v1724
        %v1945 = vpop.permute.xlu0 %1944
        %1946 = vset.pattern.permute.xlu0 0
        %1947 = vperm.xlu0 %1946, %v1726
        %v1948 = vpop.permute.xlu0 %1947
        %1949 = vset.pattern.permute.xlu0 0
        %1950 = vperm.xlu0 %1949, %v1728
        %v1951 = vpop.permute.xlu0 %1950
        %1952 = vset.pattern.permute.xlu0 0
        %1953 = vperm.xlu0 %1952, %v1730
        %v1954 = vpop.permute.xlu0 %1953
        %1955 = vset.pattern.permute.xlu0 0
        %1956 = vperm.xlu0 %1955, %v1732
        %v1957 = vpop.permute.xlu0 %1956
        %1958 = vset.pattern.permute.xlu0 0
        %1959 = vperm.xlu0 %1958, %v1734
        %v1960 = vpop.permute.xlu0 %1959
        %1961 = vset.pattern.permute.xlu0 0
        %1962 = vperm.xlu0 %1961, %v1736
        %v1963 = vpop.permute.xlu0 %1962
        %1964 = vset.pattern.permute.xlu0 0
        %1965 = vperm.xlu0 %1964, %v1738
        %v1966 = vpop.permute.xlu0 %1965
        %1967 = vset.pattern.permute.xlu0 0
        %1968 = vperm.xlu0 %1967, %v1740
        %v1969 = vpop.permute.xlu0 %1968
        %1970 = vset.pattern.permute.xlu0 0
        %1971 = vperm.xlu0 %1970, %v1742
        %v1972 = vpop.permute.xlu0 %1971
        %1973 = vset.pattern.permute.xlu0 0
        %1974 = vperm.xlu0 %1973, %v1744
        %v1975 = vpop.permute.xlu0 %1974
        %1976 = vset.pattern.permute.xlu0 0
        %1977 = vperm.xlu0 %1976, %v1746
        %v1978 = vpop.permute.xlu0 %1977
        %1979 = vset.pattern.permute.xlu0 0
        %1980 = vperm.xlu0 %1979, %v1748
        %v1981 = vpop.permute.xlu0 %1980
        %1982 = vset.pattern.permute.xlu0 0
        %1983 = vperm.xlu0 %1982, %v1750
        %v1984 = vpop.permute.xlu0 %1983
        %1985 = vset.pattern.permute.xlu0 0
        %1986 = vperm.xlu0 %1985, %v1752
        %v1987 = vpop.permute.xlu0 %1986
        %1988 = vset.pattern.permute.xlu0 0
        %1989 = vperm.xlu0 %1988, %v1754
        %v1990 = vpop.permute.xlu0 %1989
        %1991 = vset.pattern.permute.xlu0 0
        %1992 = vperm.xlu0 %1991, %v1756
        %v1993 = vpop.permute.xlu0 %1992
        %1994 = vset.pattern.permute.xlu0 0
        %1995 = vperm.xlu0 %1994, %v1758
        %v1996 = vpop.permute.xlu0 %1995
        %1997 = vset.pattern.permute.xlu0 0
        %1998 = vperm.xlu0 %1997, %v1760
        %v1999 = vpop.permute.xlu0 %1998
        %2000 = vset.pattern.permute.xlu0 0
        %2001 = vperm.xlu0 %2000, %v1762
        %v2002 = vpop.permute.xlu0 %2001
        %2003 = vset.pattern.permute.xlu0 0
        %2004 = vperm.xlu0 %2003, %v1764
        %v2005 = vpop.permute.xlu0 %2004
        %2006 = vset.pattern.permute.xlu0 0
        %2007 = vperm.xlu0 %2006, %v1766
        %v2008 = vpop.permute.xlu0 %2007
        %2009 = vset.pattern.permute.xlu0 0
        %2010 = vperm.xlu0 %2009, %v1768
        %v2011 = vpop.permute.xlu0 %2010
        %2012 = vset.pattern.permute.xlu0 0
        %2013 = vperm.xlu0 %2012, %v1770
        %v2014 = vpop.permute.xlu0 %2013
        %2015 = vset.pattern.permute.xlu0 0
        %2016 = vperm.xlu0 %2015, %v1772
        %v2017 = vpop.permute.xlu0 %2016
        %2018 = vset.pattern.permute.xlu0 0
        %2019 = vperm.xlu0 %2018, %v1774
        %v2020 = vpop.permute.xlu0 %2019
        %2021 = vset.pattern.permute.xlu0 0
        %2022 = vperm.xlu0 %2021, %v1776
        %v2023 = vpop.permute.xlu0 %2022
        %2024 = vset.pattern.permute.xlu0 0
        %2025 = vperm.xlu0 %2024, %v1778
        %v2026 = vpop.permute.xlu0 %2025
        %2027 = vset.pattern.permute.xlu0 0
        %2028 = vperm.xlu0 %2027, %v1780
        %v2029 = vpop.permute.xlu0 %2028
        %2030 = vset.pattern.permute.xlu0 0
        %2031 = vperm.xlu0 %2030, %v1782
        %v2032 = vpop.permute.xlu0 %2031
        %2033 = vset.pattern.permute.xlu0 0
        %2034 = vperm.xlu0 %2033, %v1784
        %v2035 = vpop.permute.xlu0 %2034
        %2036 = vset.pattern.permute.xlu0 0
        %2037 = vperm.xlu0 %2036, %v1786
        %v2038 = vpop.permute.xlu0 %2037
        %2039 = vset.pattern.permute.xlu0 0
        %2040 = vperm.xlu0 %2039, %v1788
        %v2041 = vpop.permute.xlu0 %2040
        %2042 = vset.pattern.permute.xlu0 0
        %2043 = vperm.xlu0 %2042, %v1790
        %v2044 = vpop.permute.xlu0 %2043
        %2045 = vset.pattern.permute.xlu0 0
        %2046 = vperm.xlu0 %2045, %v1792
        %v2047 = vpop.permute.xlu0 %2046
        %2048 = vset.pattern.permute.xlu0 0
        %2049 = vperm.xlu0 %2048, %v1794
        %v2050 = vpop.permute.xlu0 %2049
        %v2051 = vlaneseq
        %v2052 = vshrl.u32 %v2051, 7
        %v2053 = vsub.s32 %v922, %v2052
        %v2054 = vrot.slane %v1861, %v2053
        %v2055 = vlaneseq
        %v2056 = vshrl.u32 %v2055, 7
        %v2057 = vsub.s32 %v922, %v2056
        %v2058 = vrot.slane %v1864, %v2057
        %v2059 = vlaneseq
        %v2060 = vshrl.u32 %v2059, 7
        %v2061 = vsub.s32 %v922, %v2060
        %v2062 = vrot.slane %v1867, %v2061
        %v2063 = vlaneseq
        %v2064 = vshrl.u32 %v2063, 7
        %v2065 = vsub.s32 %v922, %v2064
        %v2066 = vrot.slane %v1870, %v2065
        %v2067 = vlaneseq
        %v2068 = vshrl.u32 %v2067, 7
        %v2069 = vsub.s32 %v922, %v2068
        %v2070 = vrot.slane %v1873, %v2069
        %v2071 = vlaneseq
        %v2072 = vshrl.u32 %v2071, 7
        %v2073 = vsub.s32 %v922, %v2072
        %v2074 = vrot.slane %v1876, %v2073
        %v2075 = vlaneseq
        %v2076 = vshrl.u32 %v2075, 7
        %v2077 = vsub.s32 %v922, %v2076
        %v2078 = vrot.slane %v1879, %v2077
        %v2079 = vlaneseq
        %v2080 = vshrl.u32 %v2079, 7
        %v2081 = vsub.s32 %v922, %v2080
        %v2082 = vrot.slane %v1882, %v2081
        %v2083 = vlaneseq
        %v2084 = vshrl.u32 %v2083, 7
        %v2085 = vsub.s32 %v922, %v2084
        %v2086 = vrot.slane %v1885, %v2085
        %v2087 = vlaneseq
        %v2088 = vshrl.u32 %v2087, 7
        %v2089 = vsub.s32 %v922, %v2088
        %v2090 = vrot.slane %v1888, %v2089
        %v2091 = vlaneseq
        %v2092 = vshrl.u32 %v2091, 7
        %v2093 = vsub.s32 %v922, %v2092
        %v2094 = vrot.slane %v1891, %v2093
        %v2095 = vlaneseq
        %v2096 = vshrl.u32 %v2095, 7
        %v2097 = vsub.s32 %v922, %v2096
        %v2098 = vrot.slane %v1894, %v2097
        %v2099 = vlaneseq
        %v2100 = vshrl.u32 %v2099, 7
        %v2101 = vsub.s32 %v922, %v2100
        %v2102 = vrot.slane %v1897, %v2101
        %v2103 = vlaneseq
        %v2104 = vshrl.u32 %v2103, 7
        %v2105 = vsub.s32 %v922, %v2104
        %v2106 = vrot.slane %v1900, %v2105
        %v2107 = vlaneseq
        %v2108 = vshrl.u32 %v2107, 7
        %v2109 = vsub.s32 %v922, %v2108
        %v2110 = vrot.slane %v1903, %v2109
        %v2111 = vlaneseq
        %v2112 = vshrl.u32 %v2111, 7
        %v2113 = vsub.s32 %v922, %v2112
        %v2114 = vrot.slane %v1906, %v2113
        %v2115 = vlaneseq
        %v2116 = vshrl.u32 %v2115, 7
        %v2117 = vsub.s32 %v922, %v2116
        %v2118 = vrot.slane %v1909, %v2117
        %v2119 = vlaneseq
        %v2120 = vshrl.u32 %v2119, 7
        %v2121 = vsub.s32 %v922, %v2120
        %v2122 = vrot.slane %v1912, %v2121
        %v2123 = vlaneseq
        %v2124 = vshrl.u32 %v2123, 7
        %v2125 = vsub.s32 %v922, %v2124
        %v2126 = vrot.slane %v1915, %v2125
        %v2127 = vlaneseq
        %v2128 = vshrl.u32 %v2127, 7
        %v2129 = vsub.s32 %v922, %v2128
        %v2130 = vrot.slane %v1918, %v2129
        %v2131 = vlaneseq
        %v2132 = vshrl.u32 %v2131, 7
        %v2133 = vsub.s32 %v922, %v2132
        %v2134 = vrot.slane %v1921, %v2133
        %v2135 = vlaneseq
        %v2136 = vshrl.u32 %v2135, 7
        %v2137 = vsub.s32 %v922, %v2136
        %v2138 = vrot.slane %v1924, %v2137
        %v2139 = vlaneseq
        %v2140 = vshrl.u32 %v2139, 7
        %v2141 = vsub.s32 %v922, %v2140
        %v2142 = vrot.slane %v1927, %v2141
        %v2143 = vlaneseq
        %v2144 = vshrl.u32 %v2143, 7
        %v2145 = vsub.s32 %v922, %v2144
        %v2146 = vrot.slane %v1930, %v2145
        %v2147 = vlaneseq
        %v2148 = vshrl.u32 %v2147, 7
        %v2149 = vsub.s32 %v922, %v2148
        %v2150 = vrot.slane %v1933, %v2149
        %v2151 = vlaneseq
        %v2152 = vshrl.u32 %v2151, 7
        %v2153 = vsub.s32 %v922, %v2152
        %v2154 = vrot.slane %v1936, %v2153
        %v2155 = vlaneseq
        %v2156 = vshrl.u32 %v2155, 7
        %v2157 = vsub.s32 %v922, %v2156
        %v2158 = vrot.slane %v1939, %v2157
        %v2159 = vlaneseq
        %v2160 = vshrl.u32 %v2159, 7
        %v2161 = vsub.s32 %v922, %v2160
        %v2162 = vrot.slane %v1942, %v2161
        %v2163 = vlaneseq
        %v2164 = vshrl.u32 %v2163, 7
        %v2165 = vsub.s32 %v922, %v2164
        %v2166 = vrot.slane %v1945, %v2165
        %v2167 = vlaneseq
        %v2168 = vshrl.u32 %v2167, 7
        %v2169 = vsub.s32 %v922, %v2168
        %v2170 = vrot.slane %v1948, %v2169
        %v2171 = vlaneseq
        %v2172 = vshrl.u32 %v2171, 7
        %v2173 = vsub.s32 %v922, %v2172
        %v2174 = vrot.slane %v1951, %v2173
        %v2175 = vlaneseq
        %v2176 = vshrl.u32 %v2175, 7
        %v2177 = vsub.s32 %v922, %v2176
        %v2178 = vrot.slane %v1954, %v2177
        %v2179 = vlaneseq
        %v2180 = vshrl.u32 %v2179, 7
        %v2181 = vsub.s32 %v922, %v2180
        %v2182 = vrot.slane %v1957, %v2181
        %v2183 = vlaneseq
        %v2184 = vshrl.u32 %v2183, 7
        %v2185 = vsub.s32 %v922, %v2184
        %v2186 = vrot.slane %v1960, %v2185
        %v2187 = vlaneseq
        %v2188 = vshrl.u32 %v2187, 7
        %v2189 = vsub.s32 %v922, %v2188
        %v2190 = vrot.slane %v1963, %v2189
        %v2191 = vlaneseq
        %v2192 = vshrl.u32 %v2191, 7
        %v2193 = vsub.s32 %v922, %v2192
        %v2194 = vrot.slane %v1966, %v2193
        %v2195 = vlaneseq
        %v2196 = vshrl.u32 %v2195, 7
        %v2197 = vsub.s32 %v922, %v2196
        %v2198 = vrot.slane %v1969, %v2197
        %v2199 = vlaneseq
        %v2200 = vshrl.u32 %v2199, 7
        %v2201 = vsub.s32 %v922, %v2200
        %v2202 = vrot.slane %v1972, %v2201
        %v2203 = vlaneseq
        %v2204 = vshrl.u32 %v2203, 7
        %v2205 = vsub.s32 %v922, %v2204
        %v2206 = vrot.slane %v1975, %v2205
        %v2207 = vlaneseq
        %v2208 = vshrl.u32 %v2207, 7
        %v2209 = vsub.s32 %v922, %v2208
        %v2210 = vrot.slane %v1978, %v2209
        %v2211 = vlaneseq
        %v2212 = vshrl.u32 %v2211, 7
        %v2213 = vsub.s32 %v922, %v2212
        %v2214 = vrot.slane %v1981, %v2213
        %v2215 = vlaneseq
        %v2216 = vshrl.u32 %v2215, 7
        %v2217 = vsub.s32 %v922, %v2216
        %v2218 = vrot.slane %v1984, %v2217
        %v2219 = vlaneseq
        %v2220 = vshrl.u32 %v2219, 7
        %v2221 = vsub.s32 %v922, %v2220
        %v2222 = vrot.slane %v1987, %v2221
        %v2223 = vlaneseq
        %v2224 = vshrl.u32 %v2223, 7
        %v2225 = vsub.s32 %v922, %v2224
        %v2226 = vrot.slane %v1990, %v2225
        %v2227 = vlaneseq
        %v2228 = vshrl.u32 %v2227, 7
        %v2229 = vsub.s32 %v922, %v2228
        %v2230 = vrot.slane %v1993, %v2229
        %v2231 = vlaneseq
        %v2232 = vshrl.u32 %v2231, 7
        %v2233 = vsub.s32 %v922, %v2232
        %v2234 = vrot.slane %v1996, %v2233
        %v2235 = vlaneseq
        %v2236 = vshrl.u32 %v2235, 7
        %v2237 = vsub.s32 %v922, %v2236
        %v2238 = vrot.slane %v1999, %v2237
        %v2239 = vlaneseq
        %v2240 = vshrl.u32 %v2239, 7
        %v2241 = vsub.s32 %v922, %v2240
        %v2242 = vrot.slane %v2002, %v2241
        %v2243 = vlaneseq
        %v2244 = vshrl.u32 %v2243, 7
        %v2245 = vsub.s32 %v922, %v2244
        %v2246 = vrot.slane %v2005, %v2245
        %v2247 = vlaneseq
        %v2248 = vshrl.u32 %v2247, 7
        %v2249 = vsub.s32 %v922, %v2248
        %v2250 = vrot.slane %v2008, %v2249
        %v2251 = vlaneseq
        %v2252 = vshrl.u32 %v2251, 7
        %v2253 = vsub.s32 %v922, %v2252
        %v2254 = vrot.slane %v2011, %v2253
        %v2255 = vlaneseq
        %v2256 = vshrl.u32 %v2255, 7
        %v2257 = vsub.s32 %v922, %v2256
        %v2258 = vrot.slane %v2014, %v2257
        %v2259 = vlaneseq
        %v2260 = vshrl.u32 %v2259, 7
        %v2261 = vsub.s32 %v922, %v2260
        %v2262 = vrot.slane %v2017, %v2261
        %v2263 = vlaneseq
        %v2264 = vshrl.u32 %v2263, 7
        %v2265 = vsub.s32 %v922, %v2264
        %v2266 = vrot.slane %v2020, %v2265
        %v2267 = vlaneseq
        %v2268 = vshrl.u32 %v2267, 7
        %v2269 = vsub.s32 %v922, %v2268
        %v2270 = vrot.slane %v2023, %v2269
        %v2271 = vlaneseq
        %v2272 = vshrl.u32 %v2271, 7
        %v2273 = vsub.s32 %v922, %v2272
        %v2274 = vrot.slane %v2026, %v2273
        %v2275 = vlaneseq
        %v2276 = vshrl.u32 %v2275, 7
        %v2277 = vsub.s32 %v922, %v2276
        %v2278 = vrot.slane %v2029, %v2277
        %v2279 = vlaneseq
        %v2280 = vshrl.u32 %v2279, 7
        %v2281 = vsub.s32 %v922, %v2280
        %v2282 = vrot.slane %v2032, %v2281
        %v2283 = vlaneseq
        %v2284 = vshrl.u32 %v2283, 7
        %v2285 = vsub.s32 %v922, %v2284
        %v2286 = vrot.slane %v2035, %v2285
        %v2287 = vlaneseq
        %v2288 = vshrl.u32 %v2287, 7
        %v2289 = vsub.s32 %v922, %v2288
        %v2290 = vrot.slane %v2038, %v2289
        %v2291 = vlaneseq
        %v2292 = vshrl.u32 %v2291, 7
        %v2293 = vsub.s32 %v922, %v2292
        %v2294 = vrot.slane %v2041, %v2293
        %v2295 = vlaneseq
        %v2296 = vshrl.u32 %v2295, 7
        %v2297 = vsub.s32 %v922, %v2296
        %v2298 = vrot.slane %v2044, %v2297
        %v2299 = vlaneseq
        %v2300 = vshrl.u32 %v2299, 7
        %v2301 = vsub.s32 %v922, %v2300
        %v2302 = vrot.slane %v2047, %v2301
        %v2303 = vlaneseq
        %v2304 = vshrl.u32 %v2303, 7
        %v2305 = vsub.s32 %v922, %v2304
        %v2306 = vrot.slane %v2050, %v2305
        %v2307 = vsel %vm1179, %v2058, %v2054
        %v2308 = vsel %vm1181, %v2062, %v2307
        %v2309 = vsel %vm1183, %v2066, %v2308
        %v2310 = vsel %vm1185, %v2070, %v2309
        %v2311 = vsel %vm1187, %v2074, %v2310
        %v2312 = vsel %vm1189, %v2078, %v2311
        %v2313 = vsel %vm1191, %v2082, %v2312
        %v2314 = vsel %vm1179, %v2090, %v2086
        %v2315 = vsel %vm1181, %v2094, %v2314
        %v2316 = vsel %vm1183, %v2098, %v2315
        %v2317 = vsel %vm1185, %v2102, %v2316
        %v2318 = vsel %vm1187, %v2106, %v2317
        %v2319 = vsel %vm1189, %v2110, %v2318
        %v2320 = vsel %vm1191, %v2114, %v2319
        %v2321 = vsel %vm1179, %v2122, %v2118
        %v2322 = vsel %vm1181, %v2126, %v2321
        %v2323 = vsel %vm1183, %v2130, %v2322
        %v2324 = vsel %vm1185, %v2134, %v2323
        %v2325 = vsel %vm1187, %v2138, %v2324
        %v2326 = vsel %vm1189, %v2142, %v2325
        %v2327 = vsel %vm1191, %v2146, %v2326
        %v2328 = vsel %vm1179, %v2154, %v2150
        %v2329 = vsel %vm1181, %v2158, %v2328
        %v2330 = vsel %vm1183, %v2162, %v2329
        %v2331 = vsel %vm1185, %v2166, %v2330
        %v2332 = vsel %vm1187, %v2170, %v2331
        %v2333 = vsel %vm1189, %v2174, %v2332
        %v2334 = vsel %vm1191, %v2178, %v2333
        %v2335 = vsel %vm1179, %v2186, %v2182
        %v2336 = vsel %vm1181, %v2190, %v2335
        %v2337 = vsel %vm1183, %v2194, %v2336
        %v2338 = vsel %vm1185, %v2198, %v2337
        %v2339 = vsel %vm1187, %v2202, %v2338
        %v2340 = vsel %vm1189, %v2206, %v2339
        %v2341 = vsel %vm1191, %v2210, %v2340
        %v2342 = vsel %vm1179, %v2218, %v2214
        %v2343 = vsel %vm1181, %v2222, %v2342
        %v2344 = vsel %vm1183, %v2226, %v2343
        %v2345 = vsel %vm1185, %v2230, %v2344
        %v2346 = vsel %vm1187, %v2234, %v2345
        %v2347 = vsel %vm1189, %v2238, %v2346
        %v2348 = vsel %vm1191, %v2242, %v2347
        %v2349 = vsel %vm1179, %v2250, %v2246
        %v2350 = vsel %vm1181, %v2254, %v2349
        %v2351 = vsel %vm1183, %v2258, %v2350
        %v2352 = vsel %vm1185, %v2262, %v2351
        %v2353 = vsel %vm1187, %v2266, %v2352
        %v2354 = vsel %vm1189, %v2270, %v2353
        %v2355 = vsel %vm1191, %v2274, %v2354
        %v2356 = vsel %vm1179, %v2282, %v2278
        %v2357 = vsel %vm1181, %v2286, %v2356
        %v2358 = vsel %vm1183, %v2290, %v2357
        %v2359 = vsel %vm1185, %v2294, %v2358
        %v2360 = vsel %vm1187, %v2298, %v2359
        %v2361 = vsel %vm1189, %v2302, %v2360
        %v2362 = vsel %vm1191, %v2306, %v2361
        %v2371 = vsel %vm1250, %v2313, 0.0
        %2372 = vadd.xlane.f32.xlu0 %v2371
        %v2373 = vpop.xlane.xlu0 %2372
        %v2374 = vsel %vm1250, %v2320, 0.0
        %2375 = vadd.xlane.f32.xlu0 %v2374
        %v2376 = vpop.xlane.xlu0 %2375
        %v2377 = vsel %vm1250, %v2327, 0.0
        %2378 = vadd.xlane.f32.xlu0 %v2377
        %v2379 = vpop.xlane.xlu0 %2378
        %v2380 = vsel %vm1250, %v2334, 0.0
        %2381 = vadd.xlane.f32.xlu0 %v2380
        %v2382 = vpop.xlane.xlu0 %2381
        %v2383 = vsel %vm1250, %v2341, 0.0
        %2384 = vadd.xlane.f32.xlu0 %v2383
        %v2385 = vpop.xlane.xlu0 %2384
        %v2386 = vsel %vm1250, %v2348, 0.0
        %2387 = vadd.xlane.f32.xlu0 %v2386
        %v2388 = vpop.xlane.xlu0 %2387
        %v2389 = vsel %vm1250, %v2355, 0.0
        %2390 = vadd.xlane.f32.xlu0 %v2389
        %v2391 = vpop.xlane.xlu0 %2390
        %v2392 = vsel %vm1250, %v2362, 0.0
        %2393 = vadd.xlane.f32.xlu0 %v2392
        %v2394 = vpop.xlane.xlu0 %2393
        %v2395 = vrcp.pop %v2373
        %v2396 = vrcp.pop %v2376
        %v2397 = vrcp.pop %v2379
        %v2398 = vrcp.pop %v2382
        %v2399 = vrcp.pop %v2385
        %v2400 = vrcp.pop %v2388
        %v2401 = vrcp.pop %v2391
        %v2402 = vrcp.pop %v2394
        %v2411 = vlaneseq
        %v2412 = vshrl.u32 %v2411, 7
        %v2413 = vsub.s32 0, %v2412
        %v2414 = vrot.slane %v2395, %v2413
        %v2415 = vlaneseq
        %v2416 = vshrl.u32 %v2415, 7
        %v2417 = vsub.s32 1, %v2416
        %v2418 = vrot.slane %v2395, %v2417
        %v2419 = vlaneseq
        %v2420 = vshrl.u32 %v2419, 7
        %v2421 = vsub.s32 2, %v2420
        %v2422 = vrot.slane %v2395, %v2421
        %v2423 = vlaneseq
        %v2424 = vshrl.u32 %v2423, 7
        %v2425 = vsub.s32 3, %v2424
        %v2426 = vrot.slane %v2395, %v2425
        %v2427 = vlaneseq
        %v2428 = vshrl.u32 %v2427, 7
        %v2429 = vsub.s32 4, %v2428
        %v2430 = vrot.slane %v2395, %v2429
        %v2431 = vlaneseq
        %v2432 = vshrl.u32 %v2431, 7
        %v2433 = vsub.s32 5, %v2432
        %v2434 = vrot.slane %v2395, %v2433
        %v2435 = vlaneseq
        %v2436 = vshrl.u32 %v2435, 7
        %v2437 = vsub.s32 6, %v2436
        %v2438 = vrot.slane %v2395, %v2437
        %v2439 = vlaneseq
        %v2440 = vshrl.u32 %v2439, 7
        %v2441 = vsub.s32 7, %v2440
        %v2442 = vrot.slane %v2395, %v2441
        %v2443 = vlaneseq
        %v2444 = vshrl.u32 %v2443, 7
        %v2445 = vsub.s32 0, %v2444
        %v2446 = vrot.slane %v2396, %v2445
        %v2447 = vlaneseq
        %v2448 = vshrl.u32 %v2447, 7
        %v2449 = vsub.s32 1, %v2448
        %v2450 = vrot.slane %v2396, %v2449
        %v2451 = vlaneseq
        %v2452 = vshrl.u32 %v2451, 7
        %v2453 = vsub.s32 2, %v2452
        %v2454 = vrot.slane %v2396, %v2453
        %v2455 = vlaneseq
        %v2456 = vshrl.u32 %v2455, 7
        %v2457 = vsub.s32 3, %v2456
        %v2458 = vrot.slane %v2396, %v2457
        %v2459 = vlaneseq
        %v2460 = vshrl.u32 %v2459, 7
        %v2461 = vsub.s32 4, %v2460
        %v2462 = vrot.slane %v2396, %v2461
        %v2463 = vlaneseq
        %v2464 = vshrl.u32 %v2463, 7
        %v2465 = vsub.s32 5, %v2464
        %v2466 = vrot.slane %v2396, %v2465
        %v2467 = vlaneseq
        %v2468 = vshrl.u32 %v2467, 7
        %v2469 = vsub.s32 6, %v2468
        %v2470 = vrot.slane %v2396, %v2469
        %v2471 = vlaneseq
        %v2472 = vshrl.u32 %v2471, 7
        %v2473 = vsub.s32 7, %v2472
        %v2474 = vrot.slane %v2396, %v2473
        %v2475 = vlaneseq
        %v2476 = vshrl.u32 %v2475, 7
        %v2477 = vsub.s32 0, %v2476
        %v2478 = vrot.slane %v2397, %v2477
        %v2479 = vlaneseq
        %v2480 = vshrl.u32 %v2479, 7
        %v2481 = vsub.s32 1, %v2480
        %v2482 = vrot.slane %v2397, %v2481
        %v2483 = vlaneseq
        %v2484 = vshrl.u32 %v2483, 7
        %v2485 = vsub.s32 2, %v2484
        %v2486 = vrot.slane %v2397, %v2485
        %v2487 = vlaneseq
        %v2488 = vshrl.u32 %v2487, 7
        %v2489 = vsub.s32 3, %v2488
        %v2490 = vrot.slane %v2397, %v2489
        %v2491 = vlaneseq
        %v2492 = vshrl.u32 %v2491, 7
        %v2493 = vsub.s32 4, %v2492
        %v2494 = vrot.slane %v2397, %v2493
        %v2495 = vlaneseq
        %v2496 = vshrl.u32 %v2495, 7
        %v2497 = vsub.s32 5, %v2496
        %v2498 = vrot.slane %v2397, %v2497
        %v2499 = vlaneseq
        %v2500 = vshrl.u32 %v2499, 7
        %v2501 = vsub.s32 6, %v2500
        %v2502 = vrot.slane %v2397, %v2501
        %v2503 = vlaneseq
        %v2504 = vshrl.u32 %v2503, 7
        %v2505 = vsub.s32 7, %v2504
        %v2506 = vrot.slane %v2397, %v2505
        %v2507 = vlaneseq
        %v2508 = vshrl.u32 %v2507, 7
        %v2509 = vsub.s32 0, %v2508
        %v2510 = vrot.slane %v2398, %v2509
        %v2511 = vlaneseq
        %v2512 = vshrl.u32 %v2511, 7
        %v2513 = vsub.s32 1, %v2512
        %v2514 = vrot.slane %v2398, %v2513
        %v2515 = vlaneseq
        %v2516 = vshrl.u32 %v2515, 7
        %v2517 = vsub.s32 2, %v2516
        %v2518 = vrot.slane %v2398, %v2517
        %v2519 = vlaneseq
        %v2520 = vshrl.u32 %v2519, 7
        %v2521 = vsub.s32 3, %v2520
        %v2522 = vrot.slane %v2398, %v2521
        %v2523 = vlaneseq
        %v2524 = vshrl.u32 %v2523, 7
        %v2525 = vsub.s32 4, %v2524
        %v2526 = vrot.slane %v2398, %v2525
        %v2527 = vlaneseq
        %v2528 = vshrl.u32 %v2527, 7
        %v2529 = vsub.s32 5, %v2528
        %v2530 = vrot.slane %v2398, %v2529
        %v2531 = vlaneseq
        %v2532 = vshrl.u32 %v2531, 7
        %v2533 = vsub.s32 6, %v2532
        %v2534 = vrot.slane %v2398, %v2533
        %v2535 = vlaneseq
        %v2536 = vshrl.u32 %v2535, 7
        %v2537 = vsub.s32 7, %v2536
        %v2538 = vrot.slane %v2398, %v2537
        %v2539 = vlaneseq
        %v2540 = vshrl.u32 %v2539, 7
        %v2541 = vsub.s32 0, %v2540
        %v2542 = vrot.slane %v2399, %v2541
        %v2543 = vlaneseq
        %v2544 = vshrl.u32 %v2543, 7
        %v2545 = vsub.s32 1, %v2544
        %v2546 = vrot.slane %v2399, %v2545
        %v2547 = vlaneseq
        %v2548 = vshrl.u32 %v2547, 7
        %v2549 = vsub.s32 2, %v2548
        %v2550 = vrot.slane %v2399, %v2549
        %v2551 = vlaneseq
        %v2552 = vshrl.u32 %v2551, 7
        %v2553 = vsub.s32 3, %v2552
        %v2554 = vrot.slane %v2399, %v2553
        %v2555 = vlaneseq
        %v2556 = vshrl.u32 %v2555, 7
        %v2557 = vsub.s32 4, %v2556
        %v2558 = vrot.slane %v2399, %v2557
        %v2559 = vlaneseq
        %v2560 = vshrl.u32 %v2559, 7
        %v2561 = vsub.s32 5, %v2560
        %v2562 = vrot.slane %v2399, %v2561
        %v2563 = vlaneseq
        %v2564 = vshrl.u32 %v2563, 7
        %v2565 = vsub.s32 6, %v2564
        %v2566 = vrot.slane %v2399, %v2565
        %v2567 = vlaneseq
        %v2568 = vshrl.u32 %v2567, 7
        %v2569 = vsub.s32 7, %v2568
        %v2570 = vrot.slane %v2399, %v2569
        %v2571 = vlaneseq
        %v2572 = vshrl.u32 %v2571, 7
        %v2573 = vsub.s32 0, %v2572
        %v2574 = vrot.slane %v2400, %v2573
        %v2575 = vlaneseq
        %v2576 = vshrl.u32 %v2575, 7
        %v2577 = vsub.s32 1, %v2576
        %v2578 = vrot.slane %v2400, %v2577
        %v2579 = vlaneseq
        %v2580 = vshrl.u32 %v2579, 7
        %v2581 = vsub.s32 2, %v2580
        %v2582 = vrot.slane %v2400, %v2581
        %v2583 = vlaneseq
        %v2584 = vshrl.u32 %v2583, 7
        %v2585 = vsub.s32 3, %v2584
        %v2586 = vrot.slane %v2400, %v2585
        %v2587 = vlaneseq
        %v2588 = vshrl.u32 %v2587, 7
        %v2589 = vsub.s32 4, %v2588
        %v2590 = vrot.slane %v2400, %v2589
        %v2591 = vlaneseq
        %v2592 = vshrl.u32 %v2591, 7
        %v2593 = vsub.s32 5, %v2592
        %v2594 = vrot.slane %v2400, %v2593
        %v2595 = vlaneseq
        %v2596 = vshrl.u32 %v2595, 7
        %v2597 = vsub.s32 6, %v2596
        %v2598 = vrot.slane %v2400, %v2597
        %v2599 = vlaneseq
        %v2600 = vshrl.u32 %v2599, 7
        %v2601 = vsub.s32 7, %v2600
        %v2602 = vrot.slane %v2400, %v2601
        %v2603 = vlaneseq
        %v2604 = vshrl.u32 %v2603, 7
        %v2605 = vsub.s32 0, %v2604
        %v2606 = vrot.slane %v2401, %v2605
        %v2607 = vlaneseq
        %v2608 = vshrl.u32 %v2607, 7
        %v2609 = vsub.s32 1, %v2608
        %v2610 = vrot.slane %v2401, %v2609
        %v2611 = vlaneseq
        %v2612 = vshrl.u32 %v2611, 7
        %v2613 = vsub.s32 2, %v2612
        %v2614 = vrot.slane %v2401, %v2613
        %v2615 = vlaneseq
        %v2616 = vshrl.u32 %v2615, 7
        %v2617 = vsub.s32 3, %v2616
        %v2618 = vrot.slane %v2401, %v2617
        %v2619 = vlaneseq
        %v2620 = vshrl.u32 %v2619, 7
        %v2621 = vsub.s32 4, %v2620
        %v2622 = vrot.slane %v2401, %v2621
        %v2623 = vlaneseq
        %v2624 = vshrl.u32 %v2623, 7
        %v2625 = vsub.s32 5, %v2624
        %v2626 = vrot.slane %v2401, %v2625
        %v2627 = vlaneseq
        %v2628 = vshrl.u32 %v2627, 7
        %v2629 = vsub.s32 6, %v2628
        %v2630 = vrot.slane %v2401, %v2629
        %v2631 = vlaneseq
        %v2632 = vshrl.u32 %v2631, 7
        %v2633 = vsub.s32 7, %v2632
        %v2634 = vrot.slane %v2401, %v2633
        %v2635 = vlaneseq
        %v2636 = vshrl.u32 %v2635, 7
        %v2637 = vsub.s32 0, %v2636
        %v2638 = vrot.slane %v2402, %v2637
        %v2639 = vlaneseq
        %v2640 = vshrl.u32 %v2639, 7
        %v2641 = vsub.s32 1, %v2640
        %v2642 = vrot.slane %v2402, %v2641
        %v2643 = vlaneseq
        %v2644 = vshrl.u32 %v2643, 7
        %v2645 = vsub.s32 2, %v2644
        %v2646 = vrot.slane %v2402, %v2645
        %v2647 = vlaneseq
        %v2648 = vshrl.u32 %v2647, 7
        %v2649 = vsub.s32 3, %v2648
        %v2650 = vrot.slane %v2402, %v2649
        %v2651 = vlaneseq
        %v2652 = vshrl.u32 %v2651, 7
        %v2653 = vsub.s32 4, %v2652
        %v2654 = vrot.slane %v2402, %v2653
        %v2655 = vlaneseq
        %v2656 = vshrl.u32 %v2655, 7
        %v2657 = vsub.s32 5, %v2656
        %v2658 = vrot.slane %v2402, %v2657
        %v2659 = vlaneseq
        %v2660 = vshrl.u32 %v2659, 7
        %v2661 = vsub.s32 6, %v2660
        %v2662 = vrot.slane %v2402, %v2661
        %v2663 = vlaneseq
        %v2664 = vshrl.u32 %v2663, 7
        %v2665 = vsub.s32 7, %v2664
        %v2666 = vrot.slane %v2402, %v2665
        %v2731 = vmul.f32 %v1668, %v2414
        %v2732 = vmul.f32 %v1670, %v2418
        %v2733 = vmul.f32 %v1672, %v2422
        %v2734 = vmul.f32 %v1674, %v2426
        %v2735 = vmul.f32 %v1676, %v2430
        %v2736 = vmul.f32 %v1678, %v2434
        %v2737 = vmul.f32 %v1680, %v2438
        %v2738 = vmul.f32 %v1682, %v2442
        %v2739 = vmul.f32 %v1684, %v2446
        %v2740 = vmul.f32 %v1686, %v2450
        %v2741 = vmul.f32 %v1688, %v2454
        %v2742 = vmul.f32 %v1690, %v2458
        %v2743 = vmul.f32 %v1692, %v2462
        %v2744 = vmul.f32 %v1694, %v2466
        %v2745 = vmul.f32 %v1696, %v2470
        %v2746 = vmul.f32 %v1698, %v2474
        %v2747 = vmul.f32 %v1700, %v2478
        %v2748 = vmul.f32 %v1702, %v2482
        %v2749 = vmul.f32 %v1704, %v2486
        %v2750 = vmul.f32 %v1706, %v2490
        %v2751 = vmul.f32 %v1708, %v2494
        %v2752 = vmul.f32 %v1710, %v2498
        %v2753 = vmul.f32 %v1712, %v2502
        %v2754 = vmul.f32 %v1714, %v2506
        %v2755 = vmul.f32 %v1716, %v2510
        %v2756 = vmul.f32 %v1718, %v2514
        %v2757 = vmul.f32 %v1720, %v2518
        %v2758 = vmul.f32 %v1722, %v2522
        %v2759 = vmul.f32 %v1724, %v2526
        %v2760 = vmul.f32 %v1726, %v2530
        %v2761 = vmul.f32 %v1728, %v2534
        %v2762 = vmul.f32 %v1730, %v2538
        %v2763 = vmul.f32 %v1732, %v2542
        %v2764 = vmul.f32 %v1734, %v2546
        %v2765 = vmul.f32 %v1736, %v2550
        %v2766 = vmul.f32 %v1738, %v2554
        %v2767 = vmul.f32 %v1740, %v2558
        %v2768 = vmul.f32 %v1742, %v2562
        %v2769 = vmul.f32 %v1744, %v2566
        %v2770 = vmul.f32 %v1746, %v2570
        %v2771 = vmul.f32 %v1748, %v2574
        %v2772 = vmul.f32 %v1750, %v2578
        %v2773 = vmul.f32 %v1752, %v2582
        %v2774 = vmul.f32 %v1754, %v2586
        %v2775 = vmul.f32 %v1756, %v2590
        %v2776 = vmul.f32 %v1758, %v2594
        %v2777 = vmul.f32 %v1760, %v2598
        %v2778 = vmul.f32 %v1762, %v2602
        %v2779 = vmul.f32 %v1764, %v2606
        %v2780 = vmul.f32 %v1766, %v2610
        %v2781 = vmul.f32 %v1768, %v2614
        %v2782 = vmul.f32 %v1770, %v2618
        %v2783 = vmul.f32 %v1772, %v2622
        %v2784 = vmul.f32 %v1774, %v2626
        %v2785 = vmul.f32 %v1776, %v2630
        %v2786 = vmul.f32 %v1778, %v2634
        %v2787 = vmul.f32 %v1780, %v2638
        %v2788 = vmul.f32 %v1782, %v2642
        %v2789 = vmul.f32 %v1784, %v2646
        %v2790 = vmul.f32 %v1786, %v2650
        %v2791 = vmul.f32 %v1788, %v2654
        %v2792 = vmul.f32 %v1790, %v2658
        %v2793 = vmul.f32 %v1792, %v2662
        %v2794 = vmul.f32 %v1794, %v2666
        %2796 = vset.pattern.permute.xlu0 0
        %2797 = vperm.xlu0 %2796, %v2731
        %v2798 = vpop.permute.xlu0 %2797
        %2801 = vset.pattern.permute.xlu0 0
        %2802 = vperm.xlu0 %2801, %v2732
        %v2803 = vpop.permute.xlu0 %2802
        %2806 = vset.pattern.permute.xlu0 0
        %2807 = vperm.xlu0 %2806, %v2733
        %v2808 = vpop.permute.xlu0 %2807
        %2811 = vset.pattern.permute.xlu0 0
        %2812 = vperm.xlu0 %2811, %v2734
        %v2813 = vpop.permute.xlu0 %2812
        %2816 = vset.pattern.permute.xlu0 0
        %2817 = vperm.xlu0 %2816, %v2735
        %v2818 = vpop.permute.xlu0 %2817
        %2821 = vset.pattern.permute.xlu0 0
        %2822 = vperm.xlu0 %2821, %v2736
        %v2823 = vpop.permute.xlu0 %2822
        %2826 = vset.pattern.permute.xlu0 0
        %2827 = vperm.xlu0 %2826, %v2737
        %v2828 = vpop.permute.xlu0 %2827
        %2831 = vset.pattern.permute.xlu0 0
        %2832 = vperm.xlu0 %2831, %v2738
        %v2833 = vpop.permute.xlu0 %2832
        %2836 = vset.pattern.permute.xlu0 0
        %2837 = vperm.xlu0 %2836, %v2739
        %v2838 = vpop.permute.xlu0 %2837
        %2841 = vset.pattern.permute.xlu0 0
        %2842 = vperm.xlu0 %2841, %v2740
        %v2843 = vpop.permute.xlu0 %2842
        %2846 = vset.pattern.permute.xlu0 0
        %2847 = vperm.xlu0 %2846, %v2741
        %v2848 = vpop.permute.xlu0 %2847
        %2851 = vset.pattern.permute.xlu0 0
        %2852 = vperm.xlu0 %2851, %v2742
        %v2853 = vpop.permute.xlu0 %2852
        %2856 = vset.pattern.permute.xlu0 0
        %2857 = vperm.xlu0 %2856, %v2743
        %v2858 = vpop.permute.xlu0 %2857
        %2861 = vset.pattern.permute.xlu0 0
        %2862 = vperm.xlu0 %2861, %v2744
        %v2863 = vpop.permute.xlu0 %2862
        %2866 = vset.pattern.permute.xlu0 0
        %2867 = vperm.xlu0 %2866, %v2745
        %v2868 = vpop.permute.xlu0 %2867
        %2871 = vset.pattern.permute.xlu0 0
        %2872 = vperm.xlu0 %2871, %v2746
        %v2873 = vpop.permute.xlu0 %2872
        %2876 = vset.pattern.permute.xlu0 0
        %2877 = vperm.xlu0 %2876, %v2747
        %v2878 = vpop.permute.xlu0 %2877
        %2881 = vset.pattern.permute.xlu0 0
        %2882 = vperm.xlu0 %2881, %v2748
        %v2883 = vpop.permute.xlu0 %2882
        %2886 = vset.pattern.permute.xlu0 0
        %2887 = vperm.xlu0 %2886, %v2749
        %v2888 = vpop.permute.xlu0 %2887
        %2891 = vset.pattern.permute.xlu0 0
        %2892 = vperm.xlu0 %2891, %v2750
        %v2893 = vpop.permute.xlu0 %2892
        %2896 = vset.pattern.permute.xlu0 0
        %2897 = vperm.xlu0 %2896, %v2751
        %v2898 = vpop.permute.xlu0 %2897
        %2901 = vset.pattern.permute.xlu0 0
        %2902 = vperm.xlu0 %2901, %v2752
        %v2903 = vpop.permute.xlu0 %2902
        %2906 = vset.pattern.permute.xlu0 0
        %2907 = vperm.xlu0 %2906, %v2753
        %v2908 = vpop.permute.xlu0 %2907
        %2911 = vset.pattern.permute.xlu0 0
        %2912 = vperm.xlu0 %2911, %v2754
        %v2913 = vpop.permute.xlu0 %2912
        %2916 = vset.pattern.permute.xlu0 0
        %2917 = vperm.xlu0 %2916, %v2755
        %v2918 = vpop.permute.xlu0 %2917
        %2921 = vset.pattern.permute.xlu0 0
        %2922 = vperm.xlu0 %2921, %v2756
        %v2923 = vpop.permute.xlu0 %2922
        %2926 = vset.pattern.permute.xlu0 0
        %2927 = vperm.xlu0 %2926, %v2757
        %v2928 = vpop.permute.xlu0 %2927
        %2931 = vset.pattern.permute.xlu0 0
        %2932 = vperm.xlu0 %2931, %v2758
        %v2933 = vpop.permute.xlu0 %2932
        %2936 = vset.pattern.permute.xlu0 0
        %2937 = vperm.xlu0 %2936, %v2759
        %v2938 = vpop.permute.xlu0 %2937
        %2941 = vset.pattern.permute.xlu0 0
        %2942 = vperm.xlu0 %2941, %v2760
        %v2943 = vpop.permute.xlu0 %2942
        %2946 = vset.pattern.permute.xlu0 0
        %2947 = vperm.xlu0 %2946, %v2761
        %v2948 = vpop.permute.xlu0 %2947
        %2951 = vset.pattern.permute.xlu0 0
        %2952 = vperm.xlu0 %2951, %v2762
        %v2953 = vpop.permute.xlu0 %2952
        %2956 = vset.pattern.permute.xlu0 0
        %2957 = vperm.xlu0 %2956, %v2763
        %v2958 = vpop.permute.xlu0 %2957
        %2961 = vset.pattern.permute.xlu0 0
        %2962 = vperm.xlu0 %2961, %v2764
        %v2963 = vpop.permute.xlu0 %2962
        %2966 = vset.pattern.permute.xlu0 0
        %2967 = vperm.xlu0 %2966, %v2765
        %v2968 = vpop.permute.xlu0 %2967
        %2971 = vset.pattern.permute.xlu0 0
        %2972 = vperm.xlu0 %2971, %v2766
        %v2973 = vpop.permute.xlu0 %2972
        %2976 = vset.pattern.permute.xlu0 0
        %2977 = vperm.xlu0 %2976, %v2767
        %v2978 = vpop.permute.xlu0 %2977
        %2981 = vset.pattern.permute.xlu0 0
        %2982 = vperm.xlu0 %2981, %v2768
        %v2983 = vpop.permute.xlu0 %2982
        %2986 = vset.pattern.permute.xlu0 0
        %2987 = vperm.xlu0 %2986, %v2769
        %v2988 = vpop.permute.xlu0 %2987
        %2991 = vset.pattern.permute.xlu0 0
        %2992 = vperm.xlu0 %2991, %v2770
        %v2993 = vpop.permute.xlu0 %2992
        %2996 = vset.pattern.permute.xlu0 0
        %2997 = vperm.xlu0 %2996, %v2771
        %v2998 = vpop.permute.xlu0 %2997
        %3001 = vset.pattern.permute.xlu0 0
        %3002 = vperm.xlu0 %3001, %v2772
        %v3003 = vpop.permute.xlu0 %3002
        %3006 = vset.pattern.permute.xlu0 0
        %3007 = vperm.xlu0 %3006, %v2773
        %v3008 = vpop.permute.xlu0 %3007
        %3011 = vset.pattern.permute.xlu0 0
        %3012 = vperm.xlu0 %3011, %v2774
        %v3013 = vpop.permute.xlu0 %3012
        %3016 = vset.pattern.permute.xlu0 0
        %3017 = vperm.xlu0 %3016, %v2775
        %v3018 = vpop.permute.xlu0 %3017
        %3021 = vset.pattern.permute.xlu0 0
        %3022 = vperm.xlu0 %3021, %v2776
        %v3023 = vpop.permute.xlu0 %3022
        %3026 = vset.pattern.permute.xlu0 0
        %3027 = vperm.xlu0 %3026, %v2777
        %v3028 = vpop.permute.xlu0 %3027
        %3031 = vset.pattern.permute.xlu0 0
        %3032 = vperm.xlu0 %3031, %v2778
        %v3033 = vpop.permute.xlu0 %3032
        %3036 = vset.pattern.permute.xlu0 0
        %3037 = vperm.xlu0 %3036, %v2779
        %v3038 = vpop.permute.xlu0 %3037
        %3041 = vset.pattern.permute.xlu0 0
        %3042 = vperm.xlu0 %3041, %v2780
        %v3043 = vpop.permute.xlu0 %3042
        %3046 = vset.pattern.permute.xlu0 0
        %3047 = vperm.xlu0 %3046, %v2781
        %v3048 = vpop.permute.xlu0 %3047
        %3051 = vset.pattern.permute.xlu0 0
        %3052 = vperm.xlu0 %3051, %v2782
        %v3053 = vpop.permute.xlu0 %3052
        %3056 = vset.pattern.permute.xlu0 0
        %3057 = vperm.xlu0 %3056, %v2783
        %v3058 = vpop.permute.xlu0 %3057
        %3061 = vset.pattern.permute.xlu0 0
        %3062 = vperm.xlu0 %3061, %v2784
        %v3063 = vpop.permute.xlu0 %3062
        %3066 = vset.pattern.permute.xlu0 0
        %3067 = vperm.xlu0 %3066, %v2785
        %v3068 = vpop.permute.xlu0 %3067
        %3071 = vset.pattern.permute.xlu0 0
        %3072 = vperm.xlu0 %3071, %v2786
        %v3073 = vpop.permute.xlu0 %3072
        %3076 = vset.pattern.permute.xlu0 0
        %3077 = vperm.xlu0 %3076, %v2787
        %v3078 = vpop.permute.xlu0 %3077
        %3081 = vset.pattern.permute.xlu0 0
        %3082 = vperm.xlu0 %3081, %v2788
        %v3083 = vpop.permute.xlu0 %3082
        %3086 = vset.pattern.permute.xlu0 0
        %3087 = vperm.xlu0 %3086, %v2789
        %v3088 = vpop.permute.xlu0 %3087
        %3091 = vset.pattern.permute.xlu0 0
        %3092 = vperm.xlu0 %3091, %v2790
        %v3093 = vpop.permute.xlu0 %3092
        %3096 = vset.pattern.permute.xlu0 0
        %3097 = vperm.xlu0 %3096, %v2791
        %v3098 = vpop.permute.xlu0 %3097
        %3101 = vset.pattern.permute.xlu0 0
        %3102 = vperm.xlu0 %3101, %v2792
        %v3103 = vpop.permute.xlu0 %3102
        %3106 = vset.pattern.permute.xlu0 0
        %3107 = vperm.xlu0 %3106, %v2793
        %v3108 = vpop.permute.xlu0 %3107
        %3111 = vset.pattern.permute.xlu0 0
        %3112 = vperm.xlu0 %3111, %v2794
        %v3113 = vpop.permute.xlu0 %3112
        %v3115 = vmul.f32 %v2798, %v416
        %v3116 = vmul.f32 %v2803, %v417
        %v3117 = vmul.f32 %v2808, %v418
        %v3118 = vmul.f32 %v2813, %v419
        %v3119 = vmul.f32 %v2818, %v420
        %v3120 = vmul.f32 %v2823, %v421
        %v3121 = vmul.f32 %v2828, %v422
        %v3122 = vmul.f32 %v2833, %v423
        %v3123 = vmul.f32 %v2838, %v424
        %v3124 = vmul.f32 %v2843, %v425
        %v3125 = vmul.f32 %v2848, %v426
        %v3126 = vmul.f32 %v2853, %v427
        %v3127 = vmul.f32 %v2858, %v428
        %v3128 = vmul.f32 %v2863, %v429
        %v3129 = vmul.f32 %v2868, %v430
        %v3130 = vmul.f32 %v2873, %v431
        %v3131 = vmul.f32 %v2878, %v432
        %v3132 = vmul.f32 %v2883, %v433
        %v3133 = vmul.f32 %v2888, %v434
        %v3134 = vmul.f32 %v2893, %v435
        %v3135 = vmul.f32 %v2898, %v436
        %v3136 = vmul.f32 %v2903, %v437
        %v3137 = vmul.f32 %v2908, %v438
        %v3138 = vmul.f32 %v2913, %v439
        %v3139 = vmul.f32 %v2918, %v440
        %v3140 = vmul.f32 %v2923, %v441
        %v3141 = vmul.f32 %v2928, %v442
        %v3142 = vmul.f32 %v2933, %v443
        %v3143 = vmul.f32 %v2938, %v444
        %v3144 = vmul.f32 %v2943, %v445
        %v3145 = vmul.f32 %v2948, %v446
        %v3146 = vmul.f32 %v2953, %v447
        %v3147 = vmul.f32 %v2958, %v448
        %v3148 = vmul.f32 %v2963, %v449
        %v3149 = vmul.f32 %v2968, %v450
        %v3150 = vmul.f32 %v2973, %v451
        %v3151 = vmul.f32 %v2978, %v452
        %v3152 = vmul.f32 %v2983, %v453
        %v3153 = vmul.f32 %v2988, %v454
        %v3154 = vmul.f32 %v2993, %v455
        %v3155 = vmul.f32 %v2998, %v456
        %v3156 = vmul.f32 %v3003, %v457
        %v3157 = vmul.f32 %v3008, %v458
        %v3158 = vmul.f32 %v3013, %v459
        %v3159 = vmul.f32 %v3018, %v460
        %v3160 = vmul.f32 %v3023, %v461
        %v3161 = vmul.f32 %v3028, %v462
        %v3162 = vmul.f32 %v3033, %v463
        %v3163 = vmul.f32 %v3038, %v464
        %v3164 = vmul.f32 %v3043, %v465
        %v3165 = vmul.f32 %v3048, %v466
        %v3166 = vmul.f32 %v3053, %v467
        %v3167 = vmul.f32 %v3058, %v468
        %v3168 = vmul.f32 %v3063, %v469
        %v3169 = vmul.f32 %v3068, %v470
        %v3170 = vmul.f32 %v3073, %v471
        %v3171 = vmul.f32 %v3078, %v472
        %v3172 = vmul.f32 %v3083, %v473
        %v3173 = vmul.f32 %v3088, %v474
        %v3174 = vmul.f32 %v3093, %v475
        %v3175 = vmul.f32 %v3098, %v476
        %v3176 = vmul.f32 %v3103, %v477
        %v3177 = vmul.f32 %v3108, %v478
        %v3178 = vmul.f32 %v3113, %v479
        %v3179 = vsel %vm664, %v3115, 0.0
        %v3180 = vrot.slane %v3179, 4
        %v3181 = vadd.f32 %v3179, %v3180
        %v3182 = vrot.slane %v3181, 2
        %v3183 = vadd.f32 %v3181, %v3182
        %v3184 = vrot.slane %v3183, 1
        %v3185 = vadd.f32 %v3183, %v3184
        %v3186 = vsel %vm664, %v3116, 0.0
        %v3187 = vrot.slane %v3186, 4
        %v3188 = vadd.f32 %v3186, %v3187
        %v3189 = vrot.slane %v3188, 2
        %v3190 = vadd.f32 %v3188, %v3189
        %v3191 = vrot.slane %v3190, 1
        %v3192 = vadd.f32 %v3190, %v3191
        %v3193 = vsel %vm664, %v3117, 0.0
        %v3194 = vrot.slane %v3193, 4
        %v3195 = vadd.f32 %v3193, %v3194
        %v3196 = vrot.slane %v3195, 2
        %v3197 = vadd.f32 %v3195, %v3196
        %v3198 = vrot.slane %v3197, 1
        %v3199 = vadd.f32 %v3197, %v3198
        %v3200 = vsel %vm664, %v3118, 0.0
        %v3201 = vrot.slane %v3200, 4
        %v3202 = vadd.f32 %v3200, %v3201
        %v3203 = vrot.slane %v3202, 2
        %v3204 = vadd.f32 %v3202, %v3203
        %v3205 = vrot.slane %v3204, 1
        %v3206 = vadd.f32 %v3204, %v3205
        %v3207 = vsel %vm664, %v3119, 0.0
        %v3208 = vrot.slane %v3207, 4
        %v3209 = vadd.f32 %v3207, %v3208
        %v3210 = vrot.slane %v3209, 2
        %v3211 = vadd.f32 %v3209, %v3210
        %v3212 = vrot.slane %v3211, 1
        %v3213 = vadd.f32 %v3211, %v3212
        %v3214 = vsel %vm664, %v3120, 0.0
        %v3215 = vrot.slane %v3214, 4
        %v3216 = vadd.f32 %v3214, %v3215
        %v3217 = vrot.slane %v3216, 2
        %v3218 = vadd.f32 %v3216, %v3217
        %v3219 = vrot.slane %v3218, 1
        %v3220 = vadd.f32 %v3218, %v3219
        %v3221 = vsel %vm664, %v3121, 0.0
        %v3222 = vrot.slane %v3221, 4
        %v3223 = vadd.f32 %v3221, %v3222
        %v3224 = vrot.slane %v3223, 2
        %v3225 = vadd.f32 %v3223, %v3224
        %v3226 = vrot.slane %v3225, 1
        %v3227 = vadd.f32 %v3225, %v3226
        %v3228 = vsel %vm664, %v3122, 0.0
        %v3229 = vrot.slane %v3228, 4
        %v3230 = vadd.f32 %v3228, %v3229
        %v3231 = vrot.slane %v3230, 2
        %v3232 = vadd.f32 %v3230, %v3231
        %v3233 = vrot.slane %v3232, 1
        %v3234 = vadd.f32 %v3232, %v3233
        %v3235 = vsel %vm664, %v3123, 0.0
        %v3236 = vrot.slane %v3235, 4
        %v3237 = vadd.f32 %v3235, %v3236
        %v3238 = vrot.slane %v3237, 2
        %v3239 = vadd.f32 %v3237, %v3238
        %v3240 = vrot.slane %v3239, 1
        %v3241 = vadd.f32 %v3239, %v3240
        %v3242 = vsel %vm664, %v3124, 0.0
        %v3243 = vrot.slane %v3242, 4
        %v3244 = vadd.f32 %v3242, %v3243
        %v3245 = vrot.slane %v3244, 2
        %v3246 = vadd.f32 %v3244, %v3245
        %v3247 = vrot.slane %v3246, 1
        %v3248 = vadd.f32 %v3246, %v3247
        %v3249 = vsel %vm664, %v3125, 0.0
        %v3250 = vrot.slane %v3249, 4
        %v3251 = vadd.f32 %v3249, %v3250
        %v3252 = vrot.slane %v3251, 2
        %v3253 = vadd.f32 %v3251, %v3252
        %v3254 = vrot.slane %v3253, 1
        %v3255 = vadd.f32 %v3253, %v3254
        %v3256 = vsel %vm664, %v3126, 0.0
        %v3257 = vrot.slane %v3256, 4
        %v3258 = vadd.f32 %v3256, %v3257
        %v3259 = vrot.slane %v3258, 2
        %v3260 = vadd.f32 %v3258, %v3259
        %v3261 = vrot.slane %v3260, 1
        %v3262 = vadd.f32 %v3260, %v3261
        %v3263 = vsel %vm664, %v3127, 0.0
        %v3264 = vrot.slane %v3263, 4
        %v3265 = vadd.f32 %v3263, %v3264
        %v3266 = vrot.slane %v3265, 2
        %v3267 = vadd.f32 %v3265, %v3266
        %v3268 = vrot.slane %v3267, 1
        %v3269 = vadd.f32 %v3267, %v3268
        %v3270 = vsel %vm664, %v3128, 0.0
        %v3271 = vrot.slane %v3270, 4
        %v3272 = vadd.f32 %v3270, %v3271
        %v3273 = vrot.slane %v3272, 2
        %v3274 = vadd.f32 %v3272, %v3273
        %v3275 = vrot.slane %v3274, 1
        %v3276 = vadd.f32 %v3274, %v3275
        %v3277 = vsel %vm664, %v3129, 0.0
        %v3278 = vrot.slane %v3277, 4
        %v3279 = vadd.f32 %v3277, %v3278
        %v3280 = vrot.slane %v3279, 2
        %v3281 = vadd.f32 %v3279, %v3280
        %v3282 = vrot.slane %v3281, 1
        %v3283 = vadd.f32 %v3281, %v3282
        %v3284 = vsel %vm664, %v3130, 0.0
        %v3285 = vrot.slane %v3284, 4
        %v3286 = vadd.f32 %v3284, %v3285
        %v3287 = vrot.slane %v3286, 2
        %v3288 = vadd.f32 %v3286, %v3287
        %v3289 = vrot.slane %v3288, 1
        %v3290 = vadd.f32 %v3288, %v3289
        %v3291 = vsel %vm664, %v3131, 0.0
        %v3292 = vrot.slane %v3291, 4
        %v3293 = vadd.f32 %v3291, %v3292
        %v3294 = vrot.slane %v3293, 2
        %v3295 = vadd.f32 %v3293, %v3294
        %v3296 = vrot.slane %v3295, 1
        %v3297 = vadd.f32 %v3295, %v3296
        %v3298 = vsel %vm664, %v3132, 0.0
        %v3299 = vrot.slane %v3298, 4
        %v3300 = vadd.f32 %v3298, %v3299
        %v3301 = vrot.slane %v3300, 2
        %v3302 = vadd.f32 %v3300, %v3301
        %v3303 = vrot.slane %v3302, 1
        %v3304 = vadd.f32 %v3302, %v3303
        %v3305 = vsel %vm664, %v3133, 0.0
        %v3306 = vrot.slane %v3305, 4
        %v3307 = vadd.f32 %v3305, %v3306
        %v3308 = vrot.slane %v3307, 2
        %v3309 = vadd.f32 %v3307, %v3308
        %v3310 = vrot.slane %v3309, 1
        %v3311 = vadd.f32 %v3309, %v3310
        %v3312 = vsel %vm664, %v3134, 0.0
        %v3313 = vrot.slane %v3312, 4
        %v3314 = vadd.f32 %v3312, %v3313
        %v3315 = vrot.slane %v3314, 2
        %v3316 = vadd.f32 %v3314, %v3315
        %v3317 = vrot.slane %v3316, 1
        %v3318 = vadd.f32 %v3316, %v3317
        %v3319 = vsel %vm664, %v3135, 0.0
        %v3320 = vrot.slane %v3319, 4
        %v3321 = vadd.f32 %v3319, %v3320
        %v3322 = vrot.slane %v3321, 2
        %v3323 = vadd.f32 %v3321, %v3322
        %v3324 = vrot.slane %v3323, 1
        %v3325 = vadd.f32 %v3323, %v3324
        %v3326 = vsel %vm664, %v3136, 0.0
        %v3327 = vrot.slane %v3326, 4
        %v3328 = vadd.f32 %v3326, %v3327
        %v3329 = vrot.slane %v3328, 2
        %v3330 = vadd.f32 %v3328, %v3329
        %v3331 = vrot.slane %v3330, 1
        %v3332 = vadd.f32 %v3330, %v3331
        %v3333 = vsel %vm664, %v3137, 0.0
        %v3334 = vrot.slane %v3333, 4
        %v3335 = vadd.f32 %v3333, %v3334
        %v3336 = vrot.slane %v3335, 2
        %v3337 = vadd.f32 %v3335, %v3336
        %v3338 = vrot.slane %v3337, 1
        %v3339 = vadd.f32 %v3337, %v3338
        %v3340 = vsel %vm664, %v3138, 0.0
        %v3341 = vrot.slane %v3340, 4
        %v3342 = vadd.f32 %v3340, %v3341
        %v3343 = vrot.slane %v3342, 2
        %v3344 = vadd.f32 %v3342, %v3343
        %v3345 = vrot.slane %v3344, 1
        %v3346 = vadd.f32 %v3344, %v3345
        %v3347 = vsel %vm664, %v3139, 0.0
        %v3348 = vrot.slane %v3347, 4
        %v3349 = vadd.f32 %v3347, %v3348
        %v3350 = vrot.slane %v3349, 2
        %v3351 = vadd.f32 %v3349, %v3350
        %v3352 = vrot.slane %v3351, 1
        %v3353 = vadd.f32 %v3351, %v3352
        %v3354 = vsel %vm664, %v3140, 0.0
        %v3355 = vrot.slane %v3354, 4
        %v3356 = vadd.f32 %v3354, %v3355
        %v3357 = vrot.slane %v3356, 2
        %v3358 = vadd.f32 %v3356, %v3357
        %v3359 = vrot.slane %v3358, 1
        %v3360 = vadd.f32 %v3358, %v3359
        %v3361 = vsel %vm664, %v3141, 0.0
        %v3362 = vrot.slane %v3361, 4
        %v3363 = vadd.f32 %v3361, %v3362
        %v3364 = vrot.slane %v3363, 2
        %v3365 = vadd.f32 %v3363, %v3364
        %v3366 = vrot.slane %v3365, 1
        %v3367 = vadd.f32 %v3365, %v3366
        %v3368 = vsel %vm664, %v3142, 0.0
        %v3369 = vrot.slane %v3368, 4
        %v3370 = vadd.f32 %v3368, %v3369
        %v3371 = vrot.slane %v3370, 2
        %v3372 = vadd.f32 %v3370, %v3371
        %v3373 = vrot.slane %v3372, 1
        %v3374 = vadd.f32 %v3372, %v3373
        %v3375 = vsel %vm664, %v3143, 0.0
        %v3376 = vrot.slane %v3375, 4
        %v3377 = vadd.f32 %v3375, %v3376
        %v3378 = vrot.slane %v3377, 2
        %v3379 = vadd.f32 %v3377, %v3378
        %v3380 = vrot.slane %v3379, 1
        %v3381 = vadd.f32 %v3379, %v3380
        %v3382 = vsel %vm664, %v3144, 0.0
        %v3383 = vrot.slane %v3382, 4
        %v3384 = vadd.f32 %v3382, %v3383
        %v3385 = vrot.slane %v3384, 2
        %v3386 = vadd.f32 %v3384, %v3385
        %v3387 = vrot.slane %v3386, 1
        %v3388 = vadd.f32 %v3386, %v3387
        %v3389 = vsel %vm664, %v3145, 0.0
        %v3390 = vrot.slane %v3389, 4
        %v3391 = vadd.f32 %v3389, %v3390
        %v3392 = vrot.slane %v3391, 2
        %v3393 = vadd.f32 %v3391, %v3392
        %v3394 = vrot.slane %v3393, 1
        %v3395 = vadd.f32 %v3393, %v3394
        %v3396 = vsel %vm664, %v3146, 0.0
        %v3397 = vrot.slane %v3396, 4
        %v3398 = vadd.f32 %v3396, %v3397
        %v3399 = vrot.slane %v3398, 2
        %v3400 = vadd.f32 %v3398, %v3399
        %v3401 = vrot.slane %v3400, 1
        %v3402 = vadd.f32 %v3400, %v3401
        %v3403 = vsel %vm664, %v3147, 0.0
        %v3404 = vrot.slane %v3403, 4
        %v3405 = vadd.f32 %v3403, %v3404
        %v3406 = vrot.slane %v3405, 2
        %v3407 = vadd.f32 %v3405, %v3406
        %v3408 = vrot.slane %v3407, 1
        %v3409 = vadd.f32 %v3407, %v3408
        %v3410 = vsel %vm664, %v3148, 0.0
        %v3411 = vrot.slane %v3410, 4
        %v3412 = vadd.f32 %v3410, %v3411
        %v3413 = vrot.slane %v3412, 2
        %v3414 = vadd.f32 %v3412, %v3413
        %v3415 = vrot.slane %v3414, 1
        %v3416 = vadd.f32 %v3414, %v3415
        %v3417 = vsel %vm664, %v3149, 0.0
        %v3418 = vrot.slane %v3417, 4
        %v3419 = vadd.f32 %v3417, %v3418
        %v3420 = vrot.slane %v3419, 2
        %v3421 = vadd.f32 %v3419, %v3420
        %v3422 = vrot.slane %v3421, 1
        %v3423 = vadd.f32 %v3421, %v3422
        %v3424 = vsel %vm664, %v3150, 0.0
        %v3425 = vrot.slane %v3424, 4
        %v3426 = vadd.f32 %v3424, %v3425
        %v3427 = vrot.slane %v3426, 2
        %v3428 = vadd.f32 %v3426, %v3427
        %v3429 = vrot.slane %v3428, 1
        %v3430 = vadd.f32 %v3428, %v3429
        %v3431 = vsel %vm664, %v3151, 0.0
        %v3432 = vrot.slane %v3431, 4
        %v3433 = vadd.f32 %v3431, %v3432
        %v3434 = vrot.slane %v3433, 2
        %v3435 = vadd.f32 %v3433, %v3434
        %v3436 = vrot.slane %v3435, 1
        %v3437 = vadd.f32 %v3435, %v3436
        %v3438 = vsel %vm664, %v3152, 0.0
        %v3439 = vrot.slane %v3438, 4
        %v3440 = vadd.f32 %v3438, %v3439
        %v3441 = vrot.slane %v3440, 2
        %v3442 = vadd.f32 %v3440, %v3441
        %v3443 = vrot.slane %v3442, 1
        %v3444 = vadd.f32 %v3442, %v3443
        %v3445 = vsel %vm664, %v3153, 0.0
        %v3446 = vrot.slane %v3445, 4
        %v3447 = vadd.f32 %v3445, %v3446
        %v3448 = vrot.slane %v3447, 2
        %v3449 = vadd.f32 %v3447, %v3448
        %v3450 = vrot.slane %v3449, 1
        %v3451 = vadd.f32 %v3449, %v3450
        %v3452 = vsel %vm664, %v3154, 0.0
        %v3453 = vrot.slane %v3452, 4
        %v3454 = vadd.f32 %v3452, %v3453
        %v3455 = vrot.slane %v3454, 2
        %v3456 = vadd.f32 %v3454, %v3455
        %v3457 = vrot.slane %v3456, 1
        %v3458 = vadd.f32 %v3456, %v3457
        %v3459 = vsel %vm664, %v3155, 0.0
        %v3460 = vrot.slane %v3459, 4
        %v3461 = vadd.f32 %v3459, %v3460
        %v3462 = vrot.slane %v3461, 2
        %v3463 = vadd.f32 %v3461, %v3462
        %v3464 = vrot.slane %v3463, 1
        %v3465 = vadd.f32 %v3463, %v3464
        %v3466 = vsel %vm664, %v3156, 0.0
        %v3467 = vrot.slane %v3466, 4
        %v3468 = vadd.f32 %v3466, %v3467
        %v3469 = vrot.slane %v3468, 2
        %v3470 = vadd.f32 %v3468, %v3469
        %v3471 = vrot.slane %v3470, 1
        %v3472 = vadd.f32 %v3470, %v3471
        %v3473 = vsel %vm664, %v3157, 0.0
        %v3474 = vrot.slane %v3473, 4
        %v3475 = vadd.f32 %v3473, %v3474
        %v3476 = vrot.slane %v3475, 2
        %v3477 = vadd.f32 %v3475, %v3476
        %v3478 = vrot.slane %v3477, 1
        %v3479 = vadd.f32 %v3477, %v3478
        %v3480 = vsel %vm664, %v3158, 0.0
        %v3481 = vrot.slane %v3480, 4
        %v3482 = vadd.f32 %v3480, %v3481
        %v3483 = vrot.slane %v3482, 2
        %v3484 = vadd.f32 %v3482, %v3483
        %v3485 = vrot.slane %v3484, 1
        %v3486 = vadd.f32 %v3484, %v3485
        %v3487 = vsel %vm664, %v3159, 0.0
        %v3488 = vrot.slane %v3487, 4
        %v3489 = vadd.f32 %v3487, %v3488
        %v3490 = vrot.slane %v3489, 2
        %v3491 = vadd.f32 %v3489, %v3490
        %v3492 = vrot.slane %v3491, 1
        %v3493 = vadd.f32 %v3491, %v3492
        %v3494 = vsel %vm664, %v3160, 0.0
        %v3495 = vrot.slane %v3494, 4
        %v3496 = vadd.f32 %v3494, %v3495
        %v3497 = vrot.slane %v3496, 2
        %v3498 = vadd.f32 %v3496, %v3497
        %v3499 = vrot.slane %v3498, 1
        %v3500 = vadd.f32 %v3498, %v3499
        %v3501 = vsel %vm664, %v3161, 0.0
        %v3502 = vrot.slane %v3501, 4
        %v3503 = vadd.f32 %v3501, %v3502
        %v3504 = vrot.slane %v3503, 2
        %v3505 = vadd.f32 %v3503, %v3504
        %v3506 = vrot.slane %v3505, 1
        %v3507 = vadd.f32 %v3505, %v3506
        %v3508 = vsel %vm664, %v3162, 0.0
        %v3509 = vrot.slane %v3508, 4
        %v3510 = vadd.f32 %v3508, %v3509
        %v3511 = vrot.slane %v3510, 2
        %v3512 = vadd.f32 %v3510, %v3511
        %v3513 = vrot.slane %v3512, 1
        %v3514 = vadd.f32 %v3512, %v3513
        %v3515 = vsel %vm664, %v3163, 0.0
        %v3516 = vrot.slane %v3515, 4
        %v3517 = vadd.f32 %v3515, %v3516
        %v3518 = vrot.slane %v3517, 2
        %v3519 = vadd.f32 %v3517, %v3518
        %v3520 = vrot.slane %v3519, 1
        %v3521 = vadd.f32 %v3519, %v3520
        %v3522 = vsel %vm664, %v3164, 0.0
        %v3523 = vrot.slane %v3522, 4
        %v3524 = vadd.f32 %v3522, %v3523
        %v3525 = vrot.slane %v3524, 2
        %v3526 = vadd.f32 %v3524, %v3525
        %v3527 = vrot.slane %v3526, 1
        %v3528 = vadd.f32 %v3526, %v3527
        %v3529 = vsel %vm664, %v3165, 0.0
        %v3530 = vrot.slane %v3529, 4
        %v3531 = vadd.f32 %v3529, %v3530
        %v3532 = vrot.slane %v3531, 2
        %v3533 = vadd.f32 %v3531, %v3532
        %v3534 = vrot.slane %v3533, 1
        %v3535 = vadd.f32 %v3533, %v3534
        %v3536 = vsel %vm664, %v3166, 0.0
        %v3537 = vrot.slane %v3536, 4
        %v3538 = vadd.f32 %v3536, %v3537
        %v3539 = vrot.slane %v3538, 2
        %v3540 = vadd.f32 %v3538, %v3539
        %v3541 = vrot.slane %v3540, 1
        %v3542 = vadd.f32 %v3540, %v3541
        %v3543 = vsel %vm664, %v3167, 0.0
        %v3544 = vrot.slane %v3543, 4
        %v3545 = vadd.f32 %v3543, %v3544
        %v3546 = vrot.slane %v3545, 2
        %v3547 = vadd.f32 %v3545, %v3546
        %v3548 = vrot.slane %v3547, 1
        %v3549 = vadd.f32 %v3547, %v3548
        %v3550 = vsel %vm664, %v3168, 0.0
        %v3551 = vrot.slane %v3550, 4
        %v3552 = vadd.f32 %v3550, %v3551
        %v3553 = vrot.slane %v3552, 2
        %v3554 = vadd.f32 %v3552, %v3553
        %v3555 = vrot.slane %v3554, 1
        %v3556 = vadd.f32 %v3554, %v3555
        %v3557 = vsel %vm664, %v3169, 0.0
        %v3558 = vrot.slane %v3557, 4
        %v3559 = vadd.f32 %v3557, %v3558
        %v3560 = vrot.slane %v3559, 2
        %v3561 = vadd.f32 %v3559, %v3560
        %v3562 = vrot.slane %v3561, 1
        %v3563 = vadd.f32 %v3561, %v3562
        %v3564 = vsel %vm664, %v3170, 0.0
        %v3565 = vrot.slane %v3564, 4
        %v3566 = vadd.f32 %v3564, %v3565
        %v3567 = vrot.slane %v3566, 2
        %v3568 = vadd.f32 %v3566, %v3567
        %v3569 = vrot.slane %v3568, 1
        %v3570 = vadd.f32 %v3568, %v3569
        %v3571 = vsel %vm664, %v3171, 0.0
        %v3572 = vrot.slane %v3571, 4
        %v3573 = vadd.f32 %v3571, %v3572
        %v3574 = vrot.slane %v3573, 2
        %v3575 = vadd.f32 %v3573, %v3574
        %v3576 = vrot.slane %v3575, 1
        %v3577 = vadd.f32 %v3575, %v3576
        %v3578 = vsel %vm664, %v3172, 0.0
        %v3579 = vrot.slane %v3578, 4
        %v3580 = vadd.f32 %v3578, %v3579
        %v3581 = vrot.slane %v3580, 2
        %v3582 = vadd.f32 %v3580, %v3581
        %v3583 = vrot.slane %v3582, 1
        %v3584 = vadd.f32 %v3582, %v3583
        %v3585 = vsel %vm664, %v3173, 0.0
        %v3586 = vrot.slane %v3585, 4
        %v3587 = vadd.f32 %v3585, %v3586
        %v3588 = vrot.slane %v3587, 2
        %v3589 = vadd.f32 %v3587, %v3588
        %v3590 = vrot.slane %v3589, 1
        %v3591 = vadd.f32 %v3589, %v3590
        %v3592 = vsel %vm664, %v3174, 0.0
        %v3593 = vrot.slane %v3592, 4
        %v3594 = vadd.f32 %v3592, %v3593
        %v3595 = vrot.slane %v3594, 2
        %v3596 = vadd.f32 %v3594, %v3595
        %v3597 = vrot.slane %v3596, 1
        %v3598 = vadd.f32 %v3596, %v3597
        %v3599 = vsel %vm664, %v3175, 0.0
        %v3600 = vrot.slane %v3599, 4
        %v3601 = vadd.f32 %v3599, %v3600
        %v3602 = vrot.slane %v3601, 2
        %v3603 = vadd.f32 %v3601, %v3602
        %v3604 = vrot.slane %v3603, 1
        %v3605 = vadd.f32 %v3603, %v3604
        %v3606 = vsel %vm664, %v3176, 0.0
        %v3607 = vrot.slane %v3606, 4
        %v3608 = vadd.f32 %v3606, %v3607
        %v3609 = vrot.slane %v3608, 2
        %v3610 = vadd.f32 %v3608, %v3609
        %v3611 = vrot.slane %v3610, 1
        %v3612 = vadd.f32 %v3610, %v3611
        %v3613 = vsel %vm664, %v3177, 0.0
        %v3614 = vrot.slane %v3613, 4
        %v3615 = vadd.f32 %v3613, %v3614
        %v3616 = vrot.slane %v3615, 2
        %v3617 = vadd.f32 %v3615, %v3616
        %v3618 = vrot.slane %v3617, 1
        %v3619 = vadd.f32 %v3617, %v3618
        %v3620 = vsel %vm664, %v3178, 0.0
        %v3621 = vrot.slane %v3620, 4
        %v3622 = vadd.f32 %v3620, %v3621
        %v3623 = vrot.slane %v3622, 2
        %v3624 = vadd.f32 %v3622, %v3623
        %v3625 = vrot.slane %v3624, 1
        %v3626 = vadd.f32 %v3624, %v3625
        %v3691 = vsel %vm1179, %v3192, %v3185
        %v3692 = vsel %vm1181, %v3199, %v3691
        %v3693 = vsel %vm1183, %v3206, %v3692
        %v3694 = vsel %vm1185, %v3213, %v3693
        %v3695 = vsel %vm1187, %v3220, %v3694
        %v3696 = vsel %vm1189, %v3227, %v3695
        %v3697 = vsel %vm1191, %v3234, %v3696
        %v3698 = vsel %vm1179, %v3248, %v3241
        %v3699 = vsel %vm1181, %v3255, %v3698
        %v3700 = vsel %vm1183, %v3262, %v3699
        %v3701 = vsel %vm1185, %v3269, %v3700
        %v3702 = vsel %vm1187, %v3276, %v3701
        %v3703 = vsel %vm1189, %v3283, %v3702
        %v3704 = vsel %vm1191, %v3290, %v3703
        %v3705 = vsel %vm1179, %v3304, %v3297
        %v3706 = vsel %vm1181, %v3311, %v3705
        %v3707 = vsel %vm1183, %v3318, %v3706
        %v3708 = vsel %vm1185, %v3325, %v3707
        %v3709 = vsel %vm1187, %v3332, %v3708
        %v3710 = vsel %vm1189, %v3339, %v3709
        %v3711 = vsel %vm1191, %v3346, %v3710
        %v3712 = vsel %vm1179, %v3360, %v3353
        %v3713 = vsel %vm1181, %v3367, %v3712
        %v3714 = vsel %vm1183, %v3374, %v3713
        %v3715 = vsel %vm1185, %v3381, %v3714
        %v3716 = vsel %vm1187, %v3388, %v3715
        %v3717 = vsel %vm1189, %v3395, %v3716
        %v3718 = vsel %vm1191, %v3402, %v3717
        %v3719 = vsel %vm1179, %v3416, %v3409
        %v3720 = vsel %vm1181, %v3423, %v3719
        %v3721 = vsel %vm1183, %v3430, %v3720
        %v3722 = vsel %vm1185, %v3437, %v3721
        %v3723 = vsel %vm1187, %v3444, %v3722
        %v3724 = vsel %vm1189, %v3451, %v3723
        %v3725 = vsel %vm1191, %v3458, %v3724
        %v3726 = vsel %vm1179, %v3472, %v3465
        %v3727 = vsel %vm1181, %v3479, %v3726
        %v3728 = vsel %vm1183, %v3486, %v3727
        %v3729 = vsel %vm1185, %v3493, %v3728
        %v3730 = vsel %vm1187, %v3500, %v3729
        %v3731 = vsel %vm1189, %v3507, %v3730
        %v3732 = vsel %vm1191, %v3514, %v3731
        %v3733 = vsel %vm1179, %v3528, %v3521
        %v3734 = vsel %vm1181, %v3535, %v3733
        %v3735 = vsel %vm1183, %v3542, %v3734
        %v3736 = vsel %vm1185, %v3549, %v3735
        %v3737 = vsel %vm1187, %v3556, %v3736
        %v3738 = vsel %vm1189, %v3563, %v3737
        %v3739 = vsel %vm1191, %v3570, %v3738
        %v3740 = vsel %vm1179, %v3584, %v3577
        %v3741 = vsel %vm1181, %v3591, %v3740
        %v3742 = vsel %vm1183, %v3598, %v3741
        %v3743 = vsel %vm1185, %v3605, %v3742
        %v3744 = vsel %vm1187, %v3612, %v3743
        %v3745 = vsel %vm1189, %v3619, %v3744
        %v3746 = vsel %vm1191, %v3626, %v3745
        %v3755 = vadd.f32 %v408, %v3697
        %v3756 = vadd.f32 %v409, %v3704
        %v3757 = vadd.f32 %v410, %v3711
        %v3758 = vadd.f32 %v411, %v3718
        %v3759 = vadd.f32 %v412, %v3725
        %v3760 = vadd.f32 %v413, %v3732
        %v3761 = vadd.f32 %v414, %v3739
        %v3762 = vadd.f32 %v415, %v3746
        %v3763 = vld [vmem:[#allocation10] sm:$0xff]
        %v3764 = vld [vmem:[#allocation10 + $0x8] sm:$0xff]
        %v3765 = vld [vmem:[#allocation10 + $0x10] sm:$0xff]
        %v3766 = vld [vmem:[#allocation10 + $0x18] sm:$0xff]
        %v3767 = vld [vmem:[%s5] sm:$0x1]
        %v3769 = vlaneseq
        %v3770 = vshrl.u32 %v3769, 7
        %v3771 = vsub.s32 0, %v3770
        %v3772 = vrot.slane %v3767, %v3771
        %vm3774 = vcmask 261120
        %v3776 = vsel %vm3774, %v3755, 0
        %v3779 = vsel %vm3774, %v3756, 0
        %v3782 = vsel %vm3774, %v3757, 0
        %v3785 = vsel %vm3774, %v3758, 0
        %v3788 = vsel %vm3774, %v3759, 0
        %v3791 = vsel %vm3774, %v3760, 0
        %v3794 = vsel %vm3774, %v3761, 0
        %v3797 = vsel %vm3774, %v3762, 0
        %3799 = vmatprep.subr.mxu0 0.0
        %3800 = vmatpush1.msra.mxu0 0.0
        %3801 = vmatprep.subr.mxu0 0.0
        %3802 = vmatpush1.msra.mxu0 0.0
        %3803 = vmatprep.subr.mxu0 0.0
        %3804 = vmatpush1.msra.mxu0 0.0
        %3805 = vmatprep.subr.mxu0 0.0
        %3806 = vmatpush1.msra.mxu0 0.0
        %3807 = vmatprep.subr.mxu0 0.0
        %3808 = vmatpush1.msra.mxu0 0.0
        %3809 = vmatprep.subr.mxu0 0.0
        %3810 = vmatpush1.msra.mxu0 0.0
        %3811 = vmatprep.subr.mxu0 0.0
        %3812 = vmatpush1.msra.mxu0 0.0
        %3813 = vmatprep.subr.mxu0 0.0
        %3814 = vmatpush1.msra.mxu0 0.0
        %3815 = vmatprep.subr.mxu0 0.0
        %3816 = vmatpush1.msra.mxu0 0.0
        %3817 = vmatprep.subr.mxu0 0.0
        %3818 = vmatpush1.msra.mxu0 0.0
        %3819 = vmatprep.subr.mxu0 0.0
        %3820 = vmatpush1.msra.mxu0 0.0
        %3821 = vmatprep.subr.mxu0 0.0
        %3822 = vmatpush1.msra.mxu0 0.0
        %3823 = vmatprep.subr.mxu0 0.0
        %3824 = vmatpush1.msra.mxu0 %v3766
        %3825 = vmatprep.subr.mxu0 0.0
        %3826 = vmatpush1.msra.mxu0 %v3765
        %3827 = vmatprep.subr.mxu0 0.0
        %3828 = vmatpush1.msra.mxu0 %v3764
        %3829 = vmatprep.subr.mxu0 0.0
        %3830 = vmatpush1.msra.mxu0 %v3763
        %3831 = vmatprep.subr.mxu0 0.0
        %3832 = vmatpush2.msra.mxu0 0.0
        %3833 = vmatprep.subr.mxu0 0.0
        %3834 = vmatpush2.msra.mxu0 0.0
        %3835 = vmatprep.subr.mxu0 0.0
        %3836 = vmatpush2.msra.mxu0 0.0
        %3837 = vmatprep.subr.mxu0 0.0
        %3838 = vmatpush2.msra.mxu0 0.0
        %3839 = vmatprep.subr.mxu0 0.0
        %3840 = vmatpush2.msra.mxu0 0.0
        %3841 = vmatprep.subr.mxu0 0.0
        %3842 = vmatpush2.msra.mxu0 0.0
        %3843 = vmatprep.subr.mxu0 0.0
        %3844 = vmatpush2.msra.mxu0 0.0
        %3845 = vmatprep.subr.mxu0 0.0
        %3846 = vmatpush2.msra.mxu0 0.0
        %3847 = vmatprep.subr.mxu0 0.0
        %3848 = vmatpush2.msra.mxu0 0.0
        %3849 = vmatprep.subr.mxu0 0.0
        %3850 = vmatpush2.msra.mxu0 0.0
        %3851 = vmatprep.subr.mxu0 0.0
        %3852 = vmatpush2.msra.mxu0 0.0
        %3853 = vmatprep.subr.mxu0 0.0
        %3854 = vmatpush2.msra.mxu0 0.0
        %3855 = vmatprep.subr.mxu0 0.0
        %3856 = vmatpush2.msra.mxu0 0.0
        %3857 = vmatprep.subr.mxu0 0.0
        %3858 = vmatpush2.msra.mxu0 0.0
        %3859 = vmatprep.subr.mxu0 0.0
        %3860 = vmatpush2.msra.mxu0 0.0
        %3861 = vmatprep.subr.mxu0 0.0
        %3862 = vmatpush2.msra.mxu0 0.0
        %3863 = vmatprep.mubr.f32.mxu0 0.0
        %3864 = vmatmul.mubr.f32.gmra.mxu0 %v3776
        %v3865 = vpop.f32.mrf.mxu0
        %v3866 = vadd.f32 %v3772, %v3865
        %v3867 = vpop.f32.mrf.mxu0
        %3868 = vmatprep.mubr.f32.mxu0 0.0
        %3869 = vmatmul.mubr.f32.gmra.mxu0 %v3779
        %v3870 = vpop.f32.mrf.mxu0
        %v3871 = vadd.f32 %v3772, %v3870
        %v3872 = vpop.f32.mrf.mxu0
        %3873 = vmatprep.mubr.f32.mxu0 0.0
        %3874 = vmatmul.mubr.f32.gmra.mxu0 %v3782
        %v3875 = vpop.f32.mrf.mxu0
        %v3876 = vadd.f32 %v3772, %v3875
        %v3877 = vpop.f32.mrf.mxu0
        %3878 = vmatprep.mubr.f32.mxu0 0.0
        %3879 = vmatmul.mubr.f32.gmra.mxu0 %v3785
        %v3880 = vpop.f32.mrf.mxu0
        %v3881 = vadd.f32 %v3772, %v3880
        %v3882 = vpop.f32.mrf.mxu0
        %3883 = vmatprep.mubr.f32.mxu0 0.0
        %3884 = vmatmul.mubr.f32.gmra.mxu0 %v3788
        %v3885 = vpop.f32.mrf.mxu0
        %v3886 = vadd.f32 %v3772, %v3885
        %v3887 = vpop.f32.mrf.mxu0
        %3888 = vmatprep.mubr.f32.mxu0 0.0
        %3889 = vmatmul.mubr.f32.gmra.mxu0 %v3791
        %v3890 = vpop.f32.mrf.mxu0
        %v3891 = vadd.f32 %v3772, %v3890
        %v3892 = vpop.f32.mrf.mxu0
        %3893 = vmatprep.mubr.f32.mxu0 0.0
        %3894 = vmatmul.mubr.f32.gmra.mxu0 %v3794
        %v3895 = vpop.f32.mrf.mxu0
        %v3896 = vadd.f32 %v3772, %v3895
        %v3897 = vpop.f32.mrf.mxu0
        %3898 = vmatprep.mubr.f32.mxu0 0.0
        %3899 = vmatmul.mubr.f32.gmra.mxu0 %v3797
        %v3900 = vpop.f32.mrf.mxu0
        %v3901 = vadd.f32 %v3772, %v3900
        %v3902 = vpop.f32.mrf.mxu0
        %3903 = vdwg.mxu0
        %v3904 = vmax.f32 %v3866, 0.0
        %v3905 = vmax.f32 %v3871, 0.0
        %v3906 = vmax.f32 %v3876, 0.0
        %v3907 = vmax.f32 %v3881, 0.0
        %v3908 = vmax.f32 %v3886, 0.0
        %v3909 = vmax.f32 %v3891, 0.0
        %v3910 = vmax.f32 %v3896, 0.0
        %v3911 = vmax.f32 %v3901, 0.0
        %3912 = vst.msk [vmem:[%s402] sm:$0xff] %vm3774, %v3904
        %3913 = vst.msk [vmem:[%s402 + $0x8] sm:$0xff] %vm3774, %v3905
        %3914 = vst.msk [vmem:[%s402 + $0x10] sm:$0xff] %vm3774, %v3906
        %3915 = vst.msk [vmem:[%s402 + $0x18] sm:$0xff] %vm3774, %v3907
        %3916 = vst.msk [vmem:[%s402 + $0x20] sm:$0xff] %vm3774, %v3908
        %3917 = vst.msk [vmem:[%s402 + $0x28] sm:$0xff] %vm3774, %v3909
        %3918 = vst.msk [vmem:[%s402 + $0x30] sm:$0xff] %vm3774, %v3910
        %3919 = vst.msk [vmem:[%s402 + $0x38] sm:$0xff] %vm3774, %v3911
        %s3920 = sand.u32 %s183, 1
        %s3921 = scalar_lea.sflag [#allocation4], %s3920
        %s3922 = sand.u32 %s183, 1
        %s3923 = smul.addr %s3922, 64
        %s3924 = scalar_lea.vmem [#allocation11], %s3923
        // Predicated region
        $region65: #{tpu_custom_call.1} parent=43 // pred_check
          %p3925 = pneg %p193
        $region66: #{tpu_custom_call.1} parent=43 // pred_check_branch
          %3927 = sbr.rel (%p3925) target = $region68
        $region67: #{tpu_custom_call.1} parent=43 // pred_region
          %s3928 = smul.u32 8, %s29
          %s3930 = ssub.s32 1024, 1024
          %3931 = vsyncadd %s3921, %s3930
          %s3932 = smul.addr %s3928, 128
          %s3933 = scalar_lea.hbm %s6, %s3932
          %s3934 = sshll.u32 %s3924, 4
          %s3935 = int_to_ptr.vmem [resolvable:$true] %s3934
          %3940 = dma.vmem_to_hbm [thread:$0]  %s3935, 1024, %s3933, %s3921, 128, 128, 8
        $region68: #{tpu_custom_call.1} parent=43 // pred_fallthru
          _
      $region44: #{tpu_custom_call.1} parent=5 // pred_fallthru
        _
      %p3941 = scmp.le.s32.totalorder 2, %s24
      // Predicated region
      $region69: #{tpu_custom_call.1} parent=5 // pred_check
        %p3942 = pneg %p3941
      $region70: #{tpu_custom_call.1} parent=5 // pred_check_branch
        %3944 = sbr.rel (%p3942) target = $region72
      $region71: #{tpu_custom_call.1} parent=5 // pred_region
        %s3945 = ssub.s32 %s24, 2
        // Predicated region
        $region73: #{tpu_custom_call.1} parent=71 // pred_check
          %p3946 = pneg %p199
        $region74: #{tpu_custom_call.1} parent=71 // pred_check_branch
          %3948 = sbr.rel (%p3946) target = $region76
        $region75: #{tpu_custom_call.1} parent=71 // pred_region
          %s3949 = sand.u32 %s184, 1
          %s3950 = scalar_lea.sflag [#allocation4], %s3949
          %s3951 = sand.u32 %s184, 1
          %s3952 = smul.addr %s3951, 64
          %s3953 = scalar_lea.vmem [#allocation11], %s3952
          %3954 = dma.done %s3950, 1024
        $region76: #{tpu_custom_call.1} parent=71 // pred_fallthru
          _
      $region72: #{tpu_custom_call.1} parent=5 // pred_fallthru
        _
    $region6: #{tpu_custom_call.1} parent=1 // loop_footer
      %s28 = sadd.s32 1, %s24
    $region7: #{tpu_custom_call.1} parent=1 // loop_footer_branch
      %23 = sbr.rel target = $region3
    $region8: #{tpu_custom_call.1} parent=1 // loop_exit
      _
    %3955 = vsyncpa [#allocation3], 1
    %s3956 = scalar_lea.sflag [#allocation3], 1
    %3957 = vsyncpa %s3956, 1
    %3958 = vsyncpa [#allocation6], 1
    %s3959 = scalar_lea.sflag [#allocation6], 1
    %3960 = vsyncpa %s3959, 1
    %3961 = vsyncpa [#allocation9], 1
    %s3962 = scalar_lea.sflag [#allocation9], 1
    %3963 = vsyncpa %s3962, 1
    %3964 = vsyncpa [#allocation4], 1
    %s3965 = scalar_lea.sflag [#allocation4], 1
    %3966 = vsyncpa %s3965, 1

</llo_original>
